<compile_context>
chip_gen: v7x
topology: tpu7x:2x2x1
jax: 0.10.0
libtpu: 0.0.40
codegen_flags: <defaults>
</compile_context>

<pallas_src>
import functools
import math

import jax
import jax.numpy as jnp
from jax.experimental import pallas as pl
from jax.experimental.pallas import tpu as pltpu


def _attention_tile(x, wq, wk, wv, bv, scale):
    """Per-tile self-attention: x (TB, H) -> (TB, H) in f32."""
    q = jnp.dot(x, wq, preferred_element_type=jnp.float32)          # (TB, H)
    k = jnp.dot(x, wk, preferred_element_type=jnp.float32)          # (TB, H)
    v = jnp.dot(x, wv, preferred_element_type=jnp.float32) + bv     # (TB, H)
    # scores[b, i, j] = q[b, i] * k[b, j] * scale  -- broadcast multiply (VPU),
    # not an MXU matmul (the contraction dim would be 1).
    s = q[:, :, None] * (k * scale)[:, None, :]                     # (TB, H, H)
    m = jnp.max(s, axis=-1, keepdims=True)
    p = jnp.exp(s - m)
    l = jnp.sum(p, axis=-1, keepdims=True)
    attn = p / l                                                    # softmax
    # TODO(synk): training-mode dropout on `attn` (pltpu.prng_*) not
    # implemented; this is the inference-mode (identity-dropout) forward.
    # out[b, i] = sum_j attn[b, i, j] * v[b, j]  (VPU multiply + XLU reduce).
    return jnp.sum(attn * v[:, None, :], axis=-1)                   # (TB, H)


def _self_attn_kernel(x_ref, wq_ref, wk_ref, wv_ref, bv_ref, o_ref, *, scale):
    o_ref[...] = _attention_tile(
        x_ref[...], wq_ref[...], wk_ref[...], wv_ref[...], bv_ref[...], scale
    ).astype(o_ref.dtype)


def _self_attn_proj_kernel(x_ref, wq_ref, wk_ref, wv_ref, bv_ref,
                           wo_ref, bo_ref, o_ref, *, scale):
    attn_out = _attention_tile(
        x_ref[...], wq_ref[...], wk_ref[...], wv_ref[...], bv_ref[...], scale)
    o_ref[...] = (
        jnp.dot(attn_out, wo_ref[...], preferred_element_type=jnp.float32)
        + bo_ref[...]
    ).astype(o_ref.dtype)


def self_attention_forward(x, wq, wk, wv, bv, wo=None, bo=None, *,
                           block_tokens=None):
    """SelfAttentionLayer forward (dropout in eval mode).

    x  : (B, H)  batch of vectors.
    wq, wk, wv : (H, H) weights, pre-transposed to (in, out) layout.
    bv : (1, H)  value bias.
    wo : optional (H, O) output-projection weight (in, out); bo : (1, O).
    """
    B, H = x.shape
    if block_tokens is None:
        # Largest 8-aligned tile whose (TB, H, H) softmax intermediates
        # (~3 live f32 copies) stay well inside the scoped-VMEM budget.
        budget = 8 * 1024 * 1024
        tb = max(8, (budget // max(12 * H * H, 1)) // 8 * 8)
        block_tokens = min(B, tb)
    assert B % block_tokens == 0, "pad the batch to a multiple of block_tokens"
    grid = (B // block_tokens,)

    scale = 1.0 / math.sqrt(H)
    out_dim = H if wo is None else wo.shape[1]

    x_spec = pl.BlockSpec((block_tokens, H), lambda i: (i, 0))
    o_spec = pl.BlockSpec((block_tokens, out_dim), lambda i: (i, 0))
    w_spec = pl.BlockSpec((H, H), lambda i: (0, 0))     # resident across steps
    b_spec = pl.BlockSpec((1, H), lambda i: (0, 0))

    flops = 6 * B * H * H            # q, k, v matmuls
    flops += 7 * B * H * H           # outer product + softmax + weighted sum
    transcendentals = B * H * H      # exp
    bytes_accessed = ((B * H + B * out_dim) * x.dtype.itemsize
                      + 3 * H * H * wq.dtype.itemsize
                      + H * bv.dtype.itemsize)

    if wo is None:
        kernel = functools.partial(_self_attn_kernel, scale=scale)
        in_specs = [x_spec, w_spec, w_spec, w_spec, b_spec]
        args = (x, wq, wk, wv, bv)
    else:
        kernel = functools.partial(_self_attn_proj_kernel, scale=scale)
        wo_spec = pl.BlockSpec((H, out_dim), lambda i: (0, 0))
        bo_spec = pl.BlockSpec((1, out_dim), lambda i: (0, 0))
        in_specs = [x_spec, w_spec, w_spec, w_spec, b_spec, wo_spec, bo_spec]
        args = (x, wq, wk, wv, bv, wo, bo)
        flops += 2 * B * H * out_dim
        bytes_accessed += (H * out_dim + out_dim) * wo.dtype.itemsize

    return pl.pallas_call(
        kernel,
        out_shape=jax.ShapeDtypeStruct((B, out_dim), x.dtype),
        grid=grid,
        in_specs=in_specs,
        out_specs=o_spec,
        compiler_params=pltpu.CompilerParams(
            dimension_semantics=("parallel",),
            vmem_limit_bytes=32 * 1024 * 1024,
        ),
        cost_estimate=pl.CostEstimate(
            flops=flops,
            transcendentals=transcendentals,
            bytes_accessed=bytes_accessed,
        ),
    )(*args)


if __name__ == "__main__":
    B, H, O = 16, 128, 128   # batch of vectors, hidden size, output_size
    # dropout rate is irrelevant here: forward is the inference-mode path.

    key = jax.random.PRNGKey(0)
    kx, kq, kk, kv, kb, kwo, kbo = jax.random.split(key, 7)

    x = jax.random.normal(kx, (B, H), dtype=jnp.float32)

    # PyTorch nn.Linear stores weight as (out, in); forward is x @ W^T (+ b).
    wq_t = jax.random.normal(kq, (H, H), dtype=jnp.float32) * 0.1
    wk_t = jax.random.normal(kk, (H, H), dtype=jnp.float32) * 0.1
    wv_t = jax.random.normal(kv, (H, H), dtype=jnp.float32) * 0.1
    bv = jax.random.normal(kb, (H,), dtype=jnp.float32) * 0.1
    wo_t = jax.random.normal(kwo, (O, H), dtype=jnp.float32) * 0.1
    bo = jax.random.normal(kbo, (O,), dtype=jnp.float32) * 0.1

    # Pre-transpose to (in, out) so the kernel does plain x @ W.
    wq, wk, wv, wo = wq_t.T, wk_t.T, wv_t.T, wo_t.T
    bv2, bo2 = bv.reshape(1, H), bo.reshape(1, O)

    # Kernel: output_size=None path (constructor default).
    out = self_attention_forward(x, wq, wk, wv, bv2, block_tokens=8)
    out = jax.block_until_ready(out)

    # Kernel: output_size=O path (fused output projection).
    out_p = self_attention_forward(x, wq, wk, wv, bv2, wo, bo2, block_tokens=8)
    out_p = jax.block_until_ready(out_p)

    # Pure-JAX reference (dropout = identity in eval mode).
    hi = jax.lax.Precision.HIGHEST
    q = jnp.dot(x, wq, precision=hi)
    k = jnp.dot(x, wk, precision=hi)
    v = jnp.dot(x, wv, precision=hi) + bv
    s = q[:, :, None] * k[:, None, :] / jnp.sqrt(jnp.float32(H))
    attn = jax.nn.softmax(s, axis=-1)
    ref = jnp.sum(attn * v[:, None, :], axis=-1)
    ref_p = jnp.dot(ref, wo, precision=hi) + bo

    assert out.shape == (B, H) and out_p.shape == (B, O)
    assert jnp.allclose(out, ref, atol=1e-4, rtol=1e-4), "mismatch (no out proj)"
    assert jnp.allclose(out_p, ref_p, atol=1e-4, rtol=1e-4), "mismatch (out proj)"

    print("KERNEL_OK")
</pallas_src>

<mosaic_0001>
module attributes {stable_mosaic.version = 11 : i64} {
  func.func @_self_attn_kernel(%arg0: i32, %arg1: memref<8x128xf32, #tpu.memory_space<vmem>>, %arg2: memref<128x128xf32, #tpu.memory_space<vmem>>, %arg3: memref<128x128xf32, #tpu.memory_space<vmem>>, %arg4: memref<128x128xf32, #tpu.memory_space<vmem>>, %arg5: memref<1x128xf32, #tpu.memory_space<vmem>>, %arg6: memref<8x128xf32, #tpu.memory_space<vmem>>) attributes {dimension_semantics = [#tpu.dimension_semantics<parallel>], iteration_bounds = array<i64: 2>, scalar_prefetch = 0 : i64, scratch_operands = 0 : i64, tpu.core_type = #tpu.core_type<tc>, window_params = [{transform_indices = @transform_0, window_bounds = array<i64: 8, 128>}, {pipeline_mode = #tpu.pipeline_mode<synchronous>, transform_indices = @transform_1, window_bounds = array<i64: 128, 128>}, {pipeline_mode = #tpu.pipeline_mode<synchronous>, transform_indices = @transform_2, window_bounds = array<i64: 128, 128>}, {pipeline_mode = #tpu.pipeline_mode<synchronous>, transform_indices = @transform_3, window_bounds = array<i64: 128, 128>}, {pipeline_mode = #tpu.pipeline_mode<synchronous>, transform_indices = @transform_4, window_bounds = array<i64: 1, 128>}, {transform_indices = @transform_5, window_bounds = array<i64: 8, 128>}]} {
    %c0 = arith.constant 0 : index
    %c0_0 = arith.constant 0 : index
    %0 = vector.load %arg1[%c0, %c0_0] : memref<8x128xf32, #tpu.memory_space<vmem>>, vector<8x128xf32>
    %c0_1 = arith.constant 0 : index
    %c0_2 = arith.constant 0 : index
    %1 = vector.load %arg2[%c0_1, %c0_2] : memref<128x128xf32, #tpu.memory_space<vmem>>, vector<128x128xf32>
    %c0_3 = arith.constant 0 : index
    %c0_4 = arith.constant 0 : index
    %2 = vector.load %arg3[%c0_3, %c0_4] : memref<128x128xf32, #tpu.memory_space<vmem>>, vector<128x128xf32>
    %c0_5 = arith.constant 0 : index
    %c0_6 = arith.constant 0 : index
    %3 = vector.load %arg4[%c0_5, %c0_6] : memref<128x128xf32, #tpu.memory_space<vmem>>, vector<128x128xf32>
    %c0_7 = arith.constant 0 : index
    %c0_8 = arith.constant 0 : index
    %4 = vector.load %arg5[%c0_7, %c0_8] : memref<1x128xf32, #tpu.memory_space<vmem>>, vector<1x128xf32>
    %cst = arith.constant dense<0.000000e+00> : vector<8x128xf32>
    %5 = tpu.matmul %0, %1, %cst {dimension_numbers = #tpu.dot_dimension_numbers<[1], [0], [0], [1], [0, 0, 1, 1], [], []>} : vector<8x128xf32>, vector<128x128xf32>, vector<8x128xf32> -> vector<8x128xf32>
    %cst_9 = arith.constant dense<0.000000e+00> : vector<8x128xf32>
    %6 = tpu.matmul %0, %2, %cst_9 {dimension_numbers = #tpu.dot_dimension_numbers<[1], [0], [0], [1], [0, 0, 1, 1], [], []>} : vector<8x128xf32>, vector<128x128xf32>, vector<8x128xf32> -> vector<8x128xf32>
    %cst_10 = arith.constant dense<0.000000e+00> : vector<8x128xf32>
    %7 = tpu.matmul %0, %3, %cst_10 {dimension_numbers = #tpu.dot_dimension_numbers<[1], [0], [0], [1], [0, 0, 1, 1], [], []>} : vector<8x128xf32>, vector<128x128xf32>, vector<8x128xf32> -> vector<8x128xf32>
    %8 = vector.broadcast %4 : vector<1x128xf32> to vector<8x128xf32>
    %9 = arith.addf %7, %8 : vector<8x128xf32>
    %10 = vector.shape_cast %5 : vector<8x128xf32> to vector<8x128x1xf32>
    %cst_11 = arith.constant 0.0883883461 : f32
    %11 = vector.broadcast %cst_11 : f32 to vector<8x128xf32>
    %12 = arith.mulf %6, %11 : vector<8x128xf32>
    %13 = vector.shape_cast %12 : vector<8x128xf32> to vector<8x1x128xf32>
    %14 = vector.broadcast %10 : vector<8x128x1xf32> to vector<8x128x128xf32>
    %15 = vector.broadcast %13 : vector<8x1x128xf32> to vector<8x128x128xf32>
    %16 = arith.mulf %14, %15 : vector<8x128x128xf32>
    %cst_12 = arith.constant dense<0xFF800000> : vector<8x128xf32>
    %17 = vector.multi_reduction <maximumf>, %16, %cst_12 [2] : vector<8x128x128xf32> to vector<8x128xf32>
    %18 = vector.shape_cast %17 : vector<8x128xf32> to vector<8x128x1xf32>
    %19 = vector.broadcast %18 : vector<8x128x1xf32> to vector<8x128x128xf32>
    %20 = arith.subf %16, %19 : vector<8x128x128xf32>
    %21 = math.exp %20 : vector<8x128x128xf32>
    %cst_13 = arith.constant dense<0.000000e+00> : vector<8x128xf32>
    %22 = vector.multi_reduction <add>, %21, %cst_13 [2] : vector<8x128x128xf32> to vector<8x128xf32>
    %23 = vector.shape_cast %22 : vector<8x128xf32> to vector<8x128x1xf32>
    %24 = vector.broadcast %23 : vector<8x128x1xf32> to vector<8x128x128xf32>
    %25 = arith.divf %21, %24 : vector<8x128x128xf32>
    %26 = vector.shape_cast %9 : vector<8x128xf32> to vector<8x1x128xf32>
    %27 = vector.broadcast %26 : vector<8x1x128xf32> to vector<8x128x128xf32>
    %28 = arith.mulf %25, %27 : vector<8x128x128xf32>
    %cst_14 = arith.constant dense<0.000000e+00> : vector<8x128xf32>
    %29 = vector.multi_reduction <add>, %28, %cst_14 [2] : vector<8x128x128xf32> to vector<8x128xf32>
    %c0_15 = arith.constant 0 : index
    %c0_16 = arith.constant 0 : index
    %30 = vector.load %arg6[%c0_15, %c0_16] : memref<8x128xf32, #tpu.memory_space<vmem>>, vector<8x128xf32>
    tpu.vector_store %arg6[%c0_15, %c0_16], %29 {strides = array<i32>} : memref<8x128xf32, #tpu.memory_space<vmem>>, vector<8x128xf32>,
    return
  }
  func.func @transform_0(%arg0: i32) -> (i32, i32) {
    %c0_i32 = arith.constant 0 : i32
    %c0_i32_0 = arith.constant 0 : i32
    return %arg0, %c0_i32 : i32, i32
  }
  func.func @transform_1(%arg0: i32) -> (i32, i32) {
    %c0_i32 = arith.constant 0 : i32
    %c0_i32_0 = arith.constant 0 : i32
    %c0_i32_1 = arith.constant 0 : i32
    return %c0_i32, %c0_i32_0 : i32, i32
  }
  func.func @transform_2(%arg0: i32) -> (i32, i32) {
    %c0_i32 = arith.constant 0 : i32
    %c0_i32_0 = arith.constant 0 : i32
    %c0_i32_1 = arith.constant 0 : i32
    return %c0_i32, %c0_i32_0 : i32, i32
  }
  func.func @transform_3(%arg0: i32) -> (i32, i32) {
    %c0_i32 = arith.constant 0 : i32
    %c0_i32_0 = arith.constant 0 : i32
    %c0_i32_1 = arith.constant 0 : i32
    return %c0_i32, %c0_i32_0 : i32, i32
  }
  func.func @transform_4(%arg0: i32) -> (i32, i32) {
    %c0_i32 = arith.constant 0 : i32
    %c0_i32_0 = arith.constant 0 : i32
    %c0_i32_1 = arith.constant 0 : i32
    return %c0_i32, %c0_i32_0 : i32, i32
  }
  func.func @transform_5(%arg0: i32) -> (i32, i32) {
    %c0_i32 = arith.constant 0 : i32
    %c0_i32_0 = arith.constant 0 : i32
    return %arg0, %c0_i32 : i32, i32
  }
}

</mosaic_0001>

<llo_original>
// kernel: tpu_custom_call.1
$region0: #{tpu_custom_call.1}
  #allocation0 [shape = 'u32[]', space=smem, size = 0x4, offset = 0x4, fixed_abs, tag = 'smem constant byte address 0x4 - core index']
  #allocation1 [shape = 'u32[144,128]{1,0:T(1,128)}', space=vmem, size = 0x12000, scoped, tag = 'internal scratch']
  %s0 = inlined_call_operand.hbm [shape: f32[16,128], index: 0, kind: input, shape index: {}]
  %s1 = inlined_call_operand.hbm [shape: f32[128,128], index: 1, kind: input, shape index: {}]
  %s2 = inlined_call_operand.hbm [shape: f32[128,128], index: 2, kind: input, shape index: {}]
  %s3 = inlined_call_operand.hbm [shape: f32[128,128], index: 3, kind: input, shape index: {}]
  %s4 = inlined_call_operand.vmem [shape: f32[1,128], index: 4, kind: input, shape index: {}]
  %s5 = inlined_call_operand.hbm [shape: f32[16,128], index: 5, kind: output, shape index: {}]
  %s6 = sld [smem:[#allocation0]]
  $region69: #{tpu_custom_call.1} parent=0
    _
  %s8 = ssub.s32 1, %s6
  %s9 = scalar_select 0, %s8, %s6
  $region1: #{tpu_custom_call.1} parent=0
    #allocation2 [shape = 'u8[8192]{0}', space=vmem, size = 0x2000, scoped, tag = 'input window, operand 0']
    #allocation3 [shape = 's32[2]{0}', space=sflag, size = 0x8, scoped, tag = 'scoped memory for tpu_custom_call.1']
    #allocation4 [shape = 's32[2]{0}', space=sflag, size = 0x8, scoped, tag = 'scoped memory for tpu_custom_call.1']
    #allocation5 [shape = 'u8[65536]{0}', space=vmem, size = 0x10000, scoped, tag = 'input window, operand 1, single buffered']
    #allocation6 [shape = 's32[1]{0}', space=sflag, size = 0x4, scoped, tag = 'scoped memory for tpu_custom_call.1']
    #allocation7 [shape = 'u8[65536]{0}', space=vmem, size = 0x10000, scoped, tag = 'input window, operand 2, single buffered']
    #allocation8 [shape = 'u8[65536]{0}', space=vmem, size = 0x10000, scoped, tag = 'input window, operand 3, single buffered']
    #allocation9 [shape = 's32[1]{0}', space=sflag, size = 0x4, scoped, tag = 'scoped memory for tpu_custom_call.1']
    #allocation10 [shape = 'u8[8192]{0}', space=vmem, size = 0x2000, scoped, tag = 'output window, operand 0']
    %10 = vsyncpa [#allocation3], 0
    %s11 = scalar_lea.sflag [#allocation3], 1
    %12 = vsyncpa %s11, 0
    %13 = vsyncpa [#allocation6], 0
    %14 = vsyncpa [#allocation9], 0
    %15 = vsyncpa [#allocation4], 0
    %s16 = scalar_lea.sflag [#allocation4], 1
    %17 = vsyncpa %s16, 0
    loop: start=0, step=1, limit=4
    $region2: #{tpu_custom_call.1} parent=1 // loop_pre_header
      _
    $region3: #{tpu_custom_call.1} parent=1 // loop_header
      %s19 = sphi 0, %s23
      %p20 = scmp.ge.s32.totalorder %s19, 4
      %s29 = sphi 0, %s31
      %s32 = sphi 0, %s29
      %s33 = sphi 0, %s32
      %s49 = sphi 0, %s33
      %s53 = sphi 0, %s53
      %s55 = sphi 0, %s53
      %s56 = sphi 0, %s55
      %s70 = sphi 0, %s56
      %s74 = sphi 0, %s74
      %s76 = sphi 0, %s74
      %s77 = sphi 0, %s76
      %s91 = sphi 0, %s77
      %s95 = sphi 0, %s95
      %s97 = sphi 0, %s95
      %s98 = sphi 0, %s97
      %s112 = sphi 0, %s98
      %s116 = sphi 0, %s116
      %s118 = sphi 0, %s116
      %s119 = sphi 0, %s118
      %s133 = sphi 0, %s119
      %s139 = sphi 0, %s141
      %s142 = sphi 0, %s139
      %s143 = sphi 0, %s142
      %s159 = sphi 0, %s143
    $region4: #{tpu_custom_call.1} parent=1 // loop_header_branch
      %22 = sbr.rel (%p20) target = $region8
    $region5: #{tpu_custom_call.1} parent=1 // loop_body
      %s24 = ssub.s32 %s19, 1
      %s25 = ssub.s32 %s19, 2
      %s26 = sadd.s32 %s19, 1
      %s27 = ssub.s32 %s19, %s26
      %p28 = scmp.eq.s32.totalorder %s27, 0
      %s30 = sadd.s32 %s29, 1
      %s31 = scalar_select %p28, %s29, %s30
      %p34 = pneg %p28
      %p35 = scmp.eq.s32.totalorder %s19, 1
      %p36 = por %p34, %p35
      %p37 = scmp.ne.s32.totalorder %s29, %s32
      %p38 = scmp.eq.s32.totalorder %s19, 0
      %p39 = por %p37, %p38
      %p40 = scmp.ne.s32.totalorder %s29, %s32
      %p41 = scmp.eq.s32.totalorder %s24, 1
      %p42 = por %p40, %p41
      %p43 = scmp.ne.s32.totalorder %s32, %s33
      %p44 = scmp.eq.s32.totalorder %s24, 0
      %p45 = por %p43, %p44
      %p46 = scmp.ne.s32.totalorder %s32, %s33
      %p47 = scmp.eq.s32.totalorder %s25, 1
      %p48 = por %p46, %p47
      %p50 = scmp.ne.s32.totalorder %s33, %s49
      %p51 = scmp.eq.s32.totalorder %s25, 0
      %p52 = por %p50, %p51
      %s54 = sadd.s32 %s53, 1
      %p57 = scmp.eq.s32.totalorder %s19, 1
      %p58 = scmp.ne.s32.totalorder %s53, %s55
      %p59 = scmp.eq.s32.totalorder %s19, 0
      %p60 = por %p58, %p59
      %p61 = scmp.ne.s32.totalorder %s53, %s55
      %p62 = scmp.eq.s32.totalorder %s24, 1
      %p63 = por %p61, %p62
      %p64 = scmp.ne.s32.totalorder %s55, %s56
      %p65 = scmp.eq.s32.totalorder %s24, 0
      %p66 = por %p64, %p65
      %p67 = scmp.ne.s32.totalorder %s55, %s56
      %p68 = scmp.eq.s32.totalorder %s25, 1
      %p69 = por %p67, %p68
      %p71 = scmp.ne.s32.totalorder %s56, %s70
      %p72 = scmp.eq.s32.totalorder %s25, 0
      %p73 = por %p71, %p72
      %s75 = sadd.s32 %s74, 1
      %p78 = scmp.eq.s32.totalorder %s19, 1
      %p79 = scmp.ne.s32.totalorder %s74, %s76
      %p80 = scmp.eq.s32.totalorder %s19, 0
      %p81 = por %p79, %p80
      %p82 = scmp.ne.s32.totalorder %s74, %s76
      %p83 = scmp.eq.s32.totalorder %s24, 1
      %p84 = por %p82, %p83
      %p85 = scmp.ne.s32.totalorder %s76, %s77
      %p86 = scmp.eq.s32.totalorder %s24, 0
      %p87 = por %p85, %p86
      %p88 = scmp.ne.s32.totalorder %s76, %s77
      %p89 = scmp.eq.s32.totalorder %s25, 1
      %p90 = por %p88, %p89
      %p92 = scmp.ne.s32.totalorder %s77, %s91
      %p93 = scmp.eq.s32.totalorder %s25, 0
      %p94 = por %p92, %p93
      %s96 = sadd.s32 %s95, 1
      %p99 = scmp.eq.s32.totalorder %s19, 1
      %p100 = scmp.ne.s32.totalorder %s95, %s97
      %p101 = scmp.eq.s32.totalorder %s19, 0
      %p102 = por %p100, %p101
      %p103 = scmp.ne.s32.totalorder %s95, %s97
      %p104 = scmp.eq.s32.totalorder %s24, 1
      %p105 = por %p103, %p104
      %p106 = scmp.ne.s32.totalorder %s97, %s98
      %p107 = scmp.eq.s32.totalorder %s24, 0
      %p108 = por %p106, %p107
      %p109 = scmp.ne.s32.totalorder %s97, %s98
      %p110 = scmp.eq.s32.totalorder %s25, 1
      %p111 = por %p109, %p110
      %p113 = scmp.ne.s32.totalorder %s98, %s112
      %p114 = scmp.eq.s32.totalorder %s25, 0
      %p115 = por %p113, %p114
      %s117 = sadd.s32 %s116, 1
      %p120 = scmp.eq.s32.totalorder %s19, 1
      %p121 = scmp.ne.s32.totalorder %s116, %s118
      %p122 = scmp.eq.s32.totalorder %s19, 0
      %p123 = por %p121, %p122
      %p124 = scmp.ne.s32.totalorder %s116, %s118
      %p125 = scmp.eq.s32.totalorder %s24, 1
      %p126 = por %p124, %p125
      %p127 = scmp.ne.s32.totalorder %s118, %s119
      %p128 = scmp.eq.s32.totalorder %s24, 0
      %p129 = por %p127, %p128
      %p130 = scmp.ne.s32.totalorder %s118, %s119
      %p131 = scmp.eq.s32.totalorder %s25, 1
      %p132 = por %p130, %p131
      %p134 = scmp.ne.s32.totalorder %s119, %s133
      %p135 = scmp.eq.s32.totalorder %s25, 0
      %p136 = por %p134, %p135
      %s137 = ssub.s32 %s19, %s26
      %p138 = scmp.eq.s32.totalorder %s137, 0
      %s140 = sadd.s32 %s139, 1
      %s141 = scalar_select %p138, %s139, %s140
      %p144 = pneg %p138
      %p145 = scmp.eq.s32.totalorder %s19, 1
      %p146 = por %p144, %p145
      %p147 = scmp.ne.s32.totalorder %s139, %s142
      %p148 = scmp.eq.s32.totalorder %s19, 0
      %p149 = por %p147, %p148
      %p150 = scmp.ne.s32.totalorder %s139, %s142
      %p151 = scmp.eq.s32.totalorder %s24, 1
      %p152 = por %p150, %p151
      %p153 = scmp.ne.s32.totalorder %s142, %s143
      %p154 = scmp.eq.s32.totalorder %s24, 0
      %p155 = por %p153, %p154
      %p156 = scmp.ne.s32.totalorder %s142, %s143
      %p157 = scmp.eq.s32.totalorder %s25, 1
      %p158 = por %p156, %p157
      %p160 = scmp.ne.s32.totalorder %s143, %s159
      %p161 = scmp.eq.s32.totalorder %s25, 0
      %p162 = por %p160, %p161
      %p163 = scmp.le.s32.totalorder 1, %s19
      %p164 = scmp.lt.s32.totalorder %s19, 3
      %p165 = pnand %p163, %p164
      %p166 = pneg %p165
      // Predicated region
      $region9: #{tpu_custom_call.1} parent=5 // pred_check
        _
      $region10: #{tpu_custom_call.1} parent=5 // pred_check_branch
        %168 = sbr.rel (%p165) target = $region12
      $region11: #{tpu_custom_call.1} parent=5 // pred_region
        %s169 = ssub.s32 %s19, 1
        // Predicated region
        $region13: #{tpu_custom_call.1} parent=11 // pred_check
          %p170 = pneg %p66
        $region14: #{tpu_custom_call.1} parent=11 // pred_check_branch
          %172 = sbr.rel (%p170) target = $region16
        $region15: #{tpu_custom_call.1} parent=11 // pred_region
          %s174 = ssub.s32 2048, 2048
          %175 = vsyncadd [#allocation6], %s174
          %s176 = sshll.u32 [#allocation5], 4
          %s177 = int_to_ptr.vmem [resolvable:$true] %s176
          %182 = dma.hbm_to_vmem [thread:$0]  %s1, 2048, %s177, [#allocation6], 128, 128, 8
        $region16: #{tpu_custom_call.1} parent=11 // pred_fallthru
          _
        // Predicated region
        $region17: #{tpu_custom_call.1} parent=11 // pred_check
          %p183 = pneg %p87
        $region18: #{tpu_custom_call.1} parent=11 // pred_check_branch
          %185 = sbr.rel (%p183) target = $region20
        $region19: #{tpu_custom_call.1} parent=11 // pred_region
          %s187 = ssub.s32 2048, 2048
          %188 = vsyncadd [#allocation6], %s187
          %s189 = sshll.u32 [#allocation7], 4
          %s190 = int_to_ptr.vmem [resolvable:$true] %s189
          %195 = dma.hbm_to_vmem [thread:$0]  %s2, 2048, %s190, [#allocation6], 128, 128, 8
        $region20: #{tpu_custom_call.1} parent=11 // pred_fallthru
          _
        // Predicated region
        $region21: #{tpu_custom_call.1} parent=11 // pred_check
          %p196 = pneg %p108
        $region22: #{tpu_custom_call.1} parent=11 // pred_check_branch
          %198 = sbr.rel (%p196) target = $region24
        $region23: #{tpu_custom_call.1} parent=11 // pred_region
          %s200 = ssub.s32 2048, 2048
          %201 = vsyncadd [#allocation9], %s200
          %s202 = sshll.u32 [#allocation8], 4
          %s203 = int_to_ptr.vmem [resolvable:$true] %s202
          %208 = dma.hbm_to_vmem [thread:$0]  %s3, 2048, %s203, [#allocation9], 128, 128, 8
        $region24: #{tpu_custom_call.1} parent=11 // pred_fallthru
          _
        // Predicated region
        $region25: #{tpu_custom_call.1} parent=11 // pred_check
          %p209 = pneg %p129
        $region26: #{tpu_custom_call.1} parent=11 // pred_check_branch
          %211 = sbr.rel (%p209) target = $region28
        $region27: #{tpu_custom_call.1} parent=11 // pred_region
          _
        $region28: #{tpu_custom_call.1} parent=11 // pred_fallthru
          _
      $region12: #{tpu_custom_call.1} parent=5 // pred_fallthru
        _
      %p212 = scmp.lt.s32.totalorder %s19, 2
      // Predicated region
      $region29: #{tpu_custom_call.1} parent=5 // pred_check
        %p213 = pneg %p212
      $region30: #{tpu_custom_call.1} parent=5 // pred_check_branch
        %215 = sbr.rel (%p213) target = $region32
      $region31: #{tpu_custom_call.1} parent=5 // pred_region
        // Predicated region
        $region33: #{tpu_custom_call.1} parent=31 // pred_check
          %p216 = pneg %p39
        $region34: #{tpu_custom_call.1} parent=31 // pred_check_branch
          %218 = sbr.rel (%p216) target = $region36
        $region35: #{tpu_custom_call.1} parent=31 // pred_region
          %s219 = sand.u32 %s29, 1
          %s220 = scalar_lea.sflag [#allocation3], %s219
          %s221 = sand.u32 %s29, 1
          %s222 = smul.addr %s221, 8
          %s223 = scalar_lea.vmem [#allocation2], %s222
          %s225 = ssub.s32 128, 128
          %226 = vsyncadd %s220, %s225
          %s227 = smul.addr %s19, 128
          %s228 = scalar_lea.hbm %s0, %s227
          %s230 = sshll.u32 %s223, 4
          %s231 = int_to_ptr.vmem [resolvable:$true] %s230
          %233 = dma.hbm_to_vmem [thread:$0]  %s228, 128, %s231, %s220
        $region36: #{tpu_custom_call.1} parent=31 // pred_fallthru
          _
      $region32: #{tpu_custom_call.1} parent=5 // pred_fallthru
        _
      %p234 = scmp.le.s32.totalorder 1, %s19
      %p235 = scmp.lt.s32.totalorder %s19, 3
      %p236 = pnand %p234, %p235
      %p237 = pneg %p236
      // Predicated region
      $region37: #{tpu_custom_call.1} parent=5 // pred_check
        _
      $region38: #{tpu_custom_call.1} parent=5 // pred_check_branch
        %239 = sbr.rel (%p236) target = $region40
      $region39: #{tpu_custom_call.1} parent=5 // pred_region
        %s240 = ssub.s32 %s19, 1
        %s241 = sand.u32 %s32, 1
        %s242 = scalar_lea.sflag [#allocation3], %s241
        %s243 = sand.u32 %s32, 1
        %s244 = smul.addr %s243, 8
        %s245 = scalar_lea.vmem [#allocation2], %s244
        // Predicated region
        $region41: #{tpu_custom_call.1} parent=39 // pred_check
          %p246 = pneg %p45
        $region42: #{tpu_custom_call.1} parent=39 // pred_check_branch
          %248 = sbr.rel (%p246) target = $region44
        $region43: #{tpu_custom_call.1} parent=39 // pred_region
          %249 = dma.done %s242, 128
        $region44: #{tpu_custom_call.1} parent=39 // pred_fallthru
          _
        // Predicated region
        $region45: #{tpu_custom_call.1} parent=39 // pred_check
          %p250 = pneg %p66
        $region46: #{tpu_custom_call.1} parent=39 // pred_check_branch
          %252 = sbr.rel (%p250) target = $region48
        $region47: #{tpu_custom_call.1} parent=39 // pred_region
          %253 = dma.done [#allocation6], 2048
        $region48: #{tpu_custom_call.1} parent=39 // pred_fallthru
          _
        // Predicated region
        $region49: #{tpu_custom_call.1} parent=39 // pred_check
          %p254 = pneg %p87
        $region50: #{tpu_custom_call.1} parent=39 // pred_check_branch
          %256 = sbr.rel (%p254) target = $region52
        $region51: #{tpu_custom_call.1} parent=39 // pred_region
          %257 = dma.done [#allocation6], 2048
        $region52: #{tpu_custom_call.1} parent=39 // pred_fallthru
          _
        // Predicated region
        $region53: #{tpu_custom_call.1} parent=39 // pred_check
          %p258 = pneg %p108
        $region54: #{tpu_custom_call.1} parent=39 // pred_check_branch
          %260 = sbr.rel (%p258) target = $region56
        $region55: #{tpu_custom_call.1} parent=39 // pred_region
          %261 = dma.done [#allocation9], 2048
        $region56: #{tpu_custom_call.1} parent=39 // pred_fallthru
          _
        %s262 = sand.u32 %s32, 1
        %s263 = scalar_lea.sflag [#allocation3], %s262
        %s264 = sand.u32 %s32, 1
        %s265 = smul.addr %s264, 8
        %s266 = scalar_lea.vmem [#allocation2], %s265
        %p267 = pneg %p45
        %p268 = pneg %p42
        %p269 = pneg %p66
        %p270 = pneg %p63
        %p271 = pneg %p87
        %p272 = pneg %p84
        %p273 = pneg %p108
        %p274 = pneg %p105
        %p275 = pneg %p129
        %p276 = pneg %p126
        %p277 = pneg %p155
        %p278 = pneg %p152
        %s279 = sand.u32 %s142, 1
        %s280 = scalar_lea.sflag [#allocation4], %s279
        %s281 = sand.u32 %s142, 1
        %s282 = smul.addr %s281, 8
        %s283 = scalar_lea.vmem [#allocation10], %s282
        %v284 = vld [vmem:[%s245] sm:$0xff]
        %v285 = vld [vmem:[#allocation5] sm:$0xff]
        %v286 = vld [vmem:[#allocation5 + $0x8] sm:$0xff]
        %v287 = vld [vmem:[#allocation5 + $0x10] sm:$0xff]
        %v288 = vld [vmem:[#allocation5 + $0x18] sm:$0xff]
        %v289 = vld [vmem:[#allocation5 + $0x20] sm:$0xff]
        %v290 = vld [vmem:[#allocation5 + $0x28] sm:$0xff]
        %v291 = vld [vmem:[#allocation5 + $0x30] sm:$0xff]
        %v292 = vld [vmem:[#allocation5 + $0x38] sm:$0xff]
        %v293 = vld [vmem:[#allocation5 + $0x40] sm:$0xff]
        %v294 = vld [vmem:[#allocation5 + $0x48] sm:$0xff]
        %v295 = vld [vmem:[#allocation5 + $0x50] sm:$0xff]
        %v296 = vld [vmem:[#allocation5 + $0x58] sm:$0xff]
        %v297 = vld [vmem:[#allocation5 + $0x60] sm:$0xff]
        %v298 = vld [vmem:[#allocation5 + $0x68] sm:$0xff]
        %v299 = vld [vmem:[#allocation5 + $0x70] sm:$0xff]
        %v300 = vld [vmem:[#allocation5 + $0x78] sm:$0xff]
        %v301 = vld [vmem:[#allocation7] sm:$0xff]
        %v302 = vld [vmem:[#allocation7 + $0x8] sm:$0xff]
        %v303 = vld [vmem:[#allocation7 + $0x10] sm:$0xff]
        %v304 = vld [vmem:[#allocation7 + $0x18] sm:$0xff]
        %v305 = vld [vmem:[#allocation7 + $0x20] sm:$0xff]
        %v306 = vld [vmem:[#allocation7 + $0x28] sm:$0xff]
        %v307 = vld [vmem:[#allocation7 + $0x30] sm:$0xff]
        %v308 = vld [vmem:[#allocation7 + $0x38] sm:$0xff]
        %v309 = vld [vmem:[#allocation7 + $0x40] sm:$0xff]
        %v310 = vld [vmem:[#allocation7 + $0x48] sm:$0xff]
        %v311 = vld [vmem:[#allocation7 + $0x50] sm:$0xff]
        %v312 = vld [vmem:[#allocation7 + $0x58] sm:$0xff]
        %v313 = vld [vmem:[#allocation7 + $0x60] sm:$0xff]
        %v314 = vld [vmem:[#allocation7 + $0x68] sm:$0xff]
        %v315 = vld [vmem:[#allocation7 + $0x70] sm:$0xff]
        %v316 = vld [vmem:[#allocation7 + $0x78] sm:$0xff]
        %v317 = vld [vmem:[#allocation8] sm:$0xff]
        %v318 = vld [vmem:[#allocation8 + $0x8] sm:$0xff]
        %v319 = vld [vmem:[#allocation8 + $0x10] sm:$0xff]
        %v320 = vld [vmem:[#allocation8 + $0x18] sm:$0xff]
        %v321 = vld [vmem:[#allocation8 + $0x20] sm:$0xff]
        %v322 = vld [vmem:[#allocation8 + $0x28] sm:$0xff]
        %v323 = vld [vmem:[#allocation8 + $0x30] sm:$0xff]
        %v324 = vld [vmem:[#allocation8 + $0x38] sm:$0xff]
        %v325 = vld [vmem:[#allocation8 + $0x40] sm:$0xff]
        %v326 = vld [vmem:[#allocation8 + $0x48] sm:$0xff]
        %v327 = vld [vmem:[#allocation8 + $0x50] sm:$0xff]
        %v328 = vld [vmem:[#allocation8 + $0x58] sm:$0xff]
        %v329 = vld [vmem:[#allocation8 + $0x60] sm:$0xff]
        %v330 = vld [vmem:[#allocation8 + $0x68] sm:$0xff]
        %v331 = vld [vmem:[#allocation8 + $0x70] sm:$0xff]
        %v332 = vld [vmem:[#allocation8 + $0x78] sm:$0xff]
        %v333 = vld [vmem:[%s4] sm:$0x1]
        %334 = vmatprep.subr.mxu0 0.0
        %335 = vmatpush1.msra.mxu0 %v285
        %336 = vmatprep.subr.mxu0 0.0
        %337 = vmatpush1.msra.mxu0 %v286
        %338 = vmatprep.subr.mxu0 0.0
        %339 = vmatpush1.msra.mxu0 %v287
        %340 = vmatprep.subr.mxu0 0.0
        %341 = vmatpush1.msra.mxu0 %v288
        %342 = vmatprep.subr.mxu0 0.0
        %343 = vmatpush1.msra.mxu0 %v289
        %344 = vmatprep.subr.mxu0 0.0
        %345 = vmatpush1.msra.mxu0 %v290
        %346 = vmatprep.subr.mxu0 0.0
        %347 = vmatpush1.msra.mxu0 %v291
        %348 = vmatprep.subr.mxu0 0.0
        %349 = vmatpush1.msra.mxu0 %v292
        %350 = vmatprep.subr.mxu0 0.0
        %351 = vmatpush1.msra.mxu0 %v293
        %352 = vmatprep.subr.mxu0 0.0
        %353 = vmatpush1.msra.mxu0 %v294
        %354 = vmatprep.subr.mxu0 0.0
        %355 = vmatpush1.msra.mxu0 %v295
        %356 = vmatprep.subr.mxu0 0.0
        %357 = vmatpush1.msra.mxu0 %v296
        %358 = vmatprep.subr.mxu0 0.0
        %359 = vmatpush1.msra.mxu0 %v297
        %360 = vmatprep.subr.mxu0 0.0
        %361 = vmatpush1.msra.mxu0 %v298
        %362 = vmatprep.subr.mxu0 0.0
        %363 = vmatpush1.msra.mxu0 %v299
        %364 = vmatprep.subr.mxu0 0.0
        %365 = vmatpush1.msra.mxu0 %v300
        %366 = vmatprep.subr.mxu0 0.0
        %367 = vmatpush1.msra.mxu0 0.0
        %368 = vmatprep.subr.mxu0 0.0
        %369 = vmatpush1.msra.mxu0 0.0
        %370 = vmatprep.subr.mxu0 0.0
        %371 = vmatpush1.msra.mxu0 0.0
        %372 = vmatprep.subr.mxu0 0.0
        %373 = vmatpush1.msra.mxu0 0.0
        %374 = vmatprep.subr.mxu0 0.0
        %375 = vmatpush1.msra.mxu0 0.0
        %376 = vmatprep.subr.mxu0 0.0
        %377 = vmatpush1.msra.mxu0 0.0
        %378 = vmatprep.subr.mxu0 0.0
        %379 = vmatpush1.msra.mxu0 0.0
        %380 = vmatprep.subr.mxu0 0.0
        %381 = vmatpush1.msra.mxu0 0.0
        %382 = vmatprep.subr.mxu0 0.0
        %383 = vmatpush1.msra.mxu0 0.0
        %384 = vmatprep.subr.mxu0 0.0
        %385 = vmatpush1.msra.mxu0 0.0
        %386 = vmatprep.subr.mxu0 0.0
        %387 = vmatpush1.msra.mxu0 0.0
        %388 = vmatprep.subr.mxu0 0.0
        %389 = vmatpush1.msra.mxu0 0.0
        %390 = vmatprep.subr.mxu0 0.0
        %391 = vmatpush1.msra.mxu0 0.0
        %392 = vmatprep.subr.mxu0 0.0
        %393 = vmatpush1.msra.mxu0 0.0
        %394 = vmatprep.subr.mxu0 0.0
        %395 = vmatpush1.msra.mxu0 0.0
        %396 = vmatprep.subr.mxu0 0.0
        %397 = vmatpush1.msra.mxu0 0.0
        %398 = vmatprep.mubr.f32.mxu0 0.0
        %399 = vmatmul.mubr.f32.gmra.mrb[0].mxu0 %v284
        %v400 = vpop.f32.mrb[0].mxu0
        %v401 = vadd.f32 0.0, %v400
        %v402 = vpop.f32.mrb[0].mxu0
        %403 = vdwg.mxu0
        %404 = vmatprep.subr.mxu0 0.0
        %405 = vmatpush1.msra.mxu0 %v301
        %406 = vmatprep.subr.mxu0 0.0
        %407 = vmatpush1.msra.mxu0 %v302
        %408 = vmatprep.subr.mxu0 0.0
        %409 = vmatpush1.msra.mxu0 %v303
        %410 = vmatprep.subr.mxu0 0.0
        %411 = vmatpush1.msra.mxu0 %v304
        %412 = vmatprep.subr.mxu0 0.0
        %413 = vmatpush1.msra.mxu0 %v305
        %414 = vmatprep.subr.mxu0 0.0
        %415 = vmatpush1.msra.mxu0 %v306
        %416 = vmatprep.subr.mxu0 0.0
        %417 = vmatpush1.msra.mxu0 %v307
        %418 = vmatprep.subr.mxu0 0.0
        %419 = vmatpush1.msra.mxu0 %v308
        %420 = vmatprep.subr.mxu0 0.0
        %421 = vmatpush1.msra.mxu0 %v309
        %422 = vmatprep.subr.mxu0 0.0
        %423 = vmatpush1.msra.mxu0 %v310
        %424 = vmatprep.subr.mxu0 0.0
        %425 = vmatpush1.msra.mxu0 %v311
        %426 = vmatprep.subr.mxu0 0.0
        %427 = vmatpush1.msra.mxu0 %v312
        %428 = vmatprep.subr.mxu0 0.0
        %429 = vmatpush1.msra.mxu0 %v313
        %430 = vmatprep.subr.mxu0 0.0
        %431 = vmatpush1.msra.mxu0 %v314
        %432 = vmatprep.subr.mxu0 0.0
        %433 = vmatpush1.msra.mxu0 %v315
        %434 = vmatprep.subr.mxu0 0.0
        %435 = vmatpush1.msra.mxu0 %v316
        %436 = vmatprep.subr.mxu0 0.0
        %437 = vmatpush1.msra.mxu0 0.0
        %438 = vmatprep.subr.mxu0 0.0
        %439 = vmatpush1.msra.mxu0 0.0
        %440 = vmatprep.subr.mxu0 0.0
        %441 = vmatpush1.msra.mxu0 0.0
        %442 = vmatprep.subr.mxu0 0.0
        %443 = vmatpush1.msra.mxu0 0.0
        %444 = vmatprep.subr.mxu0 0.0
        %445 = vmatpush1.msra.mxu0 0.0
        %446 = vmatprep.subr.mxu0 0.0
        %447 = vmatpush1.msra.mxu0 0.0
        %448 = vmatprep.subr.mxu0 0.0
        %449 = vmatpush1.msra.mxu0 0.0
        %450 = vmatprep.subr.mxu0 0.0
        %451 = vmatpush1.msra.mxu0 0.0
        %452 = vmatprep.subr.mxu0 0.0
        %453 = vmatpush1.msra.mxu0 0.0
        %454 = vmatprep.subr.mxu0 0.0
        %455 = vmatpush1.msra.mxu0 0.0
        %456 = vmatprep.subr.mxu0 0.0
        %457 = vmatpush1.msra.mxu0 0.0
        %458 = vmatprep.subr.mxu0 0.0
        %459 = vmatpush1.msra.mxu0 0.0
        %460 = vmatprep.subr.mxu0 0.0
        %461 = vmatpush1.msra.mxu0 0.0
        %462 = vmatprep.subr.mxu0 0.0
        %463 = vmatpush1.msra.mxu0 0.0
        %464 = vmatprep.subr.mxu0 0.0
        %465 = vmatpush1.msra.mxu0 0.0
        %466 = vmatprep.subr.mxu0 0.0
        %467 = vmatpush1.msra.mxu0 0.0
        %468 = vmatprep.mubr.f32.mxu0 0.0
        %469 = vmatmul.mubr.f32.gmra.mrb[0].mxu0 %v284
        %v470 = vpop.f32.mrb[0].mxu0
        %v471 = vadd.f32 0.0, %v470
        %v472 = vpop.f32.mrb[0].mxu0
        %473 = vdwg.mxu0
        %v475 = vlaneseq
        %v476 = vshrl.u32 %v475, 7
        %v477 = vsub.s32 0, %v476
        %v478 = vrot.slane %v333, %v477
        %480 = vmatprep.subr.mxu0 0.0
        %481 = vmatpush1.msra.mxu0 %v317
        %482 = vmatprep.subr.mxu0 0.0
        %483 = vmatpush1.msra.mxu0 %v318
        %484 = vmatprep.subr.mxu0 0.0
        %485 = vmatpush1.msra.mxu0 %v319
        %486 = vmatprep.subr.mxu0 0.0
        %487 = vmatpush1.msra.mxu0 %v320
        %488 = vmatprep.subr.mxu0 0.0
        %489 = vmatpush1.msra.mxu0 %v321
        %490 = vmatprep.subr.mxu0 0.0
        %491 = vmatpush1.msra.mxu0 %v322
        %492 = vmatprep.subr.mxu0 0.0
        %493 = vmatpush1.msra.mxu0 %v323
        %494 = vmatprep.subr.mxu0 0.0
        %495 = vmatpush1.msra.mxu0 %v324
        %496 = vmatprep.subr.mxu0 0.0
        %497 = vmatpush1.msra.mxu0 %v325
        %498 = vmatprep.subr.mxu0 0.0
        %499 = vmatpush1.msra.mxu0 %v326
        %500 = vmatprep.subr.mxu0 0.0
        %501 = vmatpush1.msra.mxu0 %v327
        %502 = vmatprep.subr.mxu0 0.0
        %503 = vmatpush1.msra.mxu0 %v328
        %504 = vmatprep.subr.mxu0 0.0
        %505 = vmatpush1.msra.mxu0 %v329
        %506 = vmatprep.subr.mxu0 0.0
        %507 = vmatpush1.msra.mxu0 %v330
        %508 = vmatprep.subr.mxu0 0.0
        %509 = vmatpush1.msra.mxu0 %v331
        %510 = vmatprep.subr.mxu0 0.0
        %511 = vmatpush1.msra.mxu0 %v332
        %512 = vmatprep.subr.mxu0 0.0
        %513 = vmatpush1.msra.mxu0 0.0
        %514 = vmatprep.subr.mxu0 0.0
        %515 = vmatpush1.msra.mxu0 0.0
        %516 = vmatprep.subr.mxu0 0.0
        %517 = vmatpush1.msra.mxu0 0.0
        %518 = vmatprep.subr.mxu0 0.0
        %519 = vmatpush1.msra.mxu0 0.0
        %520 = vmatprep.subr.mxu0 0.0
        %521 = vmatpush1.msra.mxu0 0.0
        %522 = vmatprep.subr.mxu0 0.0
        %523 = vmatpush1.msra.mxu0 0.0
        %524 = vmatprep.subr.mxu0 0.0
        %525 = vmatpush1.msra.mxu0 0.0
        %526 = vmatprep.subr.mxu0 0.0
        %527 = vmatpush1.msra.mxu0 0.0
        %528 = vmatprep.subr.mxu0 0.0
        %529 = vmatpush1.msra.mxu0 0.0
        %530 = vmatprep.subr.mxu0 0.0
        %531 = vmatpush1.msra.mxu0 0.0
        %532 = vmatprep.subr.mxu0 0.0
        %533 = vmatpush1.msra.mxu0 0.0
        %534 = vmatprep.subr.mxu0 0.0
        %535 = vmatpush1.msra.mxu0 0.0
        %536 = vmatprep.subr.mxu0 0.0
        %537 = vmatpush1.msra.mxu0 0.0
        %538 = vmatprep.subr.mxu0 0.0
        %539 = vmatpush1.msra.mxu0 0.0
        %540 = vmatprep.subr.mxu0 0.0
        %541 = vmatpush1.msra.mxu0 0.0
        %542 = vmatprep.subr.mxu0 0.0
        %543 = vmatpush1.msra.mxu0 0.0
        %544 = vmatprep.mubr.f32.mxu0 0.0
        %545 = vmatmul.mubr.f32.gmra.mrb[0].mxu0 %v284
        %v546 = vpop.f32.mrb[0].mxu0
        %v547 = vadd.f32 %v478, %v546
        %v548 = vpop.f32.mrb[0].mxu0
        %549 = vdwg.mxu0
        %v550 = vlaneseq
        %v551 = vshrl.u32 %v550, 7
        %v552 = vsub.s32 0, %v551
        %v553 = vrot.slane %v401, %v552
        %555 = vbcast.lane.b32.xlu0 %v553, 256
        %v556 = vpop.permute.xlu0 %555
        %s558 = sor.u32 256, 8
        %559 = vbcast.lane.b32.xlu0 %v553, %s558
        %v560 = vpop.permute.xlu0 %559
        %s562 = sor.u32 256, 16
        %563 = vbcast.lane.b32.xlu0 %v553, %s562
        %v564 = vpop.permute.xlu0 %563
        %s566 = sor.u32 256, 24
        %567 = vbcast.lane.b32.xlu0 %v553, %s566
        %v568 = vpop.permute.xlu0 %567
        %s570 = sor.u32 256, 32
        %571 = vbcast.lane.b32.xlu0 %v553, %s570
        %v572 = vpop.permute.xlu0 %571
        %s574 = sor.u32 256, 40
        %575 = vbcast.lane.b32.xlu0 %v553, %s574
        %v576 = vpop.permute.xlu0 %575
        %s578 = sor.u32 256, 48
        %579 = vbcast.lane.b32.xlu0 %v553, %s578
        %v580 = vpop.permute.xlu0 %579
        %s582 = sor.u32 256, 56
        %583 = vbcast.lane.b32.xlu0 %v553, %s582
        %v584 = vpop.permute.xlu0 %583
        %s586 = sor.u32 256, 64
        %587 = vbcast.lane.b32.xlu0 %v553, %s586
        %v588 = vpop.permute.xlu0 %587
        %s590 = sor.u32 256, 72
        %591 = vbcast.lane.b32.xlu0 %v553, %s590
        %v592 = vpop.permute.xlu0 %591
        %s594 = sor.u32 256, 80
        %595 = vbcast.lane.b32.xlu0 %v553, %s594
        %v596 = vpop.permute.xlu0 %595
        %s598 = sor.u32 256, 88
        %599 = vbcast.lane.b32.xlu0 %v553, %s598
        %v600 = vpop.permute.xlu0 %599
        %s602 = sor.u32 256, 96
        %603 = vbcast.lane.b32.xlu0 %v553, %s602
        %v604 = vpop.permute.xlu0 %603
        %s606 = sor.u32 256, 104
        %607 = vbcast.lane.b32.xlu0 %v553, %s606
        %v608 = vpop.permute.xlu0 %607
        %s610 = sor.u32 256, 112
        %611 = vbcast.lane.b32.xlu0 %v553, %s610
        %v612 = vpop.permute.xlu0 %611
        %s614 = sor.u32 256, 120
        %615 = vbcast.lane.b32.xlu0 %v553, %s614
        %v616 = vpop.permute.xlu0 %615
        %v617 = vlaneseq
        %v618 = vshrl.u32 %v617, 7
        %v619 = vsub.s32 1, %v618
        %v620 = vrot.slane %v401, %v619
        %622 = vbcast.lane.b32.xlu0 %v620, 256
        %v623 = vpop.permute.xlu0 %622
        %s625 = sor.u32 256, 8
        %626 = vbcast.lane.b32.xlu0 %v620, %s625
        %v627 = vpop.permute.xlu0 %626
        %s629 = sor.u32 256, 16
        %630 = vbcast.lane.b32.xlu0 %v620, %s629
        %v631 = vpop.permute.xlu0 %630
        %s633 = sor.u32 256, 24
        %634 = vbcast.lane.b32.xlu0 %v620, %s633
        %v635 = vpop.permute.xlu0 %634
        %s637 = sor.u32 256, 32
        %638 = vbcast.lane.b32.xlu0 %v620, %s637
        %v639 = vpop.permute.xlu0 %638
        %s641 = sor.u32 256, 40
        %642 = vbcast.lane.b32.xlu0 %v620, %s641
        %v643 = vpop.permute.xlu0 %642
        %s645 = sor.u32 256, 48
        %646 = vbcast.lane.b32.xlu0 %v620, %s645
        %v647 = vpop.permute.xlu0 %646
        %s649 = sor.u32 256, 56
        %650 = vbcast.lane.b32.xlu0 %v620, %s649
        %v651 = vpop.permute.xlu0 %650
        %s653 = sor.u32 256, 64
        %654 = vbcast.lane.b32.xlu0 %v620, %s653
        %v655 = vpop.permute.xlu0 %654
        %s657 = sor.u32 256, 72
        %658 = vbcast.lane.b32.xlu0 %v620, %s657
        %v659 = vpop.permute.xlu0 %658
        %s661 = sor.u32 256, 80
        %662 = vbcast.lane.b32.xlu0 %v620, %s661
        %v663 = vpop.permute.xlu0 %662
        %s665 = sor.u32 256, 88
        %666 = vbcast.lane.b32.xlu0 %v620, %s665
        %v667 = vpop.permute.xlu0 %666
        %s669 = sor.u32 256, 96
        %670 = vbcast.lane.b32.xlu0 %v620, %s669
        %v671 = vpop.permute.xlu0 %670
        %s673 = sor.u32 256, 104
        %674 = vbcast.lane.b32.xlu0 %v620, %s673
        %v675 = vpop.permute.xlu0 %674
        %s677 = sor.u32 256, 112
        %678 = vbcast.lane.b32.xlu0 %v620, %s677
        %v679 = vpop.permute.xlu0 %678
        %s681 = sor.u32 256, 120
        %682 = vbcast.lane.b32.xlu0 %v620, %s681
        %v683 = vpop.permute.xlu0 %682
        %v684 = vlaneseq
        %v685 = vshrl.u32 %v684, 7
        %v686 = vsub.s32 2, %v685
        %v687 = vrot.slane %v401, %v686
        %689 = vbcast.lane.b32.xlu0 %v687, 256
        %v690 = vpop.permute.xlu0 %689
        %s692 = sor.u32 256, 8
        %693 = vbcast.lane.b32.xlu0 %v687, %s692
        %v694 = vpop.permute.xlu0 %693
        %s696 = sor.u32 256, 16
        %697 = vbcast.lane.b32.xlu0 %v687, %s696
        %v698 = vpop.permute.xlu0 %697
        %s700 = sor.u32 256, 24
        %701 = vbcast.lane.b32.xlu0 %v687, %s700
        %v702 = vpop.permute.xlu0 %701
        %s704 = sor.u32 256, 32
        %705 = vbcast.lane.b32.xlu0 %v687, %s704
        %v706 = vpop.permute.xlu0 %705
        %s708 = sor.u32 256, 40
        %709 = vbcast.lane.b32.xlu0 %v687, %s708
        %v710 = vpop.permute.xlu0 %709
        %s712 = sor.u32 256, 48
        %713 = vbcast.lane.b32.xlu0 %v687, %s712
        %v714 = vpop.permute.xlu0 %713
        %s716 = sor.u32 256, 56
        %717 = vbcast.lane.b32.xlu0 %v687, %s716
        %v718 = vpop.permute.xlu0 %717
        %s720 = sor.u32 256, 64
        %721 = vbcast.lane.b32.xlu0 %v687, %s720
        %v722 = vpop.permute.xlu0 %721
        %s724 = sor.u32 256, 72
        %725 = vbcast.lane.b32.xlu0 %v687, %s724
        %v726 = vpop.permute.xlu0 %725
        %s728 = sor.u32 256, 80
        %729 = vbcast.lane.b32.xlu0 %v687, %s728
        %v730 = vpop.permute.xlu0 %729
        %s732 = sor.u32 256, 88
        %733 = vbcast.lane.b32.xlu0 %v687, %s732
        %v734 = vpop.permute.xlu0 %733
        %s736 = sor.u32 256, 96
        %737 = vbcast.lane.b32.xlu0 %v687, %s736
        %v738 = vpop.permute.xlu0 %737
        %s740 = sor.u32 256, 104
        %741 = vbcast.lane.b32.xlu0 %v687, %s740
        %v742 = vpop.permute.xlu0 %741
        %s744 = sor.u32 256, 112
        %745 = vbcast.lane.b32.xlu0 %v687, %s744
        %v746 = vpop.permute.xlu0 %745
        %s748 = sor.u32 256, 120
        %749 = vbcast.lane.b32.xlu0 %v687, %s748
        %v750 = vpop.permute.xlu0 %749
        %v751 = vlaneseq
        %v752 = vshrl.u32 %v751, 7
        %v753 = vsub.s32 3, %v752
        %v754 = vrot.slane %v401, %v753
        %756 = vbcast.lane.b32.xlu0 %v754, 256
        %v757 = vpop.permute.xlu0 %756
        %s759 = sor.u32 256, 8
        %760 = vbcast.lane.b32.xlu0 %v754, %s759
        %v761 = vpop.permute.xlu0 %760
        %s763 = sor.u32 256, 16
        %764 = vbcast.lane.b32.xlu0 %v754, %s763
        %v765 = vpop.permute.xlu0 %764
        %s767 = sor.u32 256, 24
        %768 = vbcast.lane.b32.xlu0 %v754, %s767
        %v769 = vpop.permute.xlu0 %768
        %s771 = sor.u32 256, 32
        %772 = vbcast.lane.b32.xlu0 %v754, %s771
        %v773 = vpop.permute.xlu0 %772
        %s775 = sor.u32 256, 40
        %776 = vbcast.lane.b32.xlu0 %v754, %s775
        %v777 = vpop.permute.xlu0 %776
        %s779 = sor.u32 256, 48
        %780 = vbcast.lane.b32.xlu0 %v754, %s779
        %v781 = vpop.permute.xlu0 %780
        %s783 = sor.u32 256, 56
        %784 = vbcast.lane.b32.xlu0 %v754, %s783
        %v785 = vpop.permute.xlu0 %784
        %s787 = sor.u32 256, 64
        %788 = vbcast.lane.b32.xlu0 %v754, %s787
        %v789 = vpop.permute.xlu0 %788
        %s791 = sor.u32 256, 72
        %792 = vbcast.lane.b32.xlu0 %v754, %s791
        %v793 = vpop.permute.xlu0 %792
        %s795 = sor.u32 256, 80
        %796 = vbcast.lane.b32.xlu0 %v754, %s795
        %v797 = vpop.permute.xlu0 %796
        %s799 = sor.u32 256, 88
        %800 = vbcast.lane.b32.xlu0 %v754, %s799
        %v801 = vpop.permute.xlu0 %800
        %s803 = sor.u32 256, 96
        %804 = vbcast.lane.b32.xlu0 %v754, %s803
        %v805 = vpop.permute.xlu0 %804
        %s807 = sor.u32 256, 104
        %808 = vbcast.lane.b32.xlu0 %v754, %s807
        %v809 = vpop.permute.xlu0 %808
        %s811 = sor.u32 256, 112
        %812 = vbcast.lane.b32.xlu0 %v754, %s811
        %v813 = vpop.permute.xlu0 %812
        %s815 = sor.u32 256, 120
        %816 = vbcast.lane.b32.xlu0 %v754, %s815
        %v817 = vpop.permute.xlu0 %816
        %v818 = vlaneseq
        %v819 = vshrl.u32 %v818, 7
        %v820 = vsub.s32 4, %v819
        %v821 = vrot.slane %v401, %v820
        %823 = vbcast.lane.b32.xlu0 %v821, 256
        %v824 = vpop.permute.xlu0 %823
        %s826 = sor.u32 256, 8
        %827 = vbcast.lane.b32.xlu0 %v821, %s826
        %v828 = vpop.permute.xlu0 %827
        %s830 = sor.u32 256, 16
        %831 = vbcast.lane.b32.xlu0 %v821, %s830
        %v832 = vpop.permute.xlu0 %831
        %s834 = sor.u32 256, 24
        %835 = vbcast.lane.b32.xlu0 %v821, %s834
        %v836 = vpop.permute.xlu0 %835
        %s838 = sor.u32 256, 32
        %839 = vbcast.lane.b32.xlu0 %v821, %s838
        %v840 = vpop.permute.xlu0 %839
        %s842 = sor.u32 256, 40
        %843 = vbcast.lane.b32.xlu0 %v821, %s842
        %v844 = vpop.permute.xlu0 %843
        %s846 = sor.u32 256, 48
        %847 = vbcast.lane.b32.xlu0 %v821, %s846
        %v848 = vpop.permute.xlu0 %847
        %s850 = sor.u32 256, 56
        %851 = vbcast.lane.b32.xlu0 %v821, %s850
        %v852 = vpop.permute.xlu0 %851
        %s854 = sor.u32 256, 64
        %855 = vbcast.lane.b32.xlu0 %v821, %s854
        %v856 = vpop.permute.xlu0 %855
        %s858 = sor.u32 256, 72
        %859 = vbcast.lane.b32.xlu0 %v821, %s858
        %v860 = vpop.permute.xlu0 %859
        %s862 = sor.u32 256, 80
        %863 = vbcast.lane.b32.xlu0 %v821, %s862
        %v864 = vpop.permute.xlu0 %863
        %s866 = sor.u32 256, 88
        %867 = vbcast.lane.b32.xlu0 %v821, %s866
        %v868 = vpop.permute.xlu0 %867
        %s870 = sor.u32 256, 96
        %871 = vbcast.lane.b32.xlu0 %v821, %s870
        %v872 = vpop.permute.xlu0 %871
        %s874 = sor.u32 256, 104
        %875 = vbcast.lane.b32.xlu0 %v821, %s874
        %v876 = vpop.permute.xlu0 %875
        %s878 = sor.u32 256, 112
        %879 = vbcast.lane.b32.xlu0 %v821, %s878
        %v880 = vpop.permute.xlu0 %879
        %s882 = sor.u32 256, 120
        %883 = vbcast.lane.b32.xlu0 %v821, %s882
        %v884 = vpop.permute.xlu0 %883
        %v885 = vlaneseq
        %v886 = vshrl.u32 %v885, 7
        %v887 = vsub.s32 5, %v886
        %v888 = vrot.slane %v401, %v887
        %890 = vbcast.lane.b32.xlu0 %v888, 256
        %v891 = vpop.permute.xlu0 %890
        %s893 = sor.u32 256, 8
        %894 = vbcast.lane.b32.xlu0 %v888, %s893
        %v895 = vpop.permute.xlu0 %894
        %s897 = sor.u32 256, 16
        %898 = vbcast.lane.b32.xlu0 %v888, %s897
        %v899 = vpop.permute.xlu0 %898
        %s901 = sor.u32 256, 24
        %902 = vbcast.lane.b32.xlu0 %v888, %s901
        %v903 = vpop.permute.xlu0 %902
        %s905 = sor.u32 256, 32
        %906 = vbcast.lane.b32.xlu0 %v888, %s905
        %v907 = vpop.permute.xlu0 %906
        %s909 = sor.u32 256, 40
        %910 = vbcast.lane.b32.xlu0 %v888, %s909
        %v911 = vpop.permute.xlu0 %910
        %s913 = sor.u32 256, 48
        %914 = vbcast.lane.b32.xlu0 %v888, %s913
        %v915 = vpop.permute.xlu0 %914
        %s917 = sor.u32 256, 56
        %918 = vbcast.lane.b32.xlu0 %v888, %s917
        %v919 = vpop.permute.xlu0 %918
        %s921 = sor.u32 256, 64
        %922 = vbcast.lane.b32.xlu0 %v888, %s921
        %v923 = vpop.permute.xlu0 %922
        %s925 = sor.u32 256, 72
        %926 = vbcast.lane.b32.xlu0 %v888, %s925
        %v927 = vpop.permute.xlu0 %926
        %s929 = sor.u32 256, 80
        %930 = vbcast.lane.b32.xlu0 %v888, %s929
        %v931 = vpop.permute.xlu0 %930
        %s933 = sor.u32 256, 88
        %934 = vbcast.lane.b32.xlu0 %v888, %s933
        %v935 = vpop.permute.xlu0 %934
        %s937 = sor.u32 256, 96
        %938 = vbcast.lane.b32.xlu0 %v888, %s937
        %v939 = vpop.permute.xlu0 %938
        %s941 = sor.u32 256, 104
        %942 = vbcast.lane.b32.xlu0 %v888, %s941
        %v943 = vpop.permute.xlu0 %942
        %s945 = sor.u32 256, 112
        %946 = vbcast.lane.b32.xlu0 %v888, %s945
        %v947 = vpop.permute.xlu0 %946
        %s949 = sor.u32 256, 120
        %950 = vbcast.lane.b32.xlu0 %v888, %s949
        %v951 = vpop.permute.xlu0 %950
        %v952 = vlaneseq
        %v953 = vshrl.u32 %v952, 7
        %v954 = vsub.s32 6, %v953
        %v955 = vrot.slane %v401, %v954
        %957 = vbcast.lane.b32.xlu0 %v955, 256
        %v958 = vpop.permute.xlu0 %957
        %s960 = sor.u32 256, 8
        %961 = vbcast.lane.b32.xlu0 %v955, %s960
        %v962 = vpop.permute.xlu0 %961
        %s964 = sor.u32 256, 16
        %965 = vbcast.lane.b32.xlu0 %v955, %s964
        %v966 = vpop.permute.xlu0 %965
        %s968 = sor.u32 256, 24
        %969 = vbcast.lane.b32.xlu0 %v955, %s968
        %v970 = vpop.permute.xlu0 %969
        %s972 = sor.u32 256, 32
        %973 = vbcast.lane.b32.xlu0 %v955, %s972
        %v974 = vpop.permute.xlu0 %973
        %s976 = sor.u32 256, 40
        %977 = vbcast.lane.b32.xlu0 %v955, %s976
        %v978 = vpop.permute.xlu0 %977
        %s980 = sor.u32 256, 48
        %981 = vbcast.lane.b32.xlu0 %v955, %s980
        %v982 = vpop.permute.xlu0 %981
        %s984 = sor.u32 256, 56
        %985 = vbcast.lane.b32.xlu0 %v955, %s984
        %v986 = vpop.permute.xlu0 %985
        %s988 = sor.u32 256, 64
        %989 = vbcast.lane.b32.xlu0 %v955, %s988
        %v990 = vpop.permute.xlu0 %989
        %s992 = sor.u32 256, 72
        %993 = vbcast.lane.b32.xlu0 %v955, %s992
        %v994 = vpop.permute.xlu0 %993
        %s996 = sor.u32 256, 80
        %997 = vbcast.lane.b32.xlu0 %v955, %s996
        %v998 = vpop.permute.xlu0 %997
        %s1000 = sor.u32 256, 88
        %1001 = vbcast.lane.b32.xlu0 %v955, %s1000
        %v1002 = vpop.permute.xlu0 %1001
        %s1004 = sor.u32 256, 96
        %1005 = vbcast.lane.b32.xlu0 %v955, %s1004
        %v1006 = vpop.permute.xlu0 %1005
        %s1008 = sor.u32 256, 104
        %1009 = vbcast.lane.b32.xlu0 %v955, %s1008
        %v1010 = vpop.permute.xlu0 %1009
        %s1012 = sor.u32 256, 112
        %1013 = vbcast.lane.b32.xlu0 %v955, %s1012
        %v1014 = vpop.permute.xlu0 %1013
        %s1016 = sor.u32 256, 120
        %1017 = vbcast.lane.b32.xlu0 %v955, %s1016
        %v1018 = vpop.permute.xlu0 %1017
        %v1019 = vlaneseq
        %v1020 = vshrl.u32 %v1019, 7
        %v1021 = vsub.s32 7, %v1020
        %v1022 = vrot.slane %v401, %v1021
        %1024 = vbcast.lane.b32.xlu0 %v1022, 256
        %v1025 = vpop.permute.xlu0 %1024
        %s1027 = sor.u32 256, 8
        %1028 = vbcast.lane.b32.xlu0 %v1022, %s1027
        %v1029 = vpop.permute.xlu0 %1028
        %s1031 = sor.u32 256, 16
        %1032 = vbcast.lane.b32.xlu0 %v1022, %s1031
        %v1033 = vpop.permute.xlu0 %1032
        %s1035 = sor.u32 256, 24
        %1036 = vbcast.lane.b32.xlu0 %v1022, %s1035
        %v1037 = vpop.permute.xlu0 %1036
        %s1039 = sor.u32 256, 32
        %1040 = vbcast.lane.b32.xlu0 %v1022, %s1039
        %v1041 = vpop.permute.xlu0 %1040
        %s1043 = sor.u32 256, 40
        %1044 = vbcast.lane.b32.xlu0 %v1022, %s1043
        %v1045 = vpop.permute.xlu0 %1044
        %s1047 = sor.u32 256, 48
        %1048 = vbcast.lane.b32.xlu0 %v1022, %s1047
        %v1049 = vpop.permute.xlu0 %1048
        %s1051 = sor.u32 256, 56
        %1052 = vbcast.lane.b32.xlu0 %v1022, %s1051
        %v1053 = vpop.permute.xlu0 %1052
        %s1055 = sor.u32 256, 64
        %1056 = vbcast.lane.b32.xlu0 %v1022, %s1055
        %v1057 = vpop.permute.xlu0 %1056
        %s1059 = sor.u32 256, 72
        %1060 = vbcast.lane.b32.xlu0 %v1022, %s1059
        %v1061 = vpop.permute.xlu0 %1060
        %s1063 = sor.u32 256, 80
        %1064 = vbcast.lane.b32.xlu0 %v1022, %s1063
        %v1065 = vpop.permute.xlu0 %1064
        %s1067 = sor.u32 256, 88
        %1068 = vbcast.lane.b32.xlu0 %v1022, %s1067
        %v1069 = vpop.permute.xlu0 %1068
        %s1071 = sor.u32 256, 96
        %1072 = vbcast.lane.b32.xlu0 %v1022, %s1071
        %v1073 = vpop.permute.xlu0 %1072
        %s1075 = sor.u32 256, 104
        %1076 = vbcast.lane.b32.xlu0 %v1022, %s1075
        %v1077 = vpop.permute.xlu0 %1076
        %s1079 = sor.u32 256, 112
        %1080 = vbcast.lane.b32.xlu0 %v1022, %s1079
        %v1081 = vpop.permute.xlu0 %1080
        %s1083 = sor.u32 256, 120
        %1084 = vbcast.lane.b32.xlu0 %v1022, %s1083
        %v1085 = vpop.permute.xlu0 %1084
        %v1086 = vmul.f32 %v471, 0.088388346
        %v1088 = vcombine.high %v1086, %v1086
        %v1090 = vunpack.c.l.s4 1966171168
        %v1091 = vunpack.c.0.s8 %v1090
        %v1092 = vlaneseq
        %v1093 = vshrl.u32 %v1092, 7
        %v1094 = vsub.s32 %v1091, %v1093
        %v1095 = vrot.slane %v1086, %v1094
        %v1097 = vunpack.c.l.s4 1966171168
        %v1098 = vunpack.c.0.s8 %v1097
        %v1099 = vlaneseq
        %v1100 = vshrl.u32 %v1099, 7
        %v1101 = vsub.s32 %v1098, %v1100
        %v1102 = vrot.slane %v1088, %v1101
        %v1103 = vcombine.high %v1095, %v1095
        %v1104 = vcombine.high %v1102, %v1102
        %v1106 = vunpack.c.l.s4 1966171168
        %v1107 = vunpack.c.0.s8 %v1106
        %v1108 = vlaneseq
        %v1109 = vshrl.u32 %v1108, 7
        %v1110 = vsub.s32 %v1107, %v1109
        %v1111 = vrot.slane %v1095, %v1110
        %v1113 = vunpack.c.l.s4 1966171168
        %v1114 = vunpack.c.0.s8 %v1113
        %v1115 = vlaneseq
        %v1116 = vshrl.u32 %v1115, 7
        %v1117 = vsub.s32 %v1114, %v1116
        %v1118 = vrot.slane %v1102, %v1117
        %v1120 = vunpack.c.l.s4 1966171168
        %v1121 = vunpack.c.0.s8 %v1120
        %v1122 = vlaneseq
        %v1123 = vshrl.u32 %v1122, 7
        %v1124 = vsub.s32 %v1121, %v1123
        %v1125 = vrot.slane %v1103, %v1124
        %v1127 = vunpack.c.l.s4 1966171168
        %v1128 = vunpack.c.0.s8 %v1127
        %v1129 = vlaneseq
        %v1130 = vshrl.u32 %v1129, 7
        %v1131 = vsub.s32 %v1128, %v1130
        %v1132 = vrot.slane %v1104, %v1131
        %v1133 = vcombine.high %v1111, %v1111
        %v1134 = vcombine.high %v1118, %v1118
        %v1135 = vcombine.high %v1125, %v1125
        %v1136 = vcombine.high %v1132, %v1132
        %v1137 = vlaneseq
        %v1138 = vshrl.u32 %v1137, 7
        %v1139 = vsub.s32 0, %v1138
        %v1140 = vrot.slane %v1111, %v1139
        %v1141 = vlaneseq
        %v1142 = vshrl.u32 %v1141, 7
        %v1143 = vsub.s32 0, %v1142
        %v1144 = vrot.slane %v1125, %v1143
        %v1145 = vlaneseq
        %v1146 = vshrl.u32 %v1145, 7
        %v1147 = vsub.s32 0, %v1146
        %v1148 = vrot.slane %v1133, %v1147
        %v1149 = vlaneseq
        %v1150 = vshrl.u32 %v1149, 7
        %v1151 = vsub.s32 0, %v1150
        %v1152 = vrot.slane %v1135, %v1151
        %v1153 = vlaneseq
        %v1154 = vshrl.u32 %v1153, 7
        %v1155 = vsub.s32 0, %v1154
        %v1156 = vrot.slane %v1118, %v1155
        %v1157 = vlaneseq
        %v1158 = vshrl.u32 %v1157, 7
        %v1159 = vsub.s32 0, %v1158
        %v1160 = vrot.slane %v1132, %v1159
        %v1161 = vlaneseq
        %v1162 = vshrl.u32 %v1161, 7
        %v1163 = vsub.s32 0, %v1162
        %v1164 = vrot.slane %v1134, %v1163
        %v1165 = vlaneseq
        %v1166 = vshrl.u32 %v1165, 7
        %v1167 = vsub.s32 0, %v1166
        %v1168 = vrot.slane %v1136, %v1167
        %v1177 = vmul.f32 %v556, %v1140
        %v1178 = vmul.f32 %v560, %v1140
        %v1179 = vmul.f32 %v564, %v1140
        %v1180 = vmul.f32 %v568, %v1140
        %v1181 = vmul.f32 %v572, %v1140
        %v1182 = vmul.f32 %v576, %v1140
        %v1183 = vmul.f32 %v580, %v1140
        %v1184 = vmul.f32 %v584, %v1140
        %v1185 = vmul.f32 %v588, %v1140
        %v1186 = vmul.f32 %v592, %v1140
        %v1187 = vmul.f32 %v596, %v1140
        %v1188 = vmul.f32 %v600, %v1140
        %v1189 = vmul.f32 %v604, %v1140
        %v1190 = vmul.f32 %v608, %v1140
        %v1191 = vmul.f32 %v612, %v1140
        %v1192 = vmul.f32 %v616, %v1140
        %v1193 = vmul.f32 %v623, %v1144
        %v1194 = vmul.f32 %v627, %v1144
        %v1195 = vmul.f32 %v631, %v1144
        %v1196 = vmul.f32 %v635, %v1144
        %v1197 = vmul.f32 %v639, %v1144
        %v1198 = vmul.f32 %v643, %v1144
        %v1199 = vmul.f32 %v647, %v1144
        %v1200 = vmul.f32 %v651, %v1144
        %v1201 = vmul.f32 %v655, %v1144
        %v1202 = vmul.f32 %v659, %v1144
        %v1203 = vmul.f32 %v663, %v1144
        %v1204 = vmul.f32 %v667, %v1144
        %v1205 = vmul.f32 %v671, %v1144
        %v1206 = vmul.f32 %v675, %v1144
        %v1207 = vmul.f32 %v679, %v1144
        %v1208 = vmul.f32 %v683, %v1144
        %v1209 = vmul.f32 %v690, %v1148
        %v1210 = vmul.f32 %v694, %v1148
        %v1211 = vmul.f32 %v698, %v1148
        %v1212 = vmul.f32 %v702, %v1148
        %v1213 = vmul.f32 %v706, %v1148
        %v1214 = vmul.f32 %v710, %v1148
        %v1215 = vmul.f32 %v714, %v1148
        %v1216 = vmul.f32 %v718, %v1148
        %v1217 = vmul.f32 %v722, %v1148
        %v1218 = vmul.f32 %v726, %v1148
        %v1219 = vmul.f32 %v730, %v1148
        %v1220 = vmul.f32 %v734, %v1148
        %v1221 = vmul.f32 %v738, %v1148
        %v1222 = vmul.f32 %v742, %v1148
        %v1223 = vmul.f32 %v746, %v1148
        %v1224 = vmul.f32 %v750, %v1148
        %v1225 = vmul.f32 %v757, %v1152
        %v1226 = vmul.f32 %v761, %v1152
        %v1227 = vmul.f32 %v765, %v1152
        %v1228 = vmul.f32 %v769, %v1152
        %v1229 = vmul.f32 %v773, %v1152
        %v1230 = vmul.f32 %v777, %v1152
        %v1231 = vmul.f32 %v781, %v1152
        %v1232 = vmul.f32 %v785, %v1152
        %v1233 = vmul.f32 %v789, %v1152
        %v1234 = vmul.f32 %v793, %v1152
        %v1235 = vmul.f32 %v797, %v1152
        %v1236 = vmul.f32 %v801, %v1152
        %v1237 = vmul.f32 %v805, %v1152
        %v1238 = vmul.f32 %v809, %v1152
        %v1239 = vmul.f32 %v813, %v1152
        %v1240 = vmul.f32 %v817, %v1152
        %v1241 = vmul.f32 %v824, %v1156
        %v1242 = vmul.f32 %v828, %v1156
        %v1243 = vmul.f32 %v832, %v1156
        %v1244 = vmul.f32 %v836, %v1156
        %v1245 = vmul.f32 %v840, %v1156
        %v1246 = vmul.f32 %v844, %v1156
        %v1247 = vmul.f32 %v848, %v1156
        %v1248 = vmul.f32 %v852, %v1156
        %v1249 = vmul.f32 %v856, %v1156
        %v1250 = vmul.f32 %v860, %v1156
        %v1251 = vmul.f32 %v864, %v1156
        %v1252 = vmul.f32 %v868, %v1156
        %v1253 = vmul.f32 %v872, %v1156
        %v1254 = vmul.f32 %v876, %v1156
        %v1255 = vmul.f32 %v880, %v1156
        %v1256 = vmul.f32 %v884, %v1156
        %v1257 = vmul.f32 %v891, %v1160
        %v1258 = vmul.f32 %v895, %v1160
        %v1259 = vmul.f32 %v899, %v1160
        %v1260 = vmul.f32 %v903, %v1160
        %v1261 = vmul.f32 %v907, %v1160
        %v1262 = vmul.f32 %v911, %v1160
        %v1263 = vmul.f32 %v915, %v1160
        %v1264 = vmul.f32 %v919, %v1160
        %v1265 = vmul.f32 %v923, %v1160
        %v1266 = vmul.f32 %v927, %v1160
        %v1267 = vmul.f32 %v931, %v1160
        %v1268 = vmul.f32 %v935, %v1160
        %v1269 = vmul.f32 %v939, %v1160
        %v1270 = vmul.f32 %v943, %v1160
        %v1271 = vmul.f32 %v947, %v1160
        %v1272 = vmul.f32 %v951, %v1160
        %v1273 = vmul.f32 %v958, %v1164
        %v1274 = vmul.f32 %v962, %v1164
        %v1275 = vmul.f32 %v966, %v1164
        %v1276 = vmul.f32 %v970, %v1164
        %v1277 = vmul.f32 %v974, %v1164
        %v1278 = vmul.f32 %v978, %v1164
        %v1279 = vmul.f32 %v982, %v1164
        %v1280 = vmul.f32 %v986, %v1164
        %v1281 = vmul.f32 %v990, %v1164
        %v1282 = vmul.f32 %v994, %v1164
        %v1283 = vmul.f32 %v998, %v1164
        %v1284 = vmul.f32 %v1002, %v1164
        %v1285 = vmul.f32 %v1006, %v1164
        %v1286 = vmul.f32 %v1010, %v1164
        %v1287 = vmul.f32 %v1014, %v1164
        %v1288 = vmul.f32 %v1018, %v1164
        %v1289 = vmul.f32 %v1025, %v1168
        %v1290 = vmul.f32 %v1029, %v1168
        %v1291 = vmul.f32 %v1033, %v1168
        %v1292 = vmul.f32 %v1037, %v1168
        %v1293 = vmul.f32 %v1041, %v1168
        %v1294 = vmul.f32 %v1045, %v1168
        %v1295 = vmul.f32 %v1049, %v1168
        %v1296 = vmul.f32 %v1053, %v1168
        %v1297 = vmul.f32 %v1057, %v1168
        %v1298 = vmul.f32 %v1061, %v1168
        %v1299 = vmul.f32 %v1065, %v1168
        %v1300 = vmul.f32 %v1069, %v1168
        %v1301 = vmul.f32 %v1073, %v1168
        %v1302 = vmul.f32 %v1077, %v1168
        %v1303 = vmul.f32 %v1081, %v1168
        %v1304 = vmul.f32 %v1085, %v1168
        %1305 = vmax.xlane.f32.xlu0 %v1177
        %v1306 = vpop.xlane.xlu0 %1305
        %1307 = vmax.xlane.f32.xlu0 %v1178
        %v1308 = vpop.xlane.xlu0 %1307
        %1309 = vmax.xlane.f32.xlu0 %v1179
        %v1310 = vpop.xlane.xlu0 %1309
        %1311 = vmax.xlane.f32.xlu0 %v1180
        %v1312 = vpop.xlane.xlu0 %1311
        %1313 = vmax.xlane.f32.xlu0 %v1181
        %v1314 = vpop.xlane.xlu0 %1313
        %1315 = vmax.xlane.f32.xlu0 %v1182
        %v1316 = vpop.xlane.xlu0 %1315
        %1317 = vmax.xlane.f32.xlu0 %v1183
        %v1318 = vpop.xlane.xlu0 %1317
        %1319 = vmax.xlane.f32.xlu0 %v1184
        %v1320 = vpop.xlane.xlu0 %1319
        %1321 = vmax.xlane.f32.xlu0 %v1185
        %v1322 = vpop.xlane.xlu0 %1321
        %1323 = vmax.xlane.f32.xlu0 %v1186
        %v1324 = vpop.xlane.xlu0 %1323
        %1325 = vmax.xlane.f32.xlu0 %v1187
        %v1326 = vpop.xlane.xlu0 %1325
        %1327 = vmax.xlane.f32.xlu0 %v1188
        %v1328 = vpop.xlane.xlu0 %1327
        %1329 = vmax.xlane.f32.xlu0 %v1189
        %v1330 = vpop.xlane.xlu0 %1329
        %1331 = vmax.xlane.f32.xlu0 %v1190
        %v1332 = vpop.xlane.xlu0 %1331
        %1333 = vmax.xlane.f32.xlu0 %v1191
        %v1334 = vpop.xlane.xlu0 %1333
        %1335 = vmax.xlane.f32.xlu0 %v1192
        %v1336 = vpop.xlane.xlu0 %1335
        %1337 = vmax.xlane.f32.xlu0 %v1193
        %v1338 = vpop.xlane.xlu0 %1337
        %1339 = vmax.xlane.f32.xlu0 %v1194
        %v1340 = vpop.xlane.xlu0 %1339
        %1341 = vmax.xlane.f32.xlu0 %v1195
        %v1342 = vpop.xlane.xlu0 %1341
        %1343 = vmax.xlane.f32.xlu0 %v1196
        %v1344 = vpop.xlane.xlu0 %1343
        %1345 = vmax.xlane.f32.xlu0 %v1197
        %v1346 = vpop.xlane.xlu0 %1345
        %1347 = vmax.xlane.f32.xlu0 %v1198
        %v1348 = vpop.xlane.xlu0 %1347
        %1349 = vmax.xlane.f32.xlu0 %v1199
        %v1350 = vpop.xlane.xlu0 %1349
        %1351 = vmax.xlane.f32.xlu0 %v1200
        %v1352 = vpop.xlane.xlu0 %1351
        %1353 = vmax.xlane.f32.xlu0 %v1201
        %v1354 = vpop.xlane.xlu0 %1353
        %1355 = vmax.xlane.f32.xlu0 %v1202
        %v1356 = vpop.xlane.xlu0 %1355
        %1357 = vmax.xlane.f32.xlu0 %v1203
        %v1358 = vpop.xlane.xlu0 %1357
        %1359 = vmax.xlane.f32.xlu0 %v1204
        %v1360 = vpop.xlane.xlu0 %1359
        %1361 = vmax.xlane.f32.xlu0 %v1205
        %v1362 = vpop.xlane.xlu0 %1361
        %1363 = vmax.xlane.f32.xlu0 %v1206
        %v1364 = vpop.xlane.xlu0 %1363
        %1365 = vmax.xlane.f32.xlu0 %v1207
        %v1366 = vpop.xlane.xlu0 %1365
        %1367 = vmax.xlane.f32.xlu0 %v1208
        %v1368 = vpop.xlane.xlu0 %1367
        %1369 = vmax.xlane.f32.xlu0 %v1209
        %v1370 = vpop.xlane.xlu0 %1369
        %1371 = vmax.xlane.f32.xlu0 %v1210
        %v1372 = vpop.xlane.xlu0 %1371
        %1373 = vmax.xlane.f32.xlu0 %v1211
        %v1374 = vpop.xlane.xlu0 %1373
        %1375 = vmax.xlane.f32.xlu0 %v1212
        %v1376 = vpop.xlane.xlu0 %1375
        %1377 = vmax.xlane.f32.xlu0 %v1213
        %v1378 = vpop.xlane.xlu0 %1377
        %1379 = vmax.xlane.f32.xlu0 %v1214
        %v1380 = vpop.xlane.xlu0 %1379
        %1381 = vmax.xlane.f32.xlu0 %v1215
        %v1382 = vpop.xlane.xlu0 %1381
        %1383 = vmax.xlane.f32.xlu0 %v1216
        %v1384 = vpop.xlane.xlu0 %1383
        %1385 = vmax.xlane.f32.xlu0 %v1217
        %v1386 = vpop.xlane.xlu0 %1385
        %1387 = vmax.xlane.f32.xlu0 %v1218
        %v1388 = vpop.xlane.xlu0 %1387
        %1389 = vmax.xlane.f32.xlu0 %v1219
        %v1390 = vpop.xlane.xlu0 %1389
        %1391 = vmax.xlane.f32.xlu0 %v1220
        %v1392 = vpop.xlane.xlu0 %1391
        %1393 = vmax.xlane.f32.xlu0 %v1221
        %v1394 = vpop.xlane.xlu0 %1393
        %1395 = vmax.xlane.f32.xlu0 %v1222
        %v1396 = vpop.xlane.xlu0 %1395
        %1397 = vmax.xlane.f32.xlu0 %v1223
        %v1398 = vpop.xlane.xlu0 %1397
        %1399 = vmax.xlane.f32.xlu0 %v1224
        %v1400 = vpop.xlane.xlu0 %1399
        %1401 = vmax.xlane.f32.xlu0 %v1225
        %v1402 = vpop.xlane.xlu0 %1401
        %1403 = vmax.xlane.f32.xlu0 %v1226
        %v1404 = vpop.xlane.xlu0 %1403
        %1405 = vmax.xlane.f32.xlu0 %v1227
        %v1406 = vpop.xlane.xlu0 %1405
        %1407 = vmax.xlane.f32.xlu0 %v1228
        %v1408 = vpop.xlane.xlu0 %1407
        %1409 = vmax.xlane.f32.xlu0 %v1229
        %v1410 = vpop.xlane.xlu0 %1409
        %1411 = vmax.xlane.f32.xlu0 %v1230
        %v1412 = vpop.xlane.xlu0 %1411
        %1413 = vmax.xlane.f32.xlu0 %v1231
        %v1414 = vpop.xlane.xlu0 %1413
        %1415 = vmax.xlane.f32.xlu0 %v1232
        %v1416 = vpop.xlane.xlu0 %1415
        %1417 = vmax.xlane.f32.xlu0 %v1233
        %v1418 = vpop.xlane.xlu0 %1417
        %1419 = vmax.xlane.f32.xlu0 %v1234
        %v1420 = vpop.xlane.xlu0 %1419
        %1421 = vmax.xlane.f32.xlu0 %v1235
        %v1422 = vpop.xlane.xlu0 %1421
        %1423 = vmax.xlane.f32.xlu0 %v1236
        %v1424 = vpop.xlane.xlu0 %1423
        %1425 = vmax.xlane.f32.xlu0 %v1237
        %v1426 = vpop.xlane.xlu0 %1425
        %1427 = vmax.xlane.f32.xlu0 %v1238
        %v1428 = vpop.xlane.xlu0 %1427
        %1429 = vmax.xlane.f32.xlu0 %v1239
        %v1430 = vpop.xlane.xlu0 %1429
        %1431 = vmax.xlane.f32.xlu0 %v1240
        %v1432 = vpop.xlane.xlu0 %1431
        %1433 = vmax.xlane.f32.xlu0 %v1241
        %v1434 = vpop.xlane.xlu0 %1433
        %1435 = vmax.xlane.f32.xlu0 %v1242
        %v1436 = vpop.xlane.xlu0 %1435
        %1437 = vmax.xlane.f32.xlu0 %v1243
        %v1438 = vpop.xlane.xlu0 %1437
        %1439 = vmax.xlane.f32.xlu0 %v1244
        %v1440 = vpop.xlane.xlu0 %1439
        %1441 = vmax.xlane.f32.xlu0 %v1245
        %v1442 = vpop.xlane.xlu0 %1441
        %1443 = vmax.xlane.f32.xlu0 %v1246
        %v1444 = vpop.xlane.xlu0 %1443
        %1445 = vmax.xlane.f32.xlu0 %v1247
        %v1446 = vpop.xlane.xlu0 %1445
        %1447 = vmax.xlane.f32.xlu0 %v1248
        %v1448 = vpop.xlane.xlu0 %1447
        %1449 = vmax.xlane.f32.xlu0 %v1249
        %v1450 = vpop.xlane.xlu0 %1449
        %1451 = vmax.xlane.f32.xlu0 %v1250
        %v1452 = vpop.xlane.xlu0 %1451
        %1453 = vmax.xlane.f32.xlu0 %v1251
        %v1454 = vpop.xlane.xlu0 %1453
        %1455 = vmax.xlane.f32.xlu0 %v1252
        %v1456 = vpop.xlane.xlu0 %1455
        %1457 = vmax.xlane.f32.xlu0 %v1253
        %v1458 = vpop.xlane.xlu0 %1457
        %1459 = vmax.xlane.f32.xlu0 %v1254
        %v1460 = vpop.xlane.xlu0 %1459
        %1461 = vmax.xlane.f32.xlu0 %v1255
        %v1462 = vpop.xlane.xlu0 %1461
        %1463 = vmax.xlane.f32.xlu0 %v1256
        %v1464 = vpop.xlane.xlu0 %1463
        %1465 = vmax.xlane.f32.xlu0 %v1257
        %v1466 = vpop.xlane.xlu0 %1465
        %1467 = vmax.xlane.f32.xlu0 %v1258
        %v1468 = vpop.xlane.xlu0 %1467
        %1469 = vmax.xlane.f32.xlu0 %v1259
        %v1470 = vpop.xlane.xlu0 %1469
        %1471 = vmax.xlane.f32.xlu0 %v1260
        %v1472 = vpop.xlane.xlu0 %1471
        %1473 = vmax.xlane.f32.xlu0 %v1261
        %v1474 = vpop.xlane.xlu0 %1473
        %1475 = vmax.xlane.f32.xlu0 %v1262
        %v1476 = vpop.xlane.xlu0 %1475
        %1477 = vmax.xlane.f32.xlu0 %v1263
        %v1478 = vpop.xlane.xlu0 %1477
        %1479 = vmax.xlane.f32.xlu0 %v1264
        %v1480 = vpop.xlane.xlu0 %1479
        %1481 = vmax.xlane.f32.xlu0 %v1265
        %v1482 = vpop.xlane.xlu0 %1481
        %1483 = vmax.xlane.f32.xlu0 %v1266
        %v1484 = vpop.xlane.xlu0 %1483
        %1485 = vmax.xlane.f32.xlu0 %v1267
        %v1486 = vpop.xlane.xlu0 %1485
        %1487 = vmax.xlane.f32.xlu0 %v1268
        %v1488 = vpop.xlane.xlu0 %1487
        %1489 = vmax.xlane.f32.xlu0 %v1269
        %v1490 = vpop.xlane.xlu0 %1489
        %1491 = vmax.xlane.f32.xlu0 %v1270
        %v1492 = vpop.xlane.xlu0 %1491
        %1493 = vmax.xlane.f32.xlu0 %v1271
        %v1494 = vpop.xlane.xlu0 %1493
        %1495 = vmax.xlane.f32.xlu0 %v1272
        %v1496 = vpop.xlane.xlu0 %1495
        %1497 = vmax.xlane.f32.xlu0 %v1273
        %v1498 = vpop.xlane.xlu0 %1497
        %1499 = vmax.xlane.f32.xlu0 %v1274
        %v1500 = vpop.xlane.xlu0 %1499
        %1501 = vmax.xlane.f32.xlu0 %v1275
        %v1502 = vpop.xlane.xlu0 %1501
        %1503 = vmax.xlane.f32.xlu0 %v1276
        %v1504 = vpop.xlane.xlu0 %1503
        %1505 = vmax.xlane.f32.xlu0 %v1277
        %v1506 = vpop.xlane.xlu0 %1505
        %1507 = vmax.xlane.f32.xlu0 %v1278
        %v1508 = vpop.xlane.xlu0 %1507
        %1509 = vmax.xlane.f32.xlu0 %v1279
        %v1510 = vpop.xlane.xlu0 %1509
        %1511 = vmax.xlane.f32.xlu0 %v1280
        %v1512 = vpop.xlane.xlu0 %1511
        %1513 = vmax.xlane.f32.xlu0 %v1281
        %v1514 = vpop.xlane.xlu0 %1513
        %1515 = vmax.xlane.f32.xlu0 %v1282
        %v1516 = vpop.xlane.xlu0 %1515
        %1517 = vmax.xlane.f32.xlu0 %v1283
        %v1518 = vpop.xlane.xlu0 %1517
        %1519 = vmax.xlane.f32.xlu0 %v1284
        %v1520 = vpop.xlane.xlu0 %1519
        %1521 = vmax.xlane.f32.xlu0 %v1285
        %v1522 = vpop.xlane.xlu0 %1521
        %1523 = vmax.xlane.f32.xlu0 %v1286
        %v1524 = vpop.xlane.xlu0 %1523
        %1525 = vmax.xlane.f32.xlu0 %v1287
        %v1526 = vpop.xlane.xlu0 %1525
        %1527 = vmax.xlane.f32.xlu0 %v1288
        %v1528 = vpop.xlane.xlu0 %1527
        %1529 = vmax.xlane.f32.xlu0 %v1289
        %v1530 = vpop.xlane.xlu0 %1529
        %1531 = vmax.xlane.f32.xlu0 %v1290
        %v1532 = vpop.xlane.xlu0 %1531
        %1533 = vmax.xlane.f32.xlu0 %v1291
        %v1534 = vpop.xlane.xlu0 %1533
        %1535 = vmax.xlane.f32.xlu0 %v1292
        %v1536 = vpop.xlane.xlu0 %1535
        %1537 = vmax.xlane.f32.xlu0 %v1293
        %v1538 = vpop.xlane.xlu0 %1537
        %1539 = vmax.xlane.f32.xlu0 %v1294
        %v1540 = vpop.xlane.xlu0 %1539
        %1541 = vmax.xlane.f32.xlu0 %v1295
        %v1542 = vpop.xlane.xlu0 %1541
        %1543 = vmax.xlane.f32.xlu0 %v1296
        %v1544 = vpop.xlane.xlu0 %1543
        %1545 = vmax.xlane.f32.xlu0 %v1297
        %v1546 = vpop.xlane.xlu0 %1545
        %1547 = vmax.xlane.f32.xlu0 %v1298
        %v1548 = vpop.xlane.xlu0 %1547
        %1549 = vmax.xlane.f32.xlu0 %v1299
        %v1550 = vpop.xlane.xlu0 %1549
        %1551 = vmax.xlane.f32.xlu0 %v1300
        %v1552 = vpop.xlane.xlu0 %1551
        %1553 = vmax.xlane.f32.xlu0 %v1301
        %v1554 = vpop.xlane.xlu0 %1553
        %1555 = vmax.xlane.f32.xlu0 %v1302
        %v1556 = vpop.xlane.xlu0 %1555
        %1557 = vmax.xlane.f32.xlu0 %v1303
        %v1558 = vpop.xlane.xlu0 %1557
        %1559 = vmax.xlane.f32.xlu0 %v1304
        %v1560 = vpop.xlane.xlu0 %1559
        %v1561 = vsub.f32 %v1177, %v1306
        %v1562 = vsub.f32 %v1178, %v1308
        %v1563 = vsub.f32 %v1179, %v1310
        %v1564 = vsub.f32 %v1180, %v1312
        %v1565 = vsub.f32 %v1181, %v1314
        %v1566 = vsub.f32 %v1182, %v1316
        %v1567 = vsub.f32 %v1183, %v1318
        %v1568 = vsub.f32 %v1184, %v1320
        %v1569 = vsub.f32 %v1185, %v1322
        %v1570 = vsub.f32 %v1186, %v1324
        %v1571 = vsub.f32 %v1187, %v1326
        %v1572 = vsub.f32 %v1188, %v1328
        %v1573 = vsub.f32 %v1189, %v1330
        %v1574 = vsub.f32 %v1190, %v1332
        %v1575 = vsub.f32 %v1191, %v1334
        %v1576 = vsub.f32 %v1192, %v1336
        %v1577 = vsub.f32 %v1193, %v1338
        %v1578 = vsub.f32 %v1194, %v1340
        %v1579 = vsub.f32 %v1195, %v1342
        %v1580 = vsub.f32 %v1196, %v1344
        %v1581 = vsub.f32 %v1197, %v1346
        %v1582 = vsub.f32 %v1198, %v1348
        %v1583 = vsub.f32 %v1199, %v1350
        %v1584 = vsub.f32 %v1200, %v1352
        %v1585 = vsub.f32 %v1201, %v1354
        %v1586 = vsub.f32 %v1202, %v1356
        %v1587 = vsub.f32 %v1203, %v1358
        %v1588 = vsub.f32 %v1204, %v1360
        %v1589 = vsub.f32 %v1205, %v1362
        %v1590 = vsub.f32 %v1206, %v1364
        %v1591 = vsub.f32 %v1207, %v1366
        %v1592 = vsub.f32 %v1208, %v1368
        %v1593 = vsub.f32 %v1209, %v1370
        %v1594 = vsub.f32 %v1210, %v1372
        %v1595 = vsub.f32 %v1211, %v1374
        %v1596 = vsub.f32 %v1212, %v1376
        %v1597 = vsub.f32 %v1213, %v1378
        %v1598 = vsub.f32 %v1214, %v1380
        %v1599 = vsub.f32 %v1215, %v1382
        %v1600 = vsub.f32 %v1216, %v1384
        %v1601 = vsub.f32 %v1217, %v1386
        %v1602 = vsub.f32 %v1218, %v1388
        %v1603 = vsub.f32 %v1219, %v1390
        %v1604 = vsub.f32 %v1220, %v1392
        %v1605 = vsub.f32 %v1221, %v1394
        %v1606 = vsub.f32 %v1222, %v1396
        %v1607 = vsub.f32 %v1223, %v1398
        %v1608 = vsub.f32 %v1224, %v1400
        %v1609 = vsub.f32 %v1225, %v1402
        %v1610 = vsub.f32 %v1226, %v1404
        %v1611 = vsub.f32 %v1227, %v1406
        %v1612 = vsub.f32 %v1228, %v1408
        %v1613 = vsub.f32 %v1229, %v1410
        %v1614 = vsub.f32 %v1230, %v1412
        %v1615 = vsub.f32 %v1231, %v1414
        %v1616 = vsub.f32 %v1232, %v1416
        %v1617 = vsub.f32 %v1233, %v1418
        %v1618 = vsub.f32 %v1234, %v1420
        %v1619 = vsub.f32 %v1235, %v1422
        %v1620 = vsub.f32 %v1236, %v1424
        %v1621 = vsub.f32 %v1237, %v1426
        %v1622 = vsub.f32 %v1238, %v1428
        %v1623 = vsub.f32 %v1239, %v1430
        %v1624 = vsub.f32 %v1240, %v1432
        %v1625 = vsub.f32 %v1241, %v1434
        %v1626 = vsub.f32 %v1242, %v1436
        %v1627 = vsub.f32 %v1243, %v1438
        %v1628 = vsub.f32 %v1244, %v1440
        %v1629 = vsub.f32 %v1245, %v1442
        %v1630 = vsub.f32 %v1246, %v1444
        %v1631 = vsub.f32 %v1247, %v1446
        %v1632 = vsub.f32 %v1248, %v1448
        %v1633 = vsub.f32 %v1249, %v1450
        %v1634 = vsub.f32 %v1250, %v1452
        %v1635 = vsub.f32 %v1251, %v1454
        %v1636 = vsub.f32 %v1252, %v1456
        %v1637 = vsub.f32 %v1253, %v1458
        %v1638 = vsub.f32 %v1254, %v1460
        %v1639 = vsub.f32 %v1255, %v1462
        %v1640 = vsub.f32 %v1256, %v1464
        %v1641 = vsub.f32 %v1257, %v1466
        %v1642 = vsub.f32 %v1258, %v1468
        %v1643 = vsub.f32 %v1259, %v1470
        %v1644 = vsub.f32 %v1260, %v1472
        %v1645 = vsub.f32 %v1261, %v1474
        %v1646 = vsub.f32 %v1262, %v1476
        %v1647 = vsub.f32 %v1263, %v1478
        %v1648 = vsub.f32 %v1264, %v1480
        %v1649 = vsub.f32 %v1265, %v1482
        %v1650 = vsub.f32 %v1266, %v1484
        %v1651 = vsub.f32 %v1267, %v1486
        %v1652 = vsub.f32 %v1268, %v1488
        %v1653 = vsub.f32 %v1269, %v1490
        %v1654 = vsub.f32 %v1270, %v1492
        %v1655 = vsub.f32 %v1271, %v1494
        %v1656 = vsub.f32 %v1272, %v1496
        %v1657 = vsub.f32 %v1273, %v1498
        %v1658 = vsub.f32 %v1274, %v1500
        %v1659 = vsub.f32 %v1275, %v1502
        %v1660 = vsub.f32 %v1276, %v1504
        %v1661 = vsub.f32 %v1277, %v1506
        %v1662 = vsub.f32 %v1278, %v1508
        %v1663 = vsub.f32 %v1279, %v1510
        %v1664 = vsub.f32 %v1280, %v1512
        %v1665 = vsub.f32 %v1281, %v1514
        %v1666 = vsub.f32 %v1282, %v1516
        %v1667 = vsub.f32 %v1283, %v1518
        %v1668 = vsub.f32 %v1284, %v1520
        %v1669 = vsub.f32 %v1285, %v1522
        %v1670 = vsub.f32 %v1286, %v1524
        %v1671 = vsub.f32 %v1287, %v1526
        %v1672 = vsub.f32 %v1288, %v1528
        %v1673 = vsub.f32 %v1289, %v1530
        %v1674 = vsub.f32 %v1290, %v1532
        %v1675 = vsub.f32 %v1291, %v1534
        %v1676 = vsub.f32 %v1292, %v1536
        %v1677 = vsub.f32 %v1293, %v1538
        %v1678 = vsub.f32 %v1294, %v1540
        %v1679 = vsub.f32 %v1295, %v1542
        %v1680 = vsub.f32 %v1296, %v1544
        %v1681 = vsub.f32 %v1297, %v1546
        %v1682 = vsub.f32 %v1298, %v1548
        %v1683 = vsub.f32 %v1299, %v1550
        %v1684 = vsub.f32 %v1300, %v1552
        %v1685 = vsub.f32 %v1301, %v1554
        %v1686 = vsub.f32 %v1302, %v1556
        %v1687 = vsub.f32 %v1303, %v1558
        %v1688 = vsub.f32 %v1304, %v1560
        %v1689 = vmul.f32 %v1561, 1.442695
        %v1690 = vpow.pop %v1689
        %v1691 = vmul.f32 %v1562, 1.442695
        %v1692 = vpow.pop %v1691
        %v1693 = vmul.f32 %v1563, 1.442695
        %v1694 = vpow.pop %v1693
        %v1695 = vmul.f32 %v1564, 1.442695
        %v1696 = vpow.pop %v1695
        %v1697 = vmul.f32 %v1565, 1.442695
        %v1698 = vpow.pop %v1697
        %v1699 = vmul.f32 %v1566, 1.442695
        %v1700 = vpow.pop %v1699
        %v1701 = vmul.f32 %v1567, 1.442695
        %v1702 = vpow.pop %v1701
        %v1703 = vmul.f32 %v1568, 1.442695
        %v1704 = vpow.pop %v1703
        %v1705 = vmul.f32 %v1569, 1.442695
        %v1706 = vpow.pop %v1705
        %v1707 = vmul.f32 %v1570, 1.442695
        %v1708 = vpow.pop %v1707
        %v1709 = vmul.f32 %v1571, 1.442695
        %v1710 = vpow.pop %v1709
        %v1711 = vmul.f32 %v1572, 1.442695
        %v1712 = vpow.pop %v1711
        %v1713 = vmul.f32 %v1573, 1.442695
        %v1714 = vpow.pop %v1713
        %v1715 = vmul.f32 %v1574, 1.442695
        %v1716 = vpow.pop %v1715
        %v1717 = vmul.f32 %v1575, 1.442695
        %v1718 = vpow.pop %v1717
        %v1719 = vmul.f32 %v1576, 1.442695
        %v1720 = vpow.pop %v1719
        %v1721 = vmul.f32 %v1577, 1.442695
        %v1722 = vpow.pop %v1721
        %v1723 = vmul.f32 %v1578, 1.442695
        %v1724 = vpow.pop %v1723
        %v1725 = vmul.f32 %v1579, 1.442695
        %v1726 = vpow.pop %v1725
        %v1727 = vmul.f32 %v1580, 1.442695
        %v1728 = vpow.pop %v1727
        %v1729 = vmul.f32 %v1581, 1.442695
        %v1730 = vpow.pop %v1729
        %v1731 = vmul.f32 %v1582, 1.442695
        %v1732 = vpow.pop %v1731
        %v1733 = vmul.f32 %v1583, 1.442695
        %v1734 = vpow.pop %v1733
        %v1735 = vmul.f32 %v1584, 1.442695
        %v1736 = vpow.pop %v1735
        %v1737 = vmul.f32 %v1585, 1.442695
        %v1738 = vpow.pop %v1737
        %v1739 = vmul.f32 %v1586, 1.442695
        %v1740 = vpow.pop %v1739
        %v1741 = vmul.f32 %v1587, 1.442695
        %v1742 = vpow.pop %v1741
        %v1743 = vmul.f32 %v1588, 1.442695
        %v1744 = vpow.pop %v1743
        %v1745 = vmul.f32 %v1589, 1.442695
        %v1746 = vpow.pop %v1745
        %v1747 = vmul.f32 %v1590, 1.442695
        %v1748 = vpow.pop %v1747
        %v1749 = vmul.f32 %v1591, 1.442695
        %v1750 = vpow.pop %v1749
        %v1751 = vmul.f32 %v1592, 1.442695
        %v1752 = vpow.pop %v1751
        %v1753 = vmul.f32 %v1593, 1.442695
        %v1754 = vpow.pop %v1753
        %v1755 = vmul.f32 %v1594, 1.442695
        %v1756 = vpow.pop %v1755
        %v1757 = vmul.f32 %v1595, 1.442695
        %v1758 = vpow.pop %v1757
        %v1759 = vmul.f32 %v1596, 1.442695
        %v1760 = vpow.pop %v1759
        %v1761 = vmul.f32 %v1597, 1.442695
        %v1762 = vpow.pop %v1761
        %v1763 = vmul.f32 %v1598, 1.442695
        %v1764 = vpow.pop %v1763
        %v1765 = vmul.f32 %v1599, 1.442695
        %v1766 = vpow.pop %v1765
        %v1767 = vmul.f32 %v1600, 1.442695
        %v1768 = vpow.pop %v1767
        %v1769 = vmul.f32 %v1601, 1.442695
        %v1770 = vpow.pop %v1769
        %v1771 = vmul.f32 %v1602, 1.442695
        %v1772 = vpow.pop %v1771
        %v1773 = vmul.f32 %v1603, 1.442695
        %v1774 = vpow.pop %v1773
        %v1775 = vmul.f32 %v1604, 1.442695
        %v1776 = vpow.pop %v1775
        %v1777 = vmul.f32 %v1605, 1.442695
        %v1778 = vpow.pop %v1777
        %v1779 = vmul.f32 %v1606, 1.442695
        %v1780 = vpow.pop %v1779
        %v1781 = vmul.f32 %v1607, 1.442695
        %v1782 = vpow.pop %v1781
        %v1783 = vmul.f32 %v1608, 1.442695
        %v1784 = vpow.pop %v1783
        %v1785 = vmul.f32 %v1609, 1.442695
        %v1786 = vpow.pop %v1785
        %v1787 = vmul.f32 %v1610, 1.442695
        %v1788 = vpow.pop %v1787
        %v1789 = vmul.f32 %v1611, 1.442695
        %v1790 = vpow.pop %v1789
        %v1791 = vmul.f32 %v1612, 1.442695
        %v1792 = vpow.pop %v1791
        %v1793 = vmul.f32 %v1613, 1.442695
        %v1794 = vpow.pop %v1793
        %v1795 = vmul.f32 %v1614, 1.442695
        %v1796 = vpow.pop %v1795
        %v1797 = vmul.f32 %v1615, 1.442695
        %v1798 = vpow.pop %v1797
        %v1799 = vmul.f32 %v1616, 1.442695
        %v1800 = vpow.pop %v1799
        %v1801 = vmul.f32 %v1617, 1.442695
        %v1802 = vpow.pop %v1801
        %v1803 = vmul.f32 %v1618, 1.442695
        %v1804 = vpow.pop %v1803
        %v1805 = vmul.f32 %v1619, 1.442695
        %v1806 = vpow.pop %v1805
        %v1807 = vmul.f32 %v1620, 1.442695
        %v1808 = vpow.pop %v1807
        %v1809 = vmul.f32 %v1621, 1.442695
        %v1810 = vpow.pop %v1809
        %v1811 = vmul.f32 %v1622, 1.442695
        %v1812 = vpow.pop %v1811
        %v1813 = vmul.f32 %v1623, 1.442695
        %v1814 = vpow.pop %v1813
        %v1815 = vmul.f32 %v1624, 1.442695
        %v1816 = vpow.pop %v1815
        %v1817 = vmul.f32 %v1625, 1.442695
        %v1818 = vpow.pop %v1817
        %v1819 = vmul.f32 %v1626, 1.442695
        %v1820 = vpow.pop %v1819
        %v1821 = vmul.f32 %v1627, 1.442695
        %v1822 = vpow.pop %v1821
        %v1823 = vmul.f32 %v1628, 1.442695
        %v1824 = vpow.pop %v1823
        %v1825 = vmul.f32 %v1629, 1.442695
        %v1826 = vpow.pop %v1825
        %v1827 = vmul.f32 %v1630, 1.442695
        %v1828 = vpow.pop %v1827
        %v1829 = vmul.f32 %v1631, 1.442695
        %v1830 = vpow.pop %v1829
        %v1831 = vmul.f32 %v1632, 1.442695
        %v1832 = vpow.pop %v1831
        %v1833 = vmul.f32 %v1633, 1.442695
        %v1834 = vpow.pop %v1833
        %v1835 = vmul.f32 %v1634, 1.442695
        %v1836 = vpow.pop %v1835
        %v1837 = vmul.f32 %v1635, 1.442695
        %v1838 = vpow.pop %v1837
        %v1839 = vmul.f32 %v1636, 1.442695
        %v1840 = vpow.pop %v1839
        %v1841 = vmul.f32 %v1637, 1.442695
        %v1842 = vpow.pop %v1841
        %v1843 = vmul.f32 %v1638, 1.442695
        %v1844 = vpow.pop %v1843
        %v1845 = vmul.f32 %v1639, 1.442695
        %v1846 = vpow.pop %v1845
        %v1847 = vmul.f32 %v1640, 1.442695
        %v1848 = vpow.pop %v1847
        %v1849 = vmul.f32 %v1641, 1.442695
        %v1850 = vpow.pop %v1849
        %v1851 = vmul.f32 %v1642, 1.442695
        %v1852 = vpow.pop %v1851
        %v1853 = vmul.f32 %v1643, 1.442695
        %v1854 = vpow.pop %v1853
        %v1855 = vmul.f32 %v1644, 1.442695
        %v1856 = vpow.pop %v1855
        %v1857 = vmul.f32 %v1645, 1.442695
        %v1858 = vpow.pop %v1857
        %v1859 = vmul.f32 %v1646, 1.442695
        %v1860 = vpow.pop %v1859
        %v1861 = vmul.f32 %v1647, 1.442695
        %v1862 = vpow.pop %v1861
        %v1863 = vmul.f32 %v1648, 1.442695
        %v1864 = vpow.pop %v1863
        %v1865 = vmul.f32 %v1649, 1.442695
        %v1866 = vpow.pop %v1865
        %v1867 = vmul.f32 %v1650, 1.442695
        %v1868 = vpow.pop %v1867
        %v1869 = vmul.f32 %v1651, 1.442695
        %v1870 = vpow.pop %v1869
        %v1871 = vmul.f32 %v1652, 1.442695
        %v1872 = vpow.pop %v1871
        %v1873 = vmul.f32 %v1653, 1.442695
        %v1874 = vpow.pop %v1873
        %v1875 = vmul.f32 %v1654, 1.442695
        %v1876 = vpow.pop %v1875
        %v1877 = vmul.f32 %v1655, 1.442695
        %v1878 = vpow.pop %v1877
        %v1879 = vmul.f32 %v1656, 1.442695
        %v1880 = vpow.pop %v1879
        %v1881 = vmul.f32 %v1657, 1.442695
        %v1882 = vpow.pop %v1881
        %v1883 = vmul.f32 %v1658, 1.442695
        %v1884 = vpow.pop %v1883
        %v1885 = vmul.f32 %v1659, 1.442695
        %v1886 = vpow.pop %v1885
        %v1887 = vmul.f32 %v1660, 1.442695
        %v1888 = vpow.pop %v1887
        %v1889 = vmul.f32 %v1661, 1.442695
        %v1890 = vpow.pop %v1889
        %v1891 = vmul.f32 %v1662, 1.442695
        %v1892 = vpow.pop %v1891
        %v1893 = vmul.f32 %v1663, 1.442695
        %v1894 = vpow.pop %v1893
        %v1895 = vmul.f32 %v1664, 1.442695
        %v1896 = vpow.pop %v1895
        %v1897 = vmul.f32 %v1665, 1.442695
        %v1898 = vpow.pop %v1897
        %v1899 = vmul.f32 %v1666, 1.442695
        %v1900 = vpow.pop %v1899
        %v1901 = vmul.f32 %v1667, 1.442695
        %v1902 = vpow.pop %v1901
        %v1903 = vmul.f32 %v1668, 1.442695
        %v1904 = vpow.pop %v1903
        %v1905 = vmul.f32 %v1669, 1.442695
        %v1906 = vpow.pop %v1905
        %v1907 = vmul.f32 %v1670, 1.442695
        %v1908 = vpow.pop %v1907
        %v1909 = vmul.f32 %v1671, 1.442695
        %v1910 = vpow.pop %v1909
        %v1911 = vmul.f32 %v1672, 1.442695
        %v1912 = vpow.pop %v1911
        %v1913 = vmul.f32 %v1673, 1.442695
        %v1914 = vpow.pop %v1913
        %v1915 = vmul.f32 %v1674, 1.442695
        %v1916 = vpow.pop %v1915
        %v1917 = vmul.f32 %v1675, 1.442695
        %v1918 = vpow.pop %v1917
        %v1919 = vmul.f32 %v1676, 1.442695
        %v1920 = vpow.pop %v1919
        %v1921 = vmul.f32 %v1677, 1.442695
        %v1922 = vpow.pop %v1921
        %v1923 = vmul.f32 %v1678, 1.442695
        %v1924 = vpow.pop %v1923
        %v1925 = vmul.f32 %v1679, 1.442695
        %v1926 = vpow.pop %v1925
        %v1927 = vmul.f32 %v1680, 1.442695
        %v1928 = vpow.pop %v1927
        %v1929 = vmul.f32 %v1681, 1.442695
        %v1930 = vpow.pop %v1929
        %v1931 = vmul.f32 %v1682, 1.442695
        %v1932 = vpow.pop %v1931
        %v1933 = vmul.f32 %v1683, 1.442695
        %v1934 = vpow.pop %v1933
        %v1935 = vmul.f32 %v1684, 1.442695
        %v1936 = vpow.pop %v1935
        %v1937 = vmul.f32 %v1685, 1.442695
        %v1938 = vpow.pop %v1937
        %v1939 = vmul.f32 %v1686, 1.442695
        %v1940 = vpow.pop %v1939
        %v1941 = vmul.f32 %v1687, 1.442695
        %v1942 = vpow.pop %v1941
        %v1943 = vmul.f32 %v1688, 1.442695
        %v1944 = vpow.pop %v1943
        %1945 = vadd.xlane.f32.xlu0 %v1690
        %v1946 = vpop.xlane.xlu0 %1945
        %1947 = vadd.xlane.f32.xlu0 %v1692
        %v1948 = vpop.xlane.xlu0 %1947
        %1949 = vadd.xlane.f32.xlu0 %v1694
        %v1950 = vpop.xlane.xlu0 %1949
        %1951 = vadd.xlane.f32.xlu0 %v1696
        %v1952 = vpop.xlane.xlu0 %1951
        %1953 = vadd.xlane.f32.xlu0 %v1698
        %v1954 = vpop.xlane.xlu0 %1953
        %1955 = vadd.xlane.f32.xlu0 %v1700
        %v1956 = vpop.xlane.xlu0 %1955
        %1957 = vadd.xlane.f32.xlu0 %v1702
        %v1958 = vpop.xlane.xlu0 %1957
        %1959 = vadd.xlane.f32.xlu0 %v1704
        %v1960 = vpop.xlane.xlu0 %1959
        %1961 = vadd.xlane.f32.xlu0 %v1706
        %v1962 = vpop.xlane.xlu0 %1961
        %1963 = vadd.xlane.f32.xlu0 %v1708
        %v1964 = vpop.xlane.xlu0 %1963
        %1965 = vadd.xlane.f32.xlu0 %v1710
        %v1966 = vpop.xlane.xlu0 %1965
        %1967 = vadd.xlane.f32.xlu0 %v1712
        %v1968 = vpop.xlane.xlu0 %1967
        %1969 = vadd.xlane.f32.xlu0 %v1714
        %v1970 = vpop.xlane.xlu0 %1969
        %1971 = vadd.xlane.f32.xlu0 %v1716
        %v1972 = vpop.xlane.xlu0 %1971
        %1973 = vadd.xlane.f32.xlu0 %v1718
        %v1974 = vpop.xlane.xlu0 %1973
        %1975 = vadd.xlane.f32.xlu0 %v1720
        %v1976 = vpop.xlane.xlu0 %1975
        %1977 = vadd.xlane.f32.xlu0 %v1722
        %v1978 = vpop.xlane.xlu0 %1977
        %1979 = vadd.xlane.f32.xlu0 %v1724
        %v1980 = vpop.xlane.xlu0 %1979
        %1981 = vadd.xlane.f32.xlu0 %v1726
        %v1982 = vpop.xlane.xlu0 %1981
        %1983 = vadd.xlane.f32.xlu0 %v1728
        %v1984 = vpop.xlane.xlu0 %1983
        %1985 = vadd.xlane.f32.xlu0 %v1730
        %v1986 = vpop.xlane.xlu0 %1985
        %1987 = vadd.xlane.f32.xlu0 %v1732
        %v1988 = vpop.xlane.xlu0 %1987
        %1989 = vadd.xlane.f32.xlu0 %v1734
        %v1990 = vpop.xlane.xlu0 %1989
        %1991 = vadd.xlane.f32.xlu0 %v1736
        %v1992 = vpop.xlane.xlu0 %1991
        %1993 = vadd.xlane.f32.xlu0 %v1738
        %v1994 = vpop.xlane.xlu0 %1993
        %1995 = vadd.xlane.f32.xlu0 %v1740
        %v1996 = vpop.xlane.xlu0 %1995
        %1997 = vadd.xlane.f32.xlu0 %v1742
        %v1998 = vpop.xlane.xlu0 %1997
        %1999 = vadd.xlane.f32.xlu0 %v1744
        %v2000 = vpop.xlane.xlu0 %1999
        %2001 = vadd.xlane.f32.xlu0 %v1746
        %v2002 = vpop.xlane.xlu0 %2001
        %2003 = vadd.xlane.f32.xlu0 %v1748
        %v2004 = vpop.xlane.xlu0 %2003
        %2005 = vadd.xlane.f32.xlu0 %v1750
        %v2006 = vpop.xlane.xlu0 %2005
        %2007 = vadd.xlane.f32.xlu0 %v1752
        %v2008 = vpop.xlane.xlu0 %2007
        %2009 = vadd.xlane.f32.xlu0 %v1754
        %v2010 = vpop.xlane.xlu0 %2009
        %2011 = vadd.xlane.f32.xlu0 %v1756
        %v2012 = vpop.xlane.xlu0 %2011
        %2013 = vadd.xlane.f32.xlu0 %v1758
        %v2014 = vpop.xlane.xlu0 %2013
        %2015 = vadd.xlane.f32.xlu0 %v1760
        %v2016 = vpop.xlane.xlu0 %2015
        %2017 = vadd.xlane.f32.xlu0 %v1762
        %v2018 = vpop.xlane.xlu0 %2017
        %2019 = vadd.xlane.f32.xlu0 %v1764
        %v2020 = vpop.xlane.xlu0 %2019
        %2021 = vadd.xlane.f32.xlu0 %v1766
        %v2022 = vpop.xlane.xlu0 %2021
        %2023 = vadd.xlane.f32.xlu0 %v1768
        %v2024 = vpop.xlane.xlu0 %2023
        %2025 = vadd.xlane.f32.xlu0 %v1770
        %v2026 = vpop.xlane.xlu0 %2025
        %2027 = vadd.xlane.f32.xlu0 %v1772
        %v2028 = vpop.xlane.xlu0 %2027
        %2029 = vadd.xlane.f32.xlu0 %v1774
        %v2030 = vpop.xlane.xlu0 %2029
        %2031 = vadd.xlane.f32.xlu0 %v1776
        %v2032 = vpop.xlane.xlu0 %2031
        %2033 = vadd.xlane.f32.xlu0 %v1778
        %v2034 = vpop.xlane.xlu0 %2033
        %2035 = vadd.xlane.f32.xlu0 %v1780
        %v2036 = vpop.xlane.xlu0 %2035
        %2037 = vadd.xlane.f32.xlu0 %v1782
        %v2038 = vpop.xlane.xlu0 %2037
        %2039 = vadd.xlane.f32.xlu0 %v1784
        %v2040 = vpop.xlane.xlu0 %2039
        %2041 = vadd.xlane.f32.xlu0 %v1786
        %v2042 = vpop.xlane.xlu0 %2041
        %2043 = vadd.xlane.f32.xlu0 %v1788
        %v2044 = vpop.xlane.xlu0 %2043
        %2045 = vadd.xlane.f32.xlu0 %v1790
        %v2046 = vpop.xlane.xlu0 %2045
        %2047 = vadd.xlane.f32.xlu0 %v1792
        %v2048 = vpop.xlane.xlu0 %2047
        %2049 = vadd.xlane.f32.xlu0 %v1794
        %v2050 = vpop.xlane.xlu0 %2049
        %2051 = vadd.xlane.f32.xlu0 %v1796
        %v2052 = vpop.xlane.xlu0 %2051
        %2053 = vadd.xlane.f32.xlu0 %v1798
        %v2054 = vpop.xlane.xlu0 %2053
        %2055 = vadd.xlane.f32.xlu0 %v1800
        %v2056 = vpop.xlane.xlu0 %2055
        %2057 = vadd.xlane.f32.xlu0 %v1802
        %v2058 = vpop.xlane.xlu0 %2057
        %2059 = vadd.xlane.f32.xlu0 %v1804
        %v2060 = vpop.xlane.xlu0 %2059
        %2061 = vadd.xlane.f32.xlu0 %v1806
        %v2062 = vpop.xlane.xlu0 %2061
        %2063 = vadd.xlane.f32.xlu0 %v1808
        %v2064 = vpop.xlane.xlu0 %2063
        %2065 = vadd.xlane.f32.xlu0 %v1810
        %v2066 = vpop.xlane.xlu0 %2065
        %2067 = vadd.xlane.f32.xlu0 %v1812
        %v2068 = vpop.xlane.xlu0 %2067
        %2069 = vadd.xlane.f32.xlu0 %v1814
        %v2070 = vpop.xlane.xlu0 %2069
        %2071 = vadd.xlane.f32.xlu0 %v1816
        %v2072 = vpop.xlane.xlu0 %2071
        %2073 = vadd.xlane.f32.xlu0 %v1818
        %v2074 = vpop.xlane.xlu0 %2073
        %2075 = vadd.xlane.f32.xlu0 %v1820
        %v2076 = vpop.xlane.xlu0 %2075
        %2077 = vadd.xlane.f32.xlu0 %v1822
        %v2078 = vpop.xlane.xlu0 %2077
        %2079 = vadd.xlane.f32.xlu0 %v1824
        %v2080 = vpop.xlane.xlu0 %2079
        %2081 = vadd.xlane.f32.xlu0 %v1826
        %v2082 = vpop.xlane.xlu0 %2081
        %2083 = vadd.xlane.f32.xlu0 %v1828
        %v2084 = vpop.xlane.xlu0 %2083
        %2085 = vadd.xlane.f32.xlu0 %v1830
        %v2086 = vpop.xlane.xlu0 %2085
        %2087 = vadd.xlane.f32.xlu0 %v1832
        %v2088 = vpop.xlane.xlu0 %2087
        %2089 = vadd.xlane.f32.xlu0 %v1834
        %v2090 = vpop.xlane.xlu0 %2089
        %2091 = vadd.xlane.f32.xlu0 %v1836
        %v2092 = vpop.xlane.xlu0 %2091
        %2093 = vadd.xlane.f32.xlu0 %v1838
        %v2094 = vpop.xlane.xlu0 %2093
        %2095 = vadd.xlane.f32.xlu0 %v1840
        %v2096 = vpop.xlane.xlu0 %2095
        %2097 = vadd.xlane.f32.xlu0 %v1842
        %v2098 = vpop.xlane.xlu0 %2097
        %2099 = vadd.xlane.f32.xlu0 %v1844
        %v2100 = vpop.xlane.xlu0 %2099
        %2101 = vadd.xlane.f32.xlu0 %v1846
        %v2102 = vpop.xlane.xlu0 %2101
        %2103 = vadd.xlane.f32.xlu0 %v1848
        %v2104 = vpop.xlane.xlu0 %2103
        %2105 = vadd.xlane.f32.xlu0 %v1850
        %v2106 = vpop.xlane.xlu0 %2105
        %2107 = vadd.xlane.f32.xlu0 %v1852
        %v2108 = vpop.xlane.xlu0 %2107
        %2109 = vadd.xlane.f32.xlu0 %v1854
        %v2110 = vpop.xlane.xlu0 %2109
        %2111 = vadd.xlane.f32.xlu0 %v1856
        %v2112 = vpop.xlane.xlu0 %2111
        %2113 = vadd.xlane.f32.xlu0 %v1858
        %v2114 = vpop.xlane.xlu0 %2113
        %2115 = vadd.xlane.f32.xlu0 %v1860
        %v2116 = vpop.xlane.xlu0 %2115
        %2117 = vadd.xlane.f32.xlu0 %v1862
        %v2118 = vpop.xlane.xlu0 %2117
        %2119 = vadd.xlane.f32.xlu0 %v1864
        %v2120 = vpop.xlane.xlu0 %2119
        %2121 = vadd.xlane.f32.xlu0 %v1866
        %v2122 = vpop.xlane.xlu0 %2121
        %2123 = vadd.xlane.f32.xlu0 %v1868
        %v2124 = vpop.xlane.xlu0 %2123
        %2125 = vadd.xlane.f32.xlu0 %v1870
        %v2126 = vpop.xlane.xlu0 %2125
        %2127 = vadd.xlane.f32.xlu0 %v1872
        %v2128 = vpop.xlane.xlu0 %2127
        %2129 = vadd.xlane.f32.xlu0 %v1874
        %v2130 = vpop.xlane.xlu0 %2129
        %2131 = vadd.xlane.f32.xlu0 %v1876
        %v2132 = vpop.xlane.xlu0 %2131
        %2133 = vadd.xlane.f32.xlu0 %v1878
        %v2134 = vpop.xlane.xlu0 %2133
        %2135 = vadd.xlane.f32.xlu0 %v1880
        %v2136 = vpop.xlane.xlu0 %2135
        %2137 = vadd.xlane.f32.xlu0 %v1882
        %v2138 = vpop.xlane.xlu0 %2137
        %2139 = vadd.xlane.f32.xlu0 %v1884
        %v2140 = vpop.xlane.xlu0 %2139
        %2141 = vadd.xlane.f32.xlu0 %v1886
        %v2142 = vpop.xlane.xlu0 %2141
        %2143 = vadd.xlane.f32.xlu0 %v1888
        %v2144 = vpop.xlane.xlu0 %2143
        %2145 = vadd.xlane.f32.xlu0 %v1890
        %v2146 = vpop.xlane.xlu0 %2145
        %2147 = vadd.xlane.f32.xlu0 %v1892
        %v2148 = vpop.xlane.xlu0 %2147
        %2149 = vadd.xlane.f32.xlu0 %v1894
        %v2150 = vpop.xlane.xlu0 %2149
        %2151 = vadd.xlane.f32.xlu0 %v1896
        %v2152 = vpop.xlane.xlu0 %2151
        %2153 = vadd.xlane.f32.xlu0 %v1898
        %v2154 = vpop.xlane.xlu0 %2153
        %2155 = vadd.xlane.f32.xlu0 %v1900
        %v2156 = vpop.xlane.xlu0 %2155
        %2157 = vadd.xlane.f32.xlu0 %v1902
        %v2158 = vpop.xlane.xlu0 %2157
        %2159 = vadd.xlane.f32.xlu0 %v1904
        %v2160 = vpop.xlane.xlu0 %2159
        %2161 = vadd.xlane.f32.xlu0 %v1906
        %v2162 = vpop.xlane.xlu0 %2161
        %2163 = vadd.xlane.f32.xlu0 %v1908
        %v2164 = vpop.xlane.xlu0 %2163
        %2165 = vadd.xlane.f32.xlu0 %v1910
        %v2166 = vpop.xlane.xlu0 %2165
        %2167 = vadd.xlane.f32.xlu0 %v1912
        %v2168 = vpop.xlane.xlu0 %2167
        %2169 = vadd.xlane.f32.xlu0 %v1914
        %v2170 = vpop.xlane.xlu0 %2169
        %2171 = vadd.xlane.f32.xlu0 %v1916
        %v2172 = vpop.xlane.xlu0 %2171
        %2173 = vadd.xlane.f32.xlu0 %v1918
        %v2174 = vpop.xlane.xlu0 %2173
        %2175 = vadd.xlane.f32.xlu0 %v1920
        %v2176 = vpop.xlane.xlu0 %2175
        %2177 = vadd.xlane.f32.xlu0 %v1922
        %v2178 = vpop.xlane.xlu0 %2177
        %2179 = vadd.xlane.f32.xlu0 %v1924
        %v2180 = vpop.xlane.xlu0 %2179
        %2181 = vadd.xlane.f32.xlu0 %v1926
        %v2182 = vpop.xlane.xlu0 %2181
        %2183 = vadd.xlane.f32.xlu0 %v1928
        %v2184 = vpop.xlane.xlu0 %2183
        %2185 = vadd.xlane.f32.xlu0 %v1930
        %v2186 = vpop.xlane.xlu0 %2185
        %2187 = vadd.xlane.f32.xlu0 %v1932
        %v2188 = vpop.xlane.xlu0 %2187
        %2189 = vadd.xlane.f32.xlu0 %v1934
        %v2190 = vpop.xlane.xlu0 %2189
        %2191 = vadd.xlane.f32.xlu0 %v1936
        %v2192 = vpop.xlane.xlu0 %2191
        %2193 = vadd.xlane.f32.xlu0 %v1938
        %v2194 = vpop.xlane.xlu0 %2193
        %2195 = vadd.xlane.f32.xlu0 %v1940
        %v2196 = vpop.xlane.xlu0 %2195
        %2197 = vadd.xlane.f32.xlu0 %v1942
        %v2198 = vpop.xlane.xlu0 %2197
        %2199 = vadd.xlane.f32.xlu0 %v1944
        %v2200 = vpop.xlane.xlu0 %2199
        %v2201 = vrcp.pop %v1946
        %v2202 = vmul.f32 %v1690, %v2201
        %v2203 = vrcp.pop %v1948
        %v2204 = vmul.f32 %v1692, %v2203
        %v2205 = vrcp.pop %v1950
        %v2206 = vmul.f32 %v1694, %v2205
        %v2207 = vrcp.pop %v1952
        %v2208 = vmul.f32 %v1696, %v2207
        %v2209 = vrcp.pop %v1954
        %v2210 = vmul.f32 %v1698, %v2209
        %v2211 = vrcp.pop %v1956
        %v2212 = vmul.f32 %v1700, %v2211
        %v2213 = vrcp.pop %v1958
        %v2214 = vmul.f32 %v1702, %v2213
        %v2215 = vrcp.pop %v1960
        %v2216 = vmul.f32 %v1704, %v2215
        %v2217 = vrcp.pop %v1962
        %v2218 = vmul.f32 %v1706, %v2217
        %v2219 = vrcp.pop %v1964
        %v2220 = vmul.f32 %v1708, %v2219
        %v2221 = vrcp.pop %v1966
        %v2222 = vmul.f32 %v1710, %v2221
        %v2223 = vrcp.pop %v1968
        %v2224 = vmul.f32 %v1712, %v2223
        %v2225 = vrcp.pop %v1970
        %v2226 = vmul.f32 %v1714, %v2225
        %v2227 = vrcp.pop %v1972
        %v2228 = vmul.f32 %v1716, %v2227
        %v2229 = vrcp.pop %v1974
        %v2230 = vmul.f32 %v1718, %v2229
        %v2231 = vrcp.pop %v1976
        %v2232 = vmul.f32 %v1720, %v2231
        %v2233 = vrcp.pop %v1978
        %v2234 = vmul.f32 %v1722, %v2233
        %v2235 = vrcp.pop %v1980
        %v2236 = vmul.f32 %v1724, %v2235
        %v2237 = vrcp.pop %v1982
        %v2238 = vmul.f32 %v1726, %v2237
        %v2239 = vrcp.pop %v1984
        %v2240 = vmul.f32 %v1728, %v2239
        %v2241 = vrcp.pop %v1986
        %v2242 = vmul.f32 %v1730, %v2241
        %v2243 = vrcp.pop %v1988
        %v2244 = vmul.f32 %v1732, %v2243
        %v2245 = vrcp.pop %v1990
        %v2246 = vmul.f32 %v1734, %v2245
        %v2247 = vrcp.pop %v1992
        %v2248 = vmul.f32 %v1736, %v2247
        %v2249 = vrcp.pop %v1994
        %v2250 = vmul.f32 %v1738, %v2249
        %v2251 = vrcp.pop %v1996
        %v2252 = vmul.f32 %v1740, %v2251
        %v2253 = vrcp.pop %v1998
        %v2254 = vmul.f32 %v1742, %v2253
        %v2255 = vrcp.pop %v2000
        %v2256 = vmul.f32 %v1744, %v2255
        %v2257 = vrcp.pop %v2002
        %v2258 = vmul.f32 %v1746, %v2257
        %v2259 = vrcp.pop %v2004
        %v2260 = vmul.f32 %v1748, %v2259
        %v2261 = vrcp.pop %v2006
        %v2262 = vmul.f32 %v1750, %v2261
        %v2263 = vrcp.pop %v2008
        %v2264 = vmul.f32 %v1752, %v2263
        %v2265 = vrcp.pop %v2010
        %v2266 = vmul.f32 %v1754, %v2265
        %v2267 = vrcp.pop %v2012
        %v2268 = vmul.f32 %v1756, %v2267
        %v2269 = vrcp.pop %v2014
        %v2270 = vmul.f32 %v1758, %v2269
        %v2271 = vrcp.pop %v2016
        %v2272 = vmul.f32 %v1760, %v2271
        %v2273 = vrcp.pop %v2018
        %v2274 = vmul.f32 %v1762, %v2273
        %v2275 = vrcp.pop %v2020
        %v2276 = vmul.f32 %v1764, %v2275
        %v2277 = vrcp.pop %v2022
        %v2278 = vmul.f32 %v1766, %v2277
        %v2279 = vrcp.pop %v2024
        %v2280 = vmul.f32 %v1768, %v2279
        %v2281 = vrcp.pop %v2026
        %v2282 = vmul.f32 %v1770, %v2281
        %v2283 = vrcp.pop %v2028
        %v2284 = vmul.f32 %v1772, %v2283
        %v2285 = vrcp.pop %v2030
        %v2286 = vmul.f32 %v1774, %v2285
        %v2287 = vrcp.pop %v2032
        %v2288 = vmul.f32 %v1776, %v2287
        %v2289 = vrcp.pop %v2034
        %v2290 = vmul.f32 %v1778, %v2289
        %v2291 = vrcp.pop %v2036
        %v2292 = vmul.f32 %v1780, %v2291
        %v2293 = vrcp.pop %v2038
        %v2294 = vmul.f32 %v1782, %v2293
        %v2295 = vrcp.pop %v2040
        %v2296 = vmul.f32 %v1784, %v2295
        %v2297 = vrcp.pop %v2042
        %v2298 = vmul.f32 %v1786, %v2297
        %v2299 = vrcp.pop %v2044
        %v2300 = vmul.f32 %v1788, %v2299
        %v2301 = vrcp.pop %v2046
        %v2302 = vmul.f32 %v1790, %v2301
        %v2303 = vrcp.pop %v2048
        %v2304 = vmul.f32 %v1792, %v2303
        %v2305 = vrcp.pop %v2050
        %v2306 = vmul.f32 %v1794, %v2305
        %v2307 = vrcp.pop %v2052
        %v2308 = vmul.f32 %v1796, %v2307
        %v2309 = vrcp.pop %v2054
        %v2310 = vmul.f32 %v1798, %v2309
        %v2311 = vrcp.pop %v2056
        %v2312 = vmul.f32 %v1800, %v2311
        %v2313 = vrcp.pop %v2058
        %v2314 = vmul.f32 %v1802, %v2313
        %v2315 = vrcp.pop %v2060
        %v2316 = vmul.f32 %v1804, %v2315
        %v2317 = vrcp.pop %v2062
        %v2318 = vmul.f32 %v1806, %v2317
        %v2319 = vrcp.pop %v2064
        %v2320 = vmul.f32 %v1808, %v2319
        %v2321 = vrcp.pop %v2066
        %v2322 = vmul.f32 %v1810, %v2321
        %v2323 = vrcp.pop %v2068
        %v2324 = vmul.f32 %v1812, %v2323
        %v2325 = vrcp.pop %v2070
        %v2326 = vmul.f32 %v1814, %v2325
        %v2327 = vrcp.pop %v2072
        %v2328 = vmul.f32 %v1816, %v2327
        %v2329 = vrcp.pop %v2074
        %v2330 = vmul.f32 %v1818, %v2329
        %v2331 = vrcp.pop %v2076
        %v2332 = vmul.f32 %v1820, %v2331
        %v2333 = vrcp.pop %v2078
        %v2334 = vmul.f32 %v1822, %v2333
        %v2335 = vrcp.pop %v2080
        %v2336 = vmul.f32 %v1824, %v2335
        %v2337 = vrcp.pop %v2082
        %v2338 = vmul.f32 %v1826, %v2337
        %v2339 = vrcp.pop %v2084
        %v2340 = vmul.f32 %v1828, %v2339
        %v2341 = vrcp.pop %v2086
        %v2342 = vmul.f32 %v1830, %v2341
        %v2343 = vrcp.pop %v2088
        %v2344 = vmul.f32 %v1832, %v2343
        %v2345 = vrcp.pop %v2090
        %v2346 = vmul.f32 %v1834, %v2345
        %v2347 = vrcp.pop %v2092
        %v2348 = vmul.f32 %v1836, %v2347
        %v2349 = vrcp.pop %v2094
        %v2350 = vmul.f32 %v1838, %v2349
        %v2351 = vrcp.pop %v2096
        %v2352 = vmul.f32 %v1840, %v2351
        %v2353 = vrcp.pop %v2098
        %v2354 = vmul.f32 %v1842, %v2353
        %v2355 = vrcp.pop %v2100
        %v2356 = vmul.f32 %v1844, %v2355
        %v2357 = vrcp.pop %v2102
        %v2358 = vmul.f32 %v1846, %v2357
        %v2359 = vrcp.pop %v2104
        %v2360 = vmul.f32 %v1848, %v2359
        %v2361 = vrcp.pop %v2106
        %v2362 = vmul.f32 %v1850, %v2361
        %v2363 = vrcp.pop %v2108
        %v2364 = vmul.f32 %v1852, %v2363
        %v2365 = vrcp.pop %v2110
        %v2366 = vmul.f32 %v1854, %v2365
        %v2367 = vrcp.pop %v2112
        %v2368 = vmul.f32 %v1856, %v2367
        %v2369 = vrcp.pop %v2114
        %v2370 = vmul.f32 %v1858, %v2369
        %v2371 = vrcp.pop %v2116
        %v2372 = vmul.f32 %v1860, %v2371
        %v2373 = vrcp.pop %v2118
        %v2374 = vmul.f32 %v1862, %v2373
        %v2375 = vrcp.pop %v2120
        %v2376 = vmul.f32 %v1864, %v2375
        %v2377 = vrcp.pop %v2122
        %v2378 = vmul.f32 %v1866, %v2377
        %v2379 = vrcp.pop %v2124
        %v2380 = vmul.f32 %v1868, %v2379
        %v2381 = vrcp.pop %v2126
        %v2382 = vmul.f32 %v1870, %v2381
        %v2383 = vrcp.pop %v2128
        %v2384 = vmul.f32 %v1872, %v2383
        %v2385 = vrcp.pop %v2130
        %v2386 = vmul.f32 %v1874, %v2385
        %v2387 = vrcp.pop %v2132
        %v2388 = vmul.f32 %v1876, %v2387
        %v2389 = vrcp.pop %v2134
        %v2390 = vmul.f32 %v1878, %v2389
        %v2391 = vrcp.pop %v2136
        %v2392 = vmul.f32 %v1880, %v2391
        %v2393 = vrcp.pop %v2138
        %v2394 = vmul.f32 %v1882, %v2393
        %v2395 = vrcp.pop %v2140
        %v2396 = vmul.f32 %v1884, %v2395
        %v2397 = vrcp.pop %v2142
        %v2398 = vmul.f32 %v1886, %v2397
        %v2399 = vrcp.pop %v2144
        %v2400 = vmul.f32 %v1888, %v2399
        %v2401 = vrcp.pop %v2146
        %v2402 = vmul.f32 %v1890, %v2401
        %v2403 = vrcp.pop %v2148
        %v2404 = vmul.f32 %v1892, %v2403
        %v2405 = vrcp.pop %v2150
        %v2406 = vmul.f32 %v1894, %v2405
        %v2407 = vrcp.pop %v2152
        %v2408 = vmul.f32 %v1896, %v2407
        %v2409 = vrcp.pop %v2154
        %v2410 = vmul.f32 %v1898, %v2409
        %v2411 = vrcp.pop %v2156
        %v2412 = vmul.f32 %v1900, %v2411
        %v2413 = vrcp.pop %v2158
        %v2414 = vmul.f32 %v1902, %v2413
        %v2415 = vrcp.pop %v2160
        %v2416 = vmul.f32 %v1904, %v2415
        %v2417 = vrcp.pop %v2162
        %v2418 = vmul.f32 %v1906, %v2417
        %v2419 = vrcp.pop %v2164
        %v2420 = vmul.f32 %v1908, %v2419
        %v2421 = vrcp.pop %v2166
        %v2422 = vmul.f32 %v1910, %v2421
        %v2423 = vrcp.pop %v2168
        %v2424 = vmul.f32 %v1912, %v2423
        %v2425 = vrcp.pop %v2170
        %v2426 = vmul.f32 %v1914, %v2425
        %v2427 = vrcp.pop %v2172
        %v2428 = vmul.f32 %v1916, %v2427
        %v2429 = vrcp.pop %v2174
        %v2430 = vmul.f32 %v1918, %v2429
        %v2431 = vrcp.pop %v2176
        %v2432 = vmul.f32 %v1920, %v2431
        %v2433 = vrcp.pop %v2178
        %v2434 = vmul.f32 %v1922, %v2433
        %v2435 = vrcp.pop %v2180
        %v2436 = vmul.f32 %v1924, %v2435
        %v2437 = vrcp.pop %v2182
        %v2438 = vmul.f32 %v1926, %v2437
        %v2439 = vrcp.pop %v2184
        %v2440 = vmul.f32 %v1928, %v2439
        %v2441 = vrcp.pop %v2186
        %v2442 = vmul.f32 %v1930, %v2441
        %v2443 = vrcp.pop %v2188
        %v2444 = vmul.f32 %v1932, %v2443
        %v2445 = vrcp.pop %v2190
        %v2446 = vmul.f32 %v1934, %v2445
        %v2447 = vrcp.pop %v2192
        %v2448 = vmul.f32 %v1936, %v2447
        %v2449 = vrcp.pop %v2194
        %v2450 = vmul.f32 %v1938, %v2449
        %v2451 = vrcp.pop %v2196
        %v2452 = vmul.f32 %v1940, %v2451
        %v2453 = vrcp.pop %v2198
        %v2454 = vmul.f32 %v1942, %v2453
        %v2455 = vrcp.pop %v2200
        %v2456 = vmul.f32 %v1944, %v2455
        %v2458 = vcombine.high %v547, %v547
        %v2460 = vunpack.c.l.s4 1966171168
        %v2461 = vunpack.c.0.s8 %v2460
        %v2462 = vlaneseq
        %v2463 = vshrl.u32 %v2462, 7
        %v2464 = vsub.s32 %v2461, %v2463
        %v2465 = vrot.slane %v547, %v2464
        %v2467 = vunpack.c.l.s4 1966171168
        %v2468 = vunpack.c.0.s8 %v2467
        %v2469 = vlaneseq
        %v2470 = vshrl.u32 %v2469, 7
        %v2471 = vsub.s32 %v2468, %v2470
        %v2472 = vrot.slane %v2458, %v2471
        %v2473 = vcombine.high %v2465, %v2465
        %v2474 = vcombine.high %v2472, %v2472
        %v2476 = vunpack.c.l.s4 1966171168
        %v2477 = vunpack.c.0.s8 %v2476
        %v2478 = vlaneseq
        %v2479 = vshrl.u32 %v2478, 7
        %v2480 = vsub.s32 %v2477, %v2479
        %v2481 = vrot.slane %v2465, %v2480
        %v2483 = vunpack.c.l.s4 1966171168
        %v2484 = vunpack.c.0.s8 %v2483
        %v2485 = vlaneseq
        %v2486 = vshrl.u32 %v2485, 7
        %v2487 = vsub.s32 %v2484, %v2486
        %v2488 = vrot.slane %v2472, %v2487
        %v2490 = vunpack.c.l.s4 1966171168
        %v2491 = vunpack.c.0.s8 %v2490
        %v2492 = vlaneseq
        %v2493 = vshrl.u32 %v2492, 7
        %v2494 = vsub.s32 %v2491, %v2493
        %v2495 = vrot.slane %v2473, %v2494
        %v2497 = vunpack.c.l.s4 1966171168
        %v2498 = vunpack.c.0.s8 %v2497
        %v2499 = vlaneseq
        %v2500 = vshrl.u32 %v2499, 7
        %v2501 = vsub.s32 %v2498, %v2500
        %v2502 = vrot.slane %v2474, %v2501
        %v2503 = vcombine.high %v2481, %v2481
        %v2504 = vcombine.high %v2488, %v2488
        %v2505 = vcombine.high %v2495, %v2495
        %v2506 = vcombine.high %v2502, %v2502
        %v2507 = vlaneseq
        %v2508 = vshrl.u32 %v2507, 7
        %v2509 = vsub.s32 0, %v2508
        %v2510 = vrot.slane %v2481, %v2509
        %v2511 = vlaneseq
        %v2512 = vshrl.u32 %v2511, 7
        %v2513 = vsub.s32 0, %v2512
        %v2514 = vrot.slane %v2495, %v2513
        %v2515 = vlaneseq
        %v2516 = vshrl.u32 %v2515, 7
        %v2517 = vsub.s32 0, %v2516
        %v2518 = vrot.slane %v2503, %v2517
        %v2519 = vlaneseq
        %v2520 = vshrl.u32 %v2519, 7
        %v2521 = vsub.s32 0, %v2520
        %v2522 = vrot.slane %v2505, %v2521
        %v2523 = vlaneseq
        %v2524 = vshrl.u32 %v2523, 7
        %v2525 = vsub.s32 0, %v2524
        %v2526 = vrot.slane %v2488, %v2525
        %v2527 = vlaneseq
        %v2528 = vshrl.u32 %v2527, 7
        %v2529 = vsub.s32 0, %v2528
        %v2530 = vrot.slane %v2502, %v2529
        %v2531 = vlaneseq
        %v2532 = vshrl.u32 %v2531, 7
        %v2533 = vsub.s32 0, %v2532
        %v2534 = vrot.slane %v2504, %v2533
        %v2535 = vlaneseq
        %v2536 = vshrl.u32 %v2535, 7
        %v2537 = vsub.s32 0, %v2536
        %v2538 = vrot.slane %v2506, %v2537
        %v2547 = vmul.f32 %v2202, %v2510
        %v2548 = vmul.f32 %v2204, %v2510
        %v2549 = vmul.f32 %v2206, %v2510
        %v2550 = vmul.f32 %v2208, %v2510
        %v2551 = vmul.f32 %v2210, %v2510
        %v2552 = vmul.f32 %v2212, %v2510
        %v2553 = vmul.f32 %v2214, %v2510
        %v2554 = vmul.f32 %v2216, %v2510
        %v2555 = vmul.f32 %v2218, %v2510
        %v2556 = vmul.f32 %v2220, %v2510
        %v2557 = vmul.f32 %v2222, %v2510
        %v2558 = vmul.f32 %v2224, %v2510
        %v2559 = vmul.f32 %v2226, %v2510
        %v2560 = vmul.f32 %v2228, %v2510
        %v2561 = vmul.f32 %v2230, %v2510
        %v2562 = vmul.f32 %v2232, %v2510
        %v2563 = vmul.f32 %v2234, %v2514
        %v2564 = vmul.f32 %v2236, %v2514
        %v2565 = vmul.f32 %v2238, %v2514
        %v2566 = vmul.f32 %v2240, %v2514
        %v2567 = vmul.f32 %v2242, %v2514
        %v2568 = vmul.f32 %v2244, %v2514
        %v2569 = vmul.f32 %v2246, %v2514
        %v2570 = vmul.f32 %v2248, %v2514
        %v2571 = vmul.f32 %v2250, %v2514
        %v2572 = vmul.f32 %v2252, %v2514
        %v2573 = vmul.f32 %v2254, %v2514
        %v2574 = vmul.f32 %v2256, %v2514
        %v2575 = vmul.f32 %v2258, %v2514
        %v2576 = vmul.f32 %v2260, %v2514
        %v2577 = vmul.f32 %v2262, %v2514
        %v2578 = vmul.f32 %v2264, %v2514
        %v2579 = vmul.f32 %v2266, %v2518
        %v2580 = vmul.f32 %v2268, %v2518
        %v2581 = vmul.f32 %v2270, %v2518
        %v2582 = vmul.f32 %v2272, %v2518
        %v2583 = vmul.f32 %v2274, %v2518
        %v2584 = vmul.f32 %v2276, %v2518
        %v2585 = vmul.f32 %v2278, %v2518
        %v2586 = vmul.f32 %v2280, %v2518
        %v2587 = vmul.f32 %v2282, %v2518
        %v2588 = vmul.f32 %v2284, %v2518
        %v2589 = vmul.f32 %v2286, %v2518
        %v2590 = vmul.f32 %v2288, %v2518
        %v2591 = vmul.f32 %v2290, %v2518
        %v2592 = vmul.f32 %v2292, %v2518
        %v2593 = vmul.f32 %v2294, %v2518
        %v2594 = vmul.f32 %v2296, %v2518
        %v2595 = vmul.f32 %v2298, %v2522
        %v2596 = vmul.f32 %v2300, %v2522
        %v2597 = vmul.f32 %v2302, %v2522
        %v2598 = vmul.f32 %v2304, %v2522
        %v2599 = vmul.f32 %v2306, %v2522
        %v2600 = vmul.f32 %v2308, %v2522
        %v2601 = vmul.f32 %v2310, %v2522
        %v2602 = vmul.f32 %v2312, %v2522
        %v2603 = vmul.f32 %v2314, %v2522
        %v2604 = vmul.f32 %v2316, %v2522
        %v2605 = vmul.f32 %v2318, %v2522
        %v2606 = vmul.f32 %v2320, %v2522
        %v2607 = vmul.f32 %v2322, %v2522
        %v2608 = vmul.f32 %v2324, %v2522
        %v2609 = vmul.f32 %v2326, %v2522
        %v2610 = vmul.f32 %v2328, %v2522
        %v2611 = vmul.f32 %v2330, %v2526
        %v2612 = vmul.f32 %v2332, %v2526
        %v2613 = vmul.f32 %v2334, %v2526
        %v2614 = vmul.f32 %v2336, %v2526
        %v2615 = vmul.f32 %v2338, %v2526
        %v2616 = vmul.f32 %v2340, %v2526
        %v2617 = vmul.f32 %v2342, %v2526
        %v2618 = vmul.f32 %v2344, %v2526
        %v2619 = vmul.f32 %v2346, %v2526
        %v2620 = vmul.f32 %v2348, %v2526
        %v2621 = vmul.f32 %v2350, %v2526
        %v2622 = vmul.f32 %v2352, %v2526
        %v2623 = vmul.f32 %v2354, %v2526
        %v2624 = vmul.f32 %v2356, %v2526
        %v2625 = vmul.f32 %v2358, %v2526
        %v2626 = vmul.f32 %v2360, %v2526
        %v2627 = vmul.f32 %v2362, %v2530
        %v2628 = vmul.f32 %v2364, %v2530
        %v2629 = vmul.f32 %v2366, %v2530
        %v2630 = vmul.f32 %v2368, %v2530
        %v2631 = vmul.f32 %v2370, %v2530
        %v2632 = vmul.f32 %v2372, %v2530
        %v2633 = vmul.f32 %v2374, %v2530
        %v2634 = vmul.f32 %v2376, %v2530
        %v2635 = vmul.f32 %v2378, %v2530
        %v2636 = vmul.f32 %v2380, %v2530
        %v2637 = vmul.f32 %v2382, %v2530
        %v2638 = vmul.f32 %v2384, %v2530
        %v2639 = vmul.f32 %v2386, %v2530
        %v2640 = vmul.f32 %v2388, %v2530
        %v2641 = vmul.f32 %v2390, %v2530
        %v2642 = vmul.f32 %v2392, %v2530
        %v2643 = vmul.f32 %v2394, %v2534
        %v2644 = vmul.f32 %v2396, %v2534
        %v2645 = vmul.f32 %v2398, %v2534
        %v2646 = vmul.f32 %v2400, %v2534
        %v2647 = vmul.f32 %v2402, %v2534
        %v2648 = vmul.f32 %v2404, %v2534
        %v2649 = vmul.f32 %v2406, %v2534
        %v2650 = vmul.f32 %v2408, %v2534
        %v2651 = vmul.f32 %v2410, %v2534
        %v2652 = vmul.f32 %v2412, %v2534
        %v2653 = vmul.f32 %v2414, %v2534
        %v2654 = vmul.f32 %v2416, %v2534
        %v2655 = vmul.f32 %v2418, %v2534
        %v2656 = vmul.f32 %v2420, %v2534
        %v2657 = vmul.f32 %v2422, %v2534
        %v2658 = vmul.f32 %v2424, %v2534
        %v2659 = vmul.f32 %v2426, %v2538
        %v2660 = vmul.f32 %v2428, %v2538
        %v2661 = vmul.f32 %v2430, %v2538
        %v2662 = vmul.f32 %v2432, %v2538
        %v2663 = vmul.f32 %v2434, %v2538
        %v2664 = vmul.f32 %v2436, %v2538
        %v2665 = vmul.f32 %v2438, %v2538
        %v2666 = vmul.f32 %v2440, %v2538
        %v2667 = vmul.f32 %v2442, %v2538
        %v2668 = vmul.f32 %v2444, %v2538
        %v2669 = vmul.f32 %v2446, %v2538
        %v2670 = vmul.f32 %v2448, %v2538
        %v2671 = vmul.f32 %v2450, %v2538
        %v2672 = vmul.f32 %v2452, %v2538
        %v2673 = vmul.f32 %v2454, %v2538
        %v2674 = vmul.f32 %v2456, %v2538
        %2675 = vadd.xlane.f32.xlu0 %v2547
        %v2676 = vpop.xlane.xlu0 %2675
        %2677 = vadd.xlane.f32.xlu0 %v2548
        %v2678 = vpop.xlane.xlu0 %2677
        %2679 = vadd.xlane.f32.xlu0 %v2549
        %v2680 = vpop.xlane.xlu0 %2679
        %2681 = vadd.xlane.f32.xlu0 %v2550
        %v2682 = vpop.xlane.xlu0 %2681
        %2683 = vadd.xlane.f32.xlu0 %v2551
        %v2684 = vpop.xlane.xlu0 %2683
        %2685 = vadd.xlane.f32.xlu0 %v2552
        %v2686 = vpop.xlane.xlu0 %2685
        %2687 = vadd.xlane.f32.xlu0 %v2553
        %v2688 = vpop.xlane.xlu0 %2687
        %2689 = vadd.xlane.f32.xlu0 %v2554
        %v2690 = vpop.xlane.xlu0 %2689
        %2691 = vadd.xlane.f32.xlu0 %v2555
        %v2692 = vpop.xlane.xlu0 %2691
        %2693 = vadd.xlane.f32.xlu0 %v2556
        %v2694 = vpop.xlane.xlu0 %2693
        %2695 = vadd.xlane.f32.xlu0 %v2557
        %v2696 = vpop.xlane.xlu0 %2695
        %2697 = vadd.xlane.f32.xlu0 %v2558
        %v2698 = vpop.xlane.xlu0 %2697
        %2699 = vadd.xlane.f32.xlu0 %v2559
        %v2700 = vpop.xlane.xlu0 %2699
        %2701 = vadd.xlane.f32.xlu0 %v2560
        %v2702 = vpop.xlane.xlu0 %2701
        %2703 = vadd.xlane.f32.xlu0 %v2561
        %v2704 = vpop.xlane.xlu0 %2703
        %2705 = vadd.xlane.f32.xlu0 %v2562
        %v2706 = vpop.xlane.xlu0 %2705
        %2707 = vadd.xlane.f32.xlu0 %v2563
        %v2708 = vpop.xlane.xlu0 %2707
        %2709 = vadd.xlane.f32.xlu0 %v2564
        %v2710 = vpop.xlane.xlu0 %2709
        %2711 = vadd.xlane.f32.xlu0 %v2565
        %v2712 = vpop.xlane.xlu0 %2711
        %2713 = vadd.xlane.f32.xlu0 %v2566
        %v2714 = vpop.xlane.xlu0 %2713
        %2715 = vadd.xlane.f32.xlu0 %v2567
        %v2716 = vpop.xlane.xlu0 %2715
        %2717 = vadd.xlane.f32.xlu0 %v2568
        %v2718 = vpop.xlane.xlu0 %2717
        %2719 = vadd.xlane.f32.xlu0 %v2569
        %v2720 = vpop.xlane.xlu0 %2719
        %2721 = vadd.xlane.f32.xlu0 %v2570
        %v2722 = vpop.xlane.xlu0 %2721
        %2723 = vadd.xlane.f32.xlu0 %v2571
        %v2724 = vpop.xlane.xlu0 %2723
        %2725 = vadd.xlane.f32.xlu0 %v2572
        %v2726 = vpop.xlane.xlu0 %2725
        %2727 = vadd.xlane.f32.xlu0 %v2573
        %v2728 = vpop.xlane.xlu0 %2727
        %2729 = vadd.xlane.f32.xlu0 %v2574
        %v2730 = vpop.xlane.xlu0 %2729
        %2731 = vadd.xlane.f32.xlu0 %v2575
        %v2732 = vpop.xlane.xlu0 %2731
        %2733 = vadd.xlane.f32.xlu0 %v2576
        %v2734 = vpop.xlane.xlu0 %2733
        %2735 = vadd.xlane.f32.xlu0 %v2577
        %v2736 = vpop.xlane.xlu0 %2735
        %2737 = vadd.xlane.f32.xlu0 %v2578
        %v2738 = vpop.xlane.xlu0 %2737
        %2739 = vadd.xlane.f32.xlu0 %v2579
        %v2740 = vpop.xlane.xlu0 %2739
        %2741 = vadd.xlane.f32.xlu0 %v2580
        %v2742 = vpop.xlane.xlu0 %2741
        %2743 = vadd.xlane.f32.xlu0 %v2581
        %v2744 = vpop.xlane.xlu0 %2743
        %2745 = vadd.xlane.f32.xlu0 %v2582
        %v2746 = vpop.xlane.xlu0 %2745
        %2747 = vadd.xlane.f32.xlu0 %v2583
        %v2748 = vpop.xlane.xlu0 %2747
        %2749 = vadd.xlane.f32.xlu0 %v2584
        %v2750 = vpop.xlane.xlu0 %2749
        %2751 = vadd.xlane.f32.xlu0 %v2585
        %v2752 = vpop.xlane.xlu0 %2751
        %2753 = vadd.xlane.f32.xlu0 %v2586
        %v2754 = vpop.xlane.xlu0 %2753
        %2755 = vadd.xlane.f32.xlu0 %v2587
        %v2756 = vpop.xlane.xlu0 %2755
        %2757 = vadd.xlane.f32.xlu0 %v2588
        %v2758 = vpop.xlane.xlu0 %2757
        %2759 = vadd.xlane.f32.xlu0 %v2589
        %v2760 = vpop.xlane.xlu0 %2759
        %2761 = vadd.xlane.f32.xlu0 %v2590
        %v2762 = vpop.xlane.xlu0 %2761
        %2763 = vadd.xlane.f32.xlu0 %v2591
        %v2764 = vpop.xlane.xlu0 %2763
        %2765 = vadd.xlane.f32.xlu0 %v2592
        %v2766 = vpop.xlane.xlu0 %2765
        %2767 = vadd.xlane.f32.xlu0 %v2593
        %v2768 = vpop.xlane.xlu0 %2767
        %2769 = vadd.xlane.f32.xlu0 %v2594
        %v2770 = vpop.xlane.xlu0 %2769
        %2771 = vadd.xlane.f32.xlu0 %v2595
        %v2772 = vpop.xlane.xlu0 %2771
        %2773 = vadd.xlane.f32.xlu0 %v2596
        %v2774 = vpop.xlane.xlu0 %2773
        %2775 = vadd.xlane.f32.xlu0 %v2597
        %v2776 = vpop.xlane.xlu0 %2775
        %2777 = vadd.xlane.f32.xlu0 %v2598
        %v2778 = vpop.xlane.xlu0 %2777
        %2779 = vadd.xlane.f32.xlu0 %v2599
        %v2780 = vpop.xlane.xlu0 %2779
        %2781 = vadd.xlane.f32.xlu0 %v2600
        %v2782 = vpop.xlane.xlu0 %2781
        %2783 = vadd.xlane.f32.xlu0 %v2601
        %v2784 = vpop.xlane.xlu0 %2783
        %2785 = vadd.xlane.f32.xlu0 %v2602
        %v2786 = vpop.xlane.xlu0 %2785
        %2787 = vadd.xlane.f32.xlu0 %v2603
        %v2788 = vpop.xlane.xlu0 %2787
        %2789 = vadd.xlane.f32.xlu0 %v2604
        %v2790 = vpop.xlane.xlu0 %2789
        %2791 = vadd.xlane.f32.xlu0 %v2605
        %v2792 = vpop.xlane.xlu0 %2791
        %2793 = vadd.xlane.f32.xlu0 %v2606
        %v2794 = vpop.xlane.xlu0 %2793
        %2795 = vadd.xlane.f32.xlu0 %v2607
        %v2796 = vpop.xlane.xlu0 %2795
        %2797 = vadd.xlane.f32.xlu0 %v2608
        %v2798 = vpop.xlane.xlu0 %2797
        %2799 = vadd.xlane.f32.xlu0 %v2609
        %v2800 = vpop.xlane.xlu0 %2799
        %2801 = vadd.xlane.f32.xlu0 %v2610
        %v2802 = vpop.xlane.xlu0 %2801
        %2803 = vadd.xlane.f32.xlu0 %v2611
        %v2804 = vpop.xlane.xlu0 %2803
        %2805 = vadd.xlane.f32.xlu0 %v2612
        %v2806 = vpop.xlane.xlu0 %2805
        %2807 = vadd.xlane.f32.xlu0 %v2613
        %v2808 = vpop.xlane.xlu0 %2807
        %2809 = vadd.xlane.f32.xlu0 %v2614
        %v2810 = vpop.xlane.xlu0 %2809
        %2811 = vadd.xlane.f32.xlu0 %v2615
        %v2812 = vpop.xlane.xlu0 %2811
        %2813 = vadd.xlane.f32.xlu0 %v2616
        %v2814 = vpop.xlane.xlu0 %2813
        %2815 = vadd.xlane.f32.xlu0 %v2617
        %v2816 = vpop.xlane.xlu0 %2815
        %2817 = vadd.xlane.f32.xlu0 %v2618
        %v2818 = vpop.xlane.xlu0 %2817
        %2819 = vadd.xlane.f32.xlu0 %v2619
        %v2820 = vpop.xlane.xlu0 %2819
        %2821 = vadd.xlane.f32.xlu0 %v2620
        %v2822 = vpop.xlane.xlu0 %2821
        %2823 = vadd.xlane.f32.xlu0 %v2621
        %v2824 = vpop.xlane.xlu0 %2823
        %2825 = vadd.xlane.f32.xlu0 %v2622
        %v2826 = vpop.xlane.xlu0 %2825
        %2827 = vadd.xlane.f32.xlu0 %v2623
        %v2828 = vpop.xlane.xlu0 %2827
        %2829 = vadd.xlane.f32.xlu0 %v2624
        %v2830 = vpop.xlane.xlu0 %2829
        %2831 = vadd.xlane.f32.xlu0 %v2625
        %v2832 = vpop.xlane.xlu0 %2831
        %2833 = vadd.xlane.f32.xlu0 %v2626
        %v2834 = vpop.xlane.xlu0 %2833
        %2835 = vadd.xlane.f32.xlu0 %v2627
        %v2836 = vpop.xlane.xlu0 %2835
        %2837 = vadd.xlane.f32.xlu0 %v2628
        %v2838 = vpop.xlane.xlu0 %2837
        %2839 = vadd.xlane.f32.xlu0 %v2629
        %v2840 = vpop.xlane.xlu0 %2839
        %2841 = vadd.xlane.f32.xlu0 %v2630
        %v2842 = vpop.xlane.xlu0 %2841
        %2843 = vadd.xlane.f32.xlu0 %v2631
        %v2844 = vpop.xlane.xlu0 %2843
        %2845 = vadd.xlane.f32.xlu0 %v2632
        %v2846 = vpop.xlane.xlu0 %2845
        %2847 = vadd.xlane.f32.xlu0 %v2633
        %v2848 = vpop.xlane.xlu0 %2847
        %2849 = vadd.xlane.f32.xlu0 %v2634
        %v2850 = vpop.xlane.xlu0 %2849
        %2851 = vadd.xlane.f32.xlu0 %v2635
        %v2852 = vpop.xlane.xlu0 %2851
        %2853 = vadd.xlane.f32.xlu0 %v2636
        %v2854 = vpop.xlane.xlu0 %2853
        %2855 = vadd.xlane.f32.xlu0 %v2637
        %v2856 = vpop.xlane.xlu0 %2855
        %2857 = vadd.xlane.f32.xlu0 %v2638
        %v2858 = vpop.xlane.xlu0 %2857
        %2859 = vadd.xlane.f32.xlu0 %v2639
        %v2860 = vpop.xlane.xlu0 %2859
        %2861 = vadd.xlane.f32.xlu0 %v2640
        %v2862 = vpop.xlane.xlu0 %2861
        %2863 = vadd.xlane.f32.xlu0 %v2641
        %v2864 = vpop.xlane.xlu0 %2863
        %2865 = vadd.xlane.f32.xlu0 %v2642
        %v2866 = vpop.xlane.xlu0 %2865
        %2867 = vadd.xlane.f32.xlu0 %v2643
        %v2868 = vpop.xlane.xlu0 %2867
        %2869 = vadd.xlane.f32.xlu0 %v2644
        %v2870 = vpop.xlane.xlu0 %2869
        %2871 = vadd.xlane.f32.xlu0 %v2645
        %v2872 = vpop.xlane.xlu0 %2871
        %2873 = vadd.xlane.f32.xlu0 %v2646
        %v2874 = vpop.xlane.xlu0 %2873
        %2875 = vadd.xlane.f32.xlu0 %v2647
        %v2876 = vpop.xlane.xlu0 %2875
        %2877 = vadd.xlane.f32.xlu0 %v2648
        %v2878 = vpop.xlane.xlu0 %2877
        %2879 = vadd.xlane.f32.xlu0 %v2649
        %v2880 = vpop.xlane.xlu0 %2879
        %2881 = vadd.xlane.f32.xlu0 %v2650
        %v2882 = vpop.xlane.xlu0 %2881
        %2883 = vadd.xlane.f32.xlu0 %v2651
        %v2884 = vpop.xlane.xlu0 %2883
        %2885 = vadd.xlane.f32.xlu0 %v2652
        %v2886 = vpop.xlane.xlu0 %2885
        %2887 = vadd.xlane.f32.xlu0 %v2653
        %v2888 = vpop.xlane.xlu0 %2887
        %2889 = vadd.xlane.f32.xlu0 %v2654
        %v2890 = vpop.xlane.xlu0 %2889
        %2891 = vadd.xlane.f32.xlu0 %v2655
        %v2892 = vpop.xlane.xlu0 %2891
        %2893 = vadd.xlane.f32.xlu0 %v2656
        %v2894 = vpop.xlane.xlu0 %2893
        %2895 = vadd.xlane.f32.xlu0 %v2657
        %v2896 = vpop.xlane.xlu0 %2895
        %2897 = vadd.xlane.f32.xlu0 %v2658
        %v2898 = vpop.xlane.xlu0 %2897
        %2899 = vadd.xlane.f32.xlu0 %v2659
        %v2900 = vpop.xlane.xlu0 %2899
        %2901 = vadd.xlane.f32.xlu0 %v2660
        %v2902 = vpop.xlane.xlu0 %2901
        %2903 = vadd.xlane.f32.xlu0 %v2661
        %v2904 = vpop.xlane.xlu0 %2903
        %2905 = vadd.xlane.f32.xlu0 %v2662
        %v2906 = vpop.xlane.xlu0 %2905
        %2907 = vadd.xlane.f32.xlu0 %v2663
        %v2908 = vpop.xlane.xlu0 %2907
        %2909 = vadd.xlane.f32.xlu0 %v2664
        %v2910 = vpop.xlane.xlu0 %2909
        %2911 = vadd.xlane.f32.xlu0 %v2665
        %v2912 = vpop.xlane.xlu0 %2911
        %2913 = vadd.xlane.f32.xlu0 %v2666
        %v2914 = vpop.xlane.xlu0 %2913
        %2915 = vadd.xlane.f32.xlu0 %v2667
        %v2916 = vpop.xlane.xlu0 %2915
        %2917 = vadd.xlane.f32.xlu0 %v2668
        %v2918 = vpop.xlane.xlu0 %2917
        %2919 = vadd.xlane.f32.xlu0 %v2669
        %v2920 = vpop.xlane.xlu0 %2919
        %2921 = vadd.xlane.f32.xlu0 %v2670
        %v2922 = vpop.xlane.xlu0 %2921
        %2923 = vadd.xlane.f32.xlu0 %v2671
        %v2924 = vpop.xlane.xlu0 %2923
        %2925 = vadd.xlane.f32.xlu0 %v2672
        %v2926 = vpop.xlane.xlu0 %2925
        %2927 = vadd.xlane.f32.xlu0 %v2673
        %v2928 = vpop.xlane.xlu0 %2927
        %2929 = vadd.xlane.f32.xlu0 %v2674
        %v2930 = vpop.xlane.xlu0 %2929
        %v3059 = vlaneseq
        %v3060 = vand.u32 %v3059, 127
        %v3061 = vlaneseq
        %v3062 = vshrl.u32 %v3061, 7
        %v3063 = vsub.s32 %v3060, %v3062
        %v3064 = vrot.slane %v2676, %v3063
        %v3065 = vadd.s32 %v3060, 4294967288
        %v3066 = vlaneseq
        %v3067 = vshrl.u32 %v3066, 7
        %v3068 = vsub.s32 %v3065, %v3067
        %v3069 = vrot.slane %v2678, %v3068
        %vm3070 = vcmask 130112
        %v3071 = vsel %vm3070, %v3069, %v3064
        %v3072 = vadd.s32 %v3060, 4294967280
        %v3073 = vlaneseq
        %v3074 = vshrl.u32 %v3073, 7
        %v3075 = vsub.s32 %v3072, %v3074
        %v3076 = vrot.slane %v2680, %v3075
        %vm3077 = vcmask 195712
        %v3078 = vsel %vm3077, %v3076, %v3071
        %v3079 = vadd.s32 %v3060, 4294967272
        %v3080 = vlaneseq
        %v3081 = vshrl.u32 %v3080, 7
        %v3082 = vsub.s32 %v3079, %v3081
        %v3083 = vrot.slane %v2682, %v3082
        %vm3084 = vcmask 261312
        %v3085 = vsel %vm3084, %v3083, %v3078
        %v3086 = vadd.s32 %v3060, 4294967264
        %v3087 = vlaneseq
        %v3088 = vshrl.u32 %v3087, 7
        %v3089 = vsub.s32 %v3086, %v3088
        %v3090 = vrot.slane %v2684, %v3089
        %vm3091 = vcmask 326912
        %v3092 = vsel %vm3091, %v3090, %v3085
        %v3093 = vadd.s32 %v3060, 4294967256
        %v3094 = vlaneseq
        %v3095 = vshrl.u32 %v3094, 7
        %v3096 = vsub.s32 %v3093, %v3095
        %v3097 = vrot.slane %v2686, %v3096
        %vm3098 = vcmask 392512
        %v3099 = vsel %vm3098, %v3097, %v3092
        %v3100 = vadd.s32 %v3060, 4294967248
        %v3101 = vlaneseq
        %v3102 = vshrl.u32 %v3101, 7
        %v3103 = vsub.s32 %v3100, %v3102
        %v3104 = vrot.slane %v2688, %v3103
        %vm3105 = vcmask 458112
        %v3106 = vsel %vm3105, %v3104, %v3099
        %v3107 = vadd.s32 %v3060, 4294967240
        %v3108 = vlaneseq
        %v3109 = vshrl.u32 %v3108, 7
        %v3110 = vsub.s32 %v3107, %v3109
        %v3111 = vrot.slane %v2690, %v3110
        %vm3112 = vcmask 523712
        %v3113 = vsel %vm3112, %v3111, %v3106
        %v3114 = vadd.s32 %v3060, 4294967232
        %v3115 = vlaneseq
        %v3116 = vshrl.u32 %v3115, 7
        %v3117 = vsub.s32 %v3114, %v3116
        %v3118 = vrot.slane %v2692, %v3117
        %vm3119 = vcmask 589312
        %v3120 = vsel %vm3119, %v3118, %v3113
        %v3121 = vadd.s32 %v3060, 4294967224
        %v3122 = vlaneseq
        %v3123 = vshrl.u32 %v3122, 7
        %v3124 = vsub.s32 %v3121, %v3123
        %v3125 = vrot.slane %v2694, %v3124
        %vm3126 = vcmask 654912
        %v3127 = vsel %vm3126, %v3125, %v3120
        %v3128 = vadd.s32 %v3060, 4294967216
        %v3129 = vlaneseq
        %v3130 = vshrl.u32 %v3129, 7
        %v3131 = vsub.s32 %v3128, %v3130
        %v3132 = vrot.slane %v2696, %v3131
        %vm3133 = vcmask 720512
        %v3134 = vsel %vm3133, %v3132, %v3127
        %v3135 = vadd.s32 %v3060, 4294967208
        %v3136 = vlaneseq
        %v3137 = vshrl.u32 %v3136, 7
        %v3138 = vsub.s32 %v3135, %v3137
        %v3139 = vrot.slane %v2698, %v3138
        %vm3140 = vcmask 786112
        %v3141 = vsel %vm3140, %v3139, %v3134
        %v3142 = vadd.s32 %v3060, 4294967200
        %v3143 = vlaneseq
        %v3144 = vshrl.u32 %v3143, 7
        %v3145 = vsub.s32 %v3142, %v3144
        %v3146 = vrot.slane %v2700, %v3145
        %vm3147 = vcmask 851712
        %v3148 = vsel %vm3147, %v3146, %v3141
        %v3149 = vadd.s32 %v3060, 4294967192
        %v3150 = vlaneseq
        %v3151 = vshrl.u32 %v3150, 7
        %v3152 = vsub.s32 %v3149, %v3151
        %v3153 = vrot.slane %v2702, %v3152
        %vm3154 = vcmask 917312
        %v3155 = vsel %vm3154, %v3153, %v3148
        %v3156 = vadd.s32 %v3060, 4294967184
        %v3157 = vlaneseq
        %v3158 = vshrl.u32 %v3157, 7
        %v3159 = vsub.s32 %v3156, %v3158
        %v3160 = vrot.slane %v2704, %v3159
        %vm3161 = vcmask 982912
        %v3162 = vsel %vm3161, %v3160, %v3155
        %v3163 = vadd.s32 %v3060, 4294967176
        %v3164 = vlaneseq
        %v3165 = vshrl.u32 %v3164, 7
        %v3166 = vsub.s32 %v3163, %v3165
        %v3167 = vrot.slane %v2706, %v3166
        %vm3168 = vcmask 1048512
        %v3169 = vsel %vm3168, %v3167, %v3162
        %v3170 = vlaneseq
        %v3171 = vshrl.u32 %v3170, 7
        %v3172 = vsub.s32 %v3060, %v3171
        %v3173 = vrot.slane %v2708, %v3172
        %v3174 = vlaneseq
        %v3175 = vshrl.u32 %v3174, 7
        %v3176 = vsub.s32 %v3065, %v3175
        %v3177 = vrot.slane %v2710, %v3176
        %v3178 = vsel %vm3070, %v3177, %v3173
        %v3179 = vlaneseq
        %v3180 = vshrl.u32 %v3179, 7
        %v3181 = vsub.s32 %v3072, %v3180
        %v3182 = vrot.slane %v2712, %v3181
        %v3183 = vsel %vm3077, %v3182, %v3178
        %v3184 = vlaneseq
        %v3185 = vshrl.u32 %v3184, 7
        %v3186 = vsub.s32 %v3079, %v3185
        %v3187 = vrot.slane %v2714, %v3186
        %v3188 = vsel %vm3084, %v3187, %v3183
        %v3189 = vlaneseq
        %v3190 = vshrl.u32 %v3189, 7
        %v3191 = vsub.s32 %v3086, %v3190
        %v3192 = vrot.slane %v2716, %v3191
        %v3193 = vsel %vm3091, %v3192, %v3188
        %v3194 = vlaneseq
        %v3195 = vshrl.u32 %v3194, 7
        %v3196 = vsub.s32 %v3093, %v3195
        %v3197 = vrot.slane %v2718, %v3196
        %v3198 = vsel %vm3098, %v3197, %v3193
        %v3199 = vlaneseq
        %v3200 = vshrl.u32 %v3199, 7
        %v3201 = vsub.s32 %v3100, %v3200
        %v3202 = vrot.slane %v2720, %v3201
        %v3203 = vsel %vm3105, %v3202, %v3198
        %v3204 = vlaneseq
        %v3205 = vshrl.u32 %v3204, 7
        %v3206 = vsub.s32 %v3107, %v3205
        %v3207 = vrot.slane %v2722, %v3206
        %v3208 = vsel %vm3112, %v3207, %v3203
        %v3209 = vlaneseq
        %v3210 = vshrl.u32 %v3209, 7
        %v3211 = vsub.s32 %v3114, %v3210
        %v3212 = vrot.slane %v2724, %v3211
        %v3213 = vsel %vm3119, %v3212, %v3208
        %v3214 = vlaneseq
        %v3215 = vshrl.u32 %v3214, 7
        %v3216 = vsub.s32 %v3121, %v3215
        %v3217 = vrot.slane %v2726, %v3216
        %v3218 = vsel %vm3126, %v3217, %v3213
        %v3219 = vlaneseq
        %v3220 = vshrl.u32 %v3219, 7
        %v3221 = vsub.s32 %v3128, %v3220
        %v3222 = vrot.slane %v2728, %v3221
        %v3223 = vsel %vm3133, %v3222, %v3218
        %v3224 = vlaneseq
        %v3225 = vshrl.u32 %v3224, 7
        %v3226 = vsub.s32 %v3135, %v3225
        %v3227 = vrot.slane %v2730, %v3226
        %v3228 = vsel %vm3140, %v3227, %v3223
        %v3229 = vlaneseq
        %v3230 = vshrl.u32 %v3229, 7
        %v3231 = vsub.s32 %v3142, %v3230
        %v3232 = vrot.slane %v2732, %v3231
        %v3233 = vsel %vm3147, %v3232, %v3228
        %v3234 = vlaneseq
        %v3235 = vshrl.u32 %v3234, 7
        %v3236 = vsub.s32 %v3149, %v3235
        %v3237 = vrot.slane %v2734, %v3236
        %v3238 = vsel %vm3154, %v3237, %v3233
        %v3239 = vlaneseq
        %v3240 = vshrl.u32 %v3239, 7
        %v3241 = vsub.s32 %v3156, %v3240
        %v3242 = vrot.slane %v2736, %v3241
        %v3243 = vsel %vm3161, %v3242, %v3238
        %v3244 = vlaneseq
        %v3245 = vshrl.u32 %v3244, 7
        %v3246 = vsub.s32 %v3163, %v3245
        %v3247 = vrot.slane %v2738, %v3246
        %v3248 = vsel %vm3168, %v3247, %v3243
        %v3249 = vlaneseq
        %v3250 = vshrl.u32 %v3249, 7
        %v3251 = vsub.s32 %v3060, %v3250
        %v3252 = vrot.slane %v2740, %v3251
        %v3253 = vlaneseq
        %v3254 = vshrl.u32 %v3253, 7
        %v3255 = vsub.s32 %v3065, %v3254
        %v3256 = vrot.slane %v2742, %v3255
        %v3257 = vsel %vm3070, %v3256, %v3252
        %v3258 = vlaneseq
        %v3259 = vshrl.u32 %v3258, 7
        %v3260 = vsub.s32 %v3072, %v3259
        %v3261 = vrot.slane %v2744, %v3260
        %v3262 = vsel %vm3077, %v3261, %v3257
        %v3263 = vlaneseq
        %v3264 = vshrl.u32 %v3263, 7
        %v3265 = vsub.s32 %v3079, %v3264
        %v3266 = vrot.slane %v2746, %v3265
        %v3267 = vsel %vm3084, %v3266, %v3262
        %v3268 = vlaneseq
        %v3269 = vshrl.u32 %v3268, 7
        %v3270 = vsub.s32 %v3086, %v3269
        %v3271 = vrot.slane %v2748, %v3270
        %v3272 = vsel %vm3091, %v3271, %v3267
        %v3273 = vlaneseq
        %v3274 = vshrl.u32 %v3273, 7
        %v3275 = vsub.s32 %v3093, %v3274
        %v3276 = vrot.slane %v2750, %v3275
        %v3277 = vsel %vm3098, %v3276, %v3272
        %v3278 = vlaneseq
        %v3279 = vshrl.u32 %v3278, 7
        %v3280 = vsub.s32 %v3100, %v3279
        %v3281 = vrot.slane %v2752, %v3280
        %v3282 = vsel %vm3105, %v3281, %v3277
        %v3283 = vlaneseq
        %v3284 = vshrl.u32 %v3283, 7
        %v3285 = vsub.s32 %v3107, %v3284
        %v3286 = vrot.slane %v2754, %v3285
        %v3287 = vsel %vm3112, %v3286, %v3282
        %v3288 = vlaneseq
        %v3289 = vshrl.u32 %v3288, 7
        %v3290 = vsub.s32 %v3114, %v3289
        %v3291 = vrot.slane %v2756, %v3290
        %v3292 = vsel %vm3119, %v3291, %v3287
        %v3293 = vlaneseq
        %v3294 = vshrl.u32 %v3293, 7
        %v3295 = vsub.s32 %v3121, %v3294
        %v3296 = vrot.slane %v2758, %v3295
        %v3297 = vsel %vm3126, %v3296, %v3292
        %v3298 = vlaneseq
        %v3299 = vshrl.u32 %v3298, 7
        %v3300 = vsub.s32 %v3128, %v3299
        %v3301 = vrot.slane %v2760, %v3300
        %v3302 = vsel %vm3133, %v3301, %v3297
        %v3303 = vlaneseq
        %v3304 = vshrl.u32 %v3303, 7
        %v3305 = vsub.s32 %v3135, %v3304
        %v3306 = vrot.slane %v2762, %v3305
        %v3307 = vsel %vm3140, %v3306, %v3302
        %v3308 = vlaneseq
        %v3309 = vshrl.u32 %v3308, 7
        %v3310 = vsub.s32 %v3142, %v3309
        %v3311 = vrot.slane %v2764, %v3310
        %v3312 = vsel %vm3147, %v3311, %v3307
        %v3313 = vlaneseq
        %v3314 = vshrl.u32 %v3313, 7
        %v3315 = vsub.s32 %v3149, %v3314
        %v3316 = vrot.slane %v2766, %v3315
        %v3317 = vsel %vm3154, %v3316, %v3312
        %v3318 = vlaneseq
        %v3319 = vshrl.u32 %v3318, 7
        %v3320 = vsub.s32 %v3156, %v3319
        %v3321 = vrot.slane %v2768, %v3320
        %v3322 = vsel %vm3161, %v3321, %v3317
        %v3323 = vlaneseq
        %v3324 = vshrl.u32 %v3323, 7
        %v3325 = vsub.s32 %v3163, %v3324
        %v3326 = vrot.slane %v2770, %v3325
        %v3327 = vsel %vm3168, %v3326, %v3322
        %v3328 = vlaneseq
        %v3329 = vshrl.u32 %v3328, 7
        %v3330 = vsub.s32 %v3060, %v3329
        %v3331 = vrot.slane %v2772, %v3330
        %v3332 = vlaneseq
        %v3333 = vshrl.u32 %v3332, 7
        %v3334 = vsub.s32 %v3065, %v3333
        %v3335 = vrot.slane %v2774, %v3334
        %v3336 = vsel %vm3070, %v3335, %v3331
        %v3337 = vlaneseq
        %v3338 = vshrl.u32 %v3337, 7
        %v3339 = vsub.s32 %v3072, %v3338
        %v3340 = vrot.slane %v2776, %v3339
        %v3341 = vsel %vm3077, %v3340, %v3336
        %v3342 = vlaneseq
        %v3343 = vshrl.u32 %v3342, 7
        %v3344 = vsub.s32 %v3079, %v3343
        %v3345 = vrot.slane %v2778, %v3344
        %v3346 = vsel %vm3084, %v3345, %v3341
        %v3347 = vlaneseq
        %v3348 = vshrl.u32 %v3347, 7
        %v3349 = vsub.s32 %v3086, %v3348
        %v3350 = vrot.slane %v2780, %v3349
        %v3351 = vsel %vm3091, %v3350, %v3346
        %v3352 = vlaneseq
        %v3353 = vshrl.u32 %v3352, 7
        %v3354 = vsub.s32 %v3093, %v3353
        %v3355 = vrot.slane %v2782, %v3354
        %v3356 = vsel %vm3098, %v3355, %v3351
        %v3357 = vlaneseq
        %v3358 = vshrl.u32 %v3357, 7
        %v3359 = vsub.s32 %v3100, %v3358
        %v3360 = vrot.slane %v2784, %v3359
        %v3361 = vsel %vm3105, %v3360, %v3356
        %v3362 = vlaneseq
        %v3363 = vshrl.u32 %v3362, 7
        %v3364 = vsub.s32 %v3107, %v3363
        %v3365 = vrot.slane %v2786, %v3364
        %v3366 = vsel %vm3112, %v3365, %v3361
        %v3367 = vlaneseq
        %v3368 = vshrl.u32 %v3367, 7
        %v3369 = vsub.s32 %v3114, %v3368
        %v3370 = vrot.slane %v2788, %v3369
        %v3371 = vsel %vm3119, %v3370, %v3366
        %v3372 = vlaneseq
        %v3373 = vshrl.u32 %v3372, 7
        %v3374 = vsub.s32 %v3121, %v3373
        %v3375 = vrot.slane %v2790, %v3374
        %v3376 = vsel %vm3126, %v3375, %v3371
        %v3377 = vlaneseq
        %v3378 = vshrl.u32 %v3377, 7
        %v3379 = vsub.s32 %v3128, %v3378
        %v3380 = vrot.slane %v2792, %v3379
        %v3381 = vsel %vm3133, %v3380, %v3376
        %v3382 = vlaneseq
        %v3383 = vshrl.u32 %v3382, 7
        %v3384 = vsub.s32 %v3135, %v3383
        %v3385 = vrot.slane %v2794, %v3384
        %v3386 = vsel %vm3140, %v3385, %v3381
        %v3387 = vlaneseq
        %v3388 = vshrl.u32 %v3387, 7
        %v3389 = vsub.s32 %v3142, %v3388
        %v3390 = vrot.slane %v2796, %v3389
        %v3391 = vsel %vm3147, %v3390, %v3386
        %v3392 = vlaneseq
        %v3393 = vshrl.u32 %v3392, 7
        %v3394 = vsub.s32 %v3149, %v3393
        %v3395 = vrot.slane %v2798, %v3394
        %v3396 = vsel %vm3154, %v3395, %v3391
        %v3397 = vlaneseq
        %v3398 = vshrl.u32 %v3397, 7
        %v3399 = vsub.s32 %v3156, %v3398
        %v3400 = vrot.slane %v2800, %v3399
        %v3401 = vsel %vm3161, %v3400, %v3396
        %v3402 = vlaneseq
        %v3403 = vshrl.u32 %v3402, 7
        %v3404 = vsub.s32 %v3163, %v3403
        %v3405 = vrot.slane %v2802, %v3404
        %v3406 = vsel %vm3168, %v3405, %v3401
        %v3407 = vlaneseq
        %v3408 = vshrl.u32 %v3407, 7
        %v3409 = vsub.s32 %v3060, %v3408
        %v3410 = vrot.slane %v2804, %v3409
        %v3411 = vlaneseq
        %v3412 = vshrl.u32 %v3411, 7
        %v3413 = vsub.s32 %v3065, %v3412
        %v3414 = vrot.slane %v2806, %v3413
        %v3415 = vsel %vm3070, %v3414, %v3410
        %v3416 = vlaneseq
        %v3417 = vshrl.u32 %v3416, 7
        %v3418 = vsub.s32 %v3072, %v3417
        %v3419 = vrot.slane %v2808, %v3418
        %v3420 = vsel %vm3077, %v3419, %v3415
        %v3421 = vlaneseq
        %v3422 = vshrl.u32 %v3421, 7
        %v3423 = vsub.s32 %v3079, %v3422
        %v3424 = vrot.slane %v2810, %v3423
        %v3425 = vsel %vm3084, %v3424, %v3420
        %v3426 = vlaneseq
        %v3427 = vshrl.u32 %v3426, 7
        %v3428 = vsub.s32 %v3086, %v3427
        %v3429 = vrot.slane %v2812, %v3428
        %v3430 = vsel %vm3091, %v3429, %v3425
        %v3431 = vlaneseq
        %v3432 = vshrl.u32 %v3431, 7
        %v3433 = vsub.s32 %v3093, %v3432
        %v3434 = vrot.slane %v2814, %v3433
        %v3435 = vsel %vm3098, %v3434, %v3430
        %v3436 = vlaneseq
        %v3437 = vshrl.u32 %v3436, 7
        %v3438 = vsub.s32 %v3100, %v3437
        %v3439 = vrot.slane %v2816, %v3438
        %v3440 = vsel %vm3105, %v3439, %v3435
        %v3441 = vlaneseq
        %v3442 = vshrl.u32 %v3441, 7
        %v3443 = vsub.s32 %v3107, %v3442
        %v3444 = vrot.slane %v2818, %v3443
        %v3445 = vsel %vm3112, %v3444, %v3440
        %v3446 = vlaneseq
        %v3447 = vshrl.u32 %v3446, 7
        %v3448 = vsub.s32 %v3114, %v3447
        %v3449 = vrot.slane %v2820, %v3448
        %v3450 = vsel %vm3119, %v3449, %v3445
        %v3451 = vlaneseq
        %v3452 = vshrl.u32 %v3451, 7
        %v3453 = vsub.s32 %v3121, %v3452
        %v3454 = vrot.slane %v2822, %v3453
        %v3455 = vsel %vm3126, %v3454, %v3450
        %v3456 = vlaneseq
        %v3457 = vshrl.u32 %v3456, 7
        %v3458 = vsub.s32 %v3128, %v3457
        %v3459 = vrot.slane %v2824, %v3458
        %v3460 = vsel %vm3133, %v3459, %v3455
        %v3461 = vlaneseq
        %v3462 = vshrl.u32 %v3461, 7
        %v3463 = vsub.s32 %v3135, %v3462
        %v3464 = vrot.slane %v2826, %v3463
        %v3465 = vsel %vm3140, %v3464, %v3460
        %v3466 = vlaneseq
        %v3467 = vshrl.u32 %v3466, 7
        %v3468 = vsub.s32 %v3142, %v3467
        %v3469 = vrot.slane %v2828, %v3468
        %v3470 = vsel %vm3147, %v3469, %v3465
        %v3471 = vlaneseq
        %v3472 = vshrl.u32 %v3471, 7
        %v3473 = vsub.s32 %v3149, %v3472
        %v3474 = vrot.slane %v2830, %v3473
        %v3475 = vsel %vm3154, %v3474, %v3470
        %v3476 = vlaneseq
        %v3477 = vshrl.u32 %v3476, 7
        %v3478 = vsub.s32 %v3156, %v3477
        %v3479 = vrot.slane %v2832, %v3478
        %v3480 = vsel %vm3161, %v3479, %v3475
        %v3481 = vlaneseq
        %v3482 = vshrl.u32 %v3481, 7
        %v3483 = vsub.s32 %v3163, %v3482
        %v3484 = vrot.slane %v2834, %v3483
        %v3485 = vsel %vm3168, %v3484, %v3480
        %v3486 = vlaneseq
        %v3487 = vshrl.u32 %v3486, 7
        %v3488 = vsub.s32 %v3060, %v3487
        %v3489 = vrot.slane %v2836, %v3488
        %v3490 = vlaneseq
        %v3491 = vshrl.u32 %v3490, 7
        %v3492 = vsub.s32 %v3065, %v3491
        %v3493 = vrot.slane %v2838, %v3492
        %v3494 = vsel %vm3070, %v3493, %v3489
        %v3495 = vlaneseq
        %v3496 = vshrl.u32 %v3495, 7
        %v3497 = vsub.s32 %v3072, %v3496
        %v3498 = vrot.slane %v2840, %v3497
        %v3499 = vsel %vm3077, %v3498, %v3494
        %v3500 = vlaneseq
        %v3501 = vshrl.u32 %v3500, 7
        %v3502 = vsub.s32 %v3079, %v3501
        %v3503 = vrot.slane %v2842, %v3502
        %v3504 = vsel %vm3084, %v3503, %v3499
        %v3505 = vlaneseq
        %v3506 = vshrl.u32 %v3505, 7
        %v3507 = vsub.s32 %v3086, %v3506
        %v3508 = vrot.slane %v2844, %v3507
        %v3509 = vsel %vm3091, %v3508, %v3504
        %v3510 = vlaneseq
        %v3511 = vshrl.u32 %v3510, 7
        %v3512 = vsub.s32 %v3093, %v3511
        %v3513 = vrot.slane %v2846, %v3512
        %v3514 = vsel %vm3098, %v3513, %v3509
        %v3515 = vlaneseq
        %v3516 = vshrl.u32 %v3515, 7
        %v3517 = vsub.s32 %v3100, %v3516
        %v3518 = vrot.slane %v2848, %v3517
        %v3519 = vsel %vm3105, %v3518, %v3514
        %v3520 = vlaneseq
        %v3521 = vshrl.u32 %v3520, 7
        %v3522 = vsub.s32 %v3107, %v3521
        %v3523 = vrot.slane %v2850, %v3522
        %v3524 = vsel %vm3112, %v3523, %v3519
        %v3525 = vlaneseq
        %v3526 = vshrl.u32 %v3525, 7
        %v3527 = vsub.s32 %v3114, %v3526
        %v3528 = vrot.slane %v2852, %v3527
        %v3529 = vsel %vm3119, %v3528, %v3524
        %v3530 = vlaneseq
        %v3531 = vshrl.u32 %v3530, 7
        %v3532 = vsub.s32 %v3121, %v3531
        %v3533 = vrot.slane %v2854, %v3532
        %v3534 = vsel %vm3126, %v3533, %v3529
        %v3535 = vlaneseq
        %v3536 = vshrl.u32 %v3535, 7
        %v3537 = vsub.s32 %v3128, %v3536
        %v3538 = vrot.slane %v2856, %v3537
        %v3539 = vsel %vm3133, %v3538, %v3534
        %v3540 = vlaneseq
        %v3541 = vshrl.u32 %v3540, 7
        %v3542 = vsub.s32 %v3135, %v3541
        %v3543 = vrot.slane %v2858, %v3542
        %v3544 = vsel %vm3140, %v3543, %v3539
        %v3545 = vlaneseq
        %v3546 = vshrl.u32 %v3545, 7
        %v3547 = vsub.s32 %v3142, %v3546
        %v3548 = vrot.slane %v2860, %v3547
        %v3549 = vsel %vm3147, %v3548, %v3544
        %v3550 = vlaneseq
        %v3551 = vshrl.u32 %v3550, 7
        %v3552 = vsub.s32 %v3149, %v3551
        %v3553 = vrot.slane %v2862, %v3552
        %v3554 = vsel %vm3154, %v3553, %v3549
        %v3555 = vlaneseq
        %v3556 = vshrl.u32 %v3555, 7
        %v3557 = vsub.s32 %v3156, %v3556
        %v3558 = vrot.slane %v2864, %v3557
        %v3559 = vsel %vm3161, %v3558, %v3554
        %v3560 = vlaneseq
        %v3561 = vshrl.u32 %v3560, 7
        %v3562 = vsub.s32 %v3163, %v3561
        %v3563 = vrot.slane %v2866, %v3562
        %v3564 = vsel %vm3168, %v3563, %v3559
        %v3565 = vlaneseq
        %v3566 = vshrl.u32 %v3565, 7
        %v3567 = vsub.s32 %v3060, %v3566
        %v3568 = vrot.slane %v2868, %v3567
        %v3569 = vlaneseq
        %v3570 = vshrl.u32 %v3569, 7
        %v3571 = vsub.s32 %v3065, %v3570
        %v3572 = vrot.slane %v2870, %v3571
        %v3573 = vsel %vm3070, %v3572, %v3568
        %v3574 = vlaneseq
        %v3575 = vshrl.u32 %v3574, 7
        %v3576 = vsub.s32 %v3072, %v3575
        %v3577 = vrot.slane %v2872, %v3576
        %v3578 = vsel %vm3077, %v3577, %v3573
        %v3579 = vlaneseq
        %v3580 = vshrl.u32 %v3579, 7
        %v3581 = vsub.s32 %v3079, %v3580
        %v3582 = vrot.slane %v2874, %v3581
        %v3583 = vsel %vm3084, %v3582, %v3578
        %v3584 = vlaneseq
        %v3585 = vshrl.u32 %v3584, 7
        %v3586 = vsub.s32 %v3086, %v3585
        %v3587 = vrot.slane %v2876, %v3586
        %v3588 = vsel %vm3091, %v3587, %v3583
        %v3589 = vlaneseq
        %v3590 = vshrl.u32 %v3589, 7
        %v3591 = vsub.s32 %v3093, %v3590
        %v3592 = vrot.slane %v2878, %v3591
        %v3593 = vsel %vm3098, %v3592, %v3588
        %v3594 = vlaneseq
        %v3595 = vshrl.u32 %v3594, 7
        %v3596 = vsub.s32 %v3100, %v3595
        %v3597 = vrot.slane %v2880, %v3596
        %v3598 = vsel %vm3105, %v3597, %v3593
        %v3599 = vlaneseq
        %v3600 = vshrl.u32 %v3599, 7
        %v3601 = vsub.s32 %v3107, %v3600
        %v3602 = vrot.slane %v2882, %v3601
        %v3603 = vsel %vm3112, %v3602, %v3598
        %v3604 = vlaneseq
        %v3605 = vshrl.u32 %v3604, 7
        %v3606 = vsub.s32 %v3114, %v3605
        %v3607 = vrot.slane %v2884, %v3606
        %v3608 = vsel %vm3119, %v3607, %v3603
        %v3609 = vlaneseq
        %v3610 = vshrl.u32 %v3609, 7
        %v3611 = vsub.s32 %v3121, %v3610
        %v3612 = vrot.slane %v2886, %v3611
        %v3613 = vsel %vm3126, %v3612, %v3608
        %v3614 = vlaneseq
        %v3615 = vshrl.u32 %v3614, 7
        %v3616 = vsub.s32 %v3128, %v3615
        %v3617 = vrot.slane %v2888, %v3616
        %v3618 = vsel %vm3133, %v3617, %v3613
        %v3619 = vlaneseq
        %v3620 = vshrl.u32 %v3619, 7
        %v3621 = vsub.s32 %v3135, %v3620
        %v3622 = vrot.slane %v2890, %v3621
        %v3623 = vsel %vm3140, %v3622, %v3618
        %v3624 = vlaneseq
        %v3625 = vshrl.u32 %v3624, 7
        %v3626 = vsub.s32 %v3142, %v3625
        %v3627 = vrot.slane %v2892, %v3626
        %v3628 = vsel %vm3147, %v3627, %v3623
        %v3629 = vlaneseq
        %v3630 = vshrl.u32 %v3629, 7
        %v3631 = vsub.s32 %v3149, %v3630
        %v3632 = vrot.slane %v2894, %v3631
        %v3633 = vsel %vm3154, %v3632, %v3628
        %v3634 = vlaneseq
        %v3635 = vshrl.u32 %v3634, 7
        %v3636 = vsub.s32 %v3156, %v3635
        %v3637 = vrot.slane %v2896, %v3636
        %v3638 = vsel %vm3161, %v3637, %v3633
        %v3639 = vlaneseq
        %v3640 = vshrl.u32 %v3639, 7
        %v3641 = vsub.s32 %v3163, %v3640
        %v3642 = vrot.slane %v2898, %v3641
        %v3643 = vsel %vm3168, %v3642, %v3638
        %v3644 = vlaneseq
        %v3645 = vshrl.u32 %v3644, 7
        %v3646 = vsub.s32 %v3060, %v3645
        %v3647 = vrot.slane %v2900, %v3646
        %v3648 = vlaneseq
        %v3649 = vshrl.u32 %v3648, 7
        %v3650 = vsub.s32 %v3065, %v3649
        %v3651 = vrot.slane %v2902, %v3650
        %v3652 = vsel %vm3070, %v3651, %v3647
        %v3653 = vlaneseq
        %v3654 = vshrl.u32 %v3653, 7
        %v3655 = vsub.s32 %v3072, %v3654
        %v3656 = vrot.slane %v2904, %v3655
        %v3657 = vsel %vm3077, %v3656, %v3652
        %v3658 = vlaneseq
        %v3659 = vshrl.u32 %v3658, 7
        %v3660 = vsub.s32 %v3079, %v3659
        %v3661 = vrot.slane %v2906, %v3660
        %v3662 = vsel %vm3084, %v3661, %v3657
        %v3663 = vlaneseq
        %v3664 = vshrl.u32 %v3663, 7
        %v3665 = vsub.s32 %v3086, %v3664
        %v3666 = vrot.slane %v2908, %v3665
        %v3667 = vsel %vm3091, %v3666, %v3662
        %v3668 = vlaneseq
        %v3669 = vshrl.u32 %v3668, 7
        %v3670 = vsub.s32 %v3093, %v3669
        %v3671 = vrot.slane %v2910, %v3670
        %v3672 = vsel %vm3098, %v3671, %v3667
        %v3673 = vlaneseq
        %v3674 = vshrl.u32 %v3673, 7
        %v3675 = vsub.s32 %v3100, %v3674
        %v3676 = vrot.slane %v2912, %v3675
        %v3677 = vsel %vm3105, %v3676, %v3672
        %v3678 = vlaneseq
        %v3679 = vshrl.u32 %v3678, 7
        %v3680 = vsub.s32 %v3107, %v3679
        %v3681 = vrot.slane %v2914, %v3680
        %v3682 = vsel %vm3112, %v3681, %v3677
        %v3683 = vlaneseq
        %v3684 = vshrl.u32 %v3683, 7
        %v3685 = vsub.s32 %v3114, %v3684
        %v3686 = vrot.slane %v2916, %v3685
        %v3687 = vsel %vm3119, %v3686, %v3682
        %v3688 = vlaneseq
        %v3689 = vshrl.u32 %v3688, 7
        %v3690 = vsub.s32 %v3121, %v3689
        %v3691 = vrot.slane %v2918, %v3690
        %v3692 = vsel %vm3126, %v3691, %v3687
        %v3693 = vlaneseq
        %v3694 = vshrl.u32 %v3693, 7
        %v3695 = vsub.s32 %v3128, %v3694
        %v3696 = vrot.slane %v2920, %v3695
        %v3697 = vsel %vm3133, %v3696, %v3692
        %v3698 = vlaneseq
        %v3699 = vshrl.u32 %v3698, 7
        %v3700 = vsub.s32 %v3135, %v3699
        %v3701 = vrot.slane %v2922, %v3700
        %v3702 = vsel %vm3140, %v3701, %v3697
        %v3703 = vlaneseq
        %v3704 = vshrl.u32 %v3703, 7
        %v3705 = vsub.s32 %v3142, %v3704
        %v3706 = vrot.slane %v2924, %v3705
        %v3707 = vsel %vm3147, %v3706, %v3702
        %v3708 = vlaneseq
        %v3709 = vshrl.u32 %v3708, 7
        %v3710 = vsub.s32 %v3149, %v3709
        %v3711 = vrot.slane %v2926, %v3710
        %v3712 = vsel %vm3154, %v3711, %v3707
        %v3713 = vlaneseq
        %v3714 = vshrl.u32 %v3713, 7
        %v3715 = vsub.s32 %v3156, %v3714
        %v3716 = vrot.slane %v2928, %v3715
        %v3717 = vsel %vm3161, %v3716, %v3712
        %v3718 = vlaneseq
        %v3719 = vshrl.u32 %v3718, 7
        %v3720 = vsub.s32 %v3163, %v3719
        %v3721 = vrot.slane %v2930, %v3720
        %v3722 = vsel %vm3168, %v3721, %v3717
        %vm3723 = vcmask 1041409
        %v3724 = vsel %vm3723, %v3248, %v3169
        %vm3725 = vcmask 1042434
        %v3726 = vsel %vm3725, %v3327, %v3724
        %vm3727 = vcmask 1043459
        %v3728 = vsel %vm3727, %v3406, %v3726
        %vm3729 = vcmask 1044484
        %v3730 = vsel %vm3729, %v3485, %v3728
        %vm3731 = vcmask 1045509
        %v3732 = vsel %vm3731, %v3564, %v3730
        %vm3733 = vcmask 1046534
        %v3734 = vsel %vm3733, %v3643, %v3732
        %vm3735 = vcmask 1047559
        %v3736 = vsel %vm3735, %v3722, %v3734
        %3738 = vst [vmem:[%s283] sm:$0xff] %v3736
        %s3739 = sand.u32 %s142, 1
        %s3740 = scalar_lea.sflag [#allocation4], %s3739
        %s3741 = sand.u32 %s142, 1
        %s3742 = smul.addr %s3741, 8
        %s3743 = scalar_lea.vmem [#allocation10], %s3742
        // Predicated region
        $region57: #{tpu_custom_call.1} parent=39 // pred_check
          %p3744 = pneg %p152
        $region58: #{tpu_custom_call.1} parent=39 // pred_check_branch
          %3746 = sbr.rel (%p3744) target = $region60
        $region59: #{tpu_custom_call.1} parent=39 // pred_region
          %s3748 = ssub.s32 128, 128
          %3749 = vsyncadd %s3740, %s3748
          %s3750 = smul.addr %s24, 128
          %s3751 = scalar_lea.hbm %s5, %s3750
          %s3753 = sshll.u32 %s3743, 4
          %s3754 = int_to_ptr.vmem [resolvable:$true] %s3753
          %3756 = dma.vmem_to_hbm [thread:$0]  %s3754, 128, %s3751, %s3740
        $region60: #{tpu_custom_call.1} parent=39 // pred_fallthru
          _
      $region40: #{tpu_custom_call.1} parent=5 // pred_fallthru
        _
      %p3757 = scmp.le.s32.totalorder 2, %s19
      // Predicated region
      $region61: #{tpu_custom_call.1} parent=5 // pred_check
        %p3758 = pneg %p3757
      $region62: #{tpu_custom_call.1} parent=5 // pred_check_branch
        %3760 = sbr.rel (%p3758) target = $region64
      $region63: #{tpu_custom_call.1} parent=5 // pred_region
        %s3761 = ssub.s32 %s19, 2
        // Predicated region
        $region65: #{tpu_custom_call.1} parent=63 // pred_check
          %p3762 = pneg %p158
        $region66: #{tpu_custom_call.1} parent=63 // pred_check_branch
          %3764 = sbr.rel (%p3762) target = $region68
        $region67: #{tpu_custom_call.1} parent=63 // pred_region
          %s3765 = sand.u32 %s143, 1
          %s3766 = scalar_lea.sflag [#allocation4], %s3765
          %s3767 = sand.u32 %s143, 1
          %s3768 = smul.addr %s3767, 8
          %s3769 = scalar_lea.vmem [#allocation10], %s3768
          %3770 = dma.done %s3766, 128
        $region68: #{tpu_custom_call.1} parent=63 // pred_fallthru
          _
      $region64: #{tpu_custom_call.1} parent=5 // pred_fallthru
        _
    $region6: #{tpu_custom_call.1} parent=1 // loop_footer
      %s23 = sadd.s32 1, %s19
    $region7: #{tpu_custom_call.1} parent=1 // loop_footer_branch
      %18 = sbr.rel target = $region3
    $region8: #{tpu_custom_call.1} parent=1 // loop_exit
      _
    %3771 = vsyncpa [#allocation3], 1
    %s3772 = scalar_lea.sflag [#allocation3], 1
    %3773 = vsyncpa %s3772, 1
    %3774 = vsyncpa [#allocation6], 1
    %3775 = vsyncpa [#allocation9], 1
    %3776 = vsyncpa [#allocation4], 1
    %s3777 = scalar_lea.sflag [#allocation4], 1
    %3778 = vsyncpa %s3777, 1

</llo_original>
